<compile_context>
chip_gen: v7x
topology: tpu7x:2x2x1
jax: 0.10.0
libtpu: 0.0.40
codegen_flags: <defaults>
</compile_context>

<pallas_src>
import math
from functools import partial

import jax
import jax.numpy as jnp
from jax.experimental import pallas as pl
from jax.experimental.pallas import tpu as pltpu

# ---- stand-in dimensions (real XLNet: TEXT_DIM=768, nhead=12, dim_ff=2048) ----
TEXT_DIM = 128          # multiple of 128 -> lane-dense activations and outputs
ACOUSTIC_DIM = 16
VISUAL_DIM = 8
N_HEAD = 4              # head_dim = 32
DIM_FF = 256
KAN_KERNEL = 8
N_AUDIO_LAYERS = 4
MAX_LEN = 50
LN_EPS = 1e-5
WEIGHT_DTYPE = jnp.bfloat16   # matmul weight storage (flip to jnp.float32 for parity tests)


# ---------------------------- in-kernel helpers ----------------------------

def _layernorm(x, g, b):
    mu = jnp.mean(x, axis=-1, keepdims=True)
    var = jnp.mean((x - mu) ** 2, axis=-1, keepdims=True)
    return (x - mu) * jax.lax.rsqrt(var + LN_EPS) * g + b


# ---------------------------- the single fused kernel ----------------------------
# grid = (B, L).  One grid step == one TransformerEncoderLayer for one batch row.
#   layer == 0      : Conv1d(k=1) projection + positional encoding prologue
#   every layer     : fused-QKV self-attention + FFN (post-LN), activation kept in o_ref
#   layer == L - 1  : KAN head epilogue + final residual, overwrites o_ref
# The output BlockSpec index is constant along the layer axis, so o_ref stays resident
# in VMEM across layers and is written back to HBM exactly once per batch row.

def _finetune_kernel(acoustic_ref, hidden_ref, pe_ref, conv_w_ref,
                     qkv_w_ref, qkv_b_ref, out_w_ref, out_b_ref,
                     ff1_w_ref, ff1_b_ref, ff2_w_ref, ff2_b_ref,
                     ln1_g_ref, ln1_b_ref, ln2_g_ref, ln2_b_ref,
                     k1_w_ref, l1_w_ref, l1_b_ref,
                     k2_w_ref, l2_w_ref, l2_b_ref,
                     k3_w_ref, l3_w_ref, l3_b_ref,
                     o_ref, *, n_head):
    layer = pl.program_id(1)
    S, D = o_ref.shape
    Dh = D // n_head
    scale = 1.0 / math.sqrt(Dh)
    cdt = qkv_w_ref.dtype                           # matmul operand dtype (bf16)

    def mm(x, w_ref):                               # MXU matmul, f32 accumulation
        return jnp.dot(x.astype(w_ref.dtype), w_ref[...],
                       preferred_element_type=jnp.float32)

    # ---- layer-0 prologue: 1x1-conv projection + positional encoding ----
    @pl.when(layer == 0)
    def _():
        o_ref[...] = mm(acoustic_ref[...], conv_w_ref) + pe_ref[...]

    x = o_ref[...]                                  # (S, D) f32, resident in VMEM

    # ---- self-attention: fused QKV matmul, all heads in one batched einsum ----
    qkv = mm(x, qkv_w_ref) + qkv_b_ref[...]         # (S, 3D)
    q = (qkv[:, :D] * scale).reshape(S, n_head, Dh).astype(cdt)
    k = qkv[:, D:2 * D].reshape(S, n_head, Dh).astype(cdt)
    v = qkv[:, 2 * D:].reshape(S, n_head, Dh).astype(cdt)
    s = jnp.einsum('qhd,khd->hqk', q, k, preferred_element_type=jnp.float32)
    s = s - jnp.max(s, axis=-1, keepdims=True)
    p = jnp.exp(s)
    p = p / jnp.sum(p, axis=-1, keepdims=True)      # exact softmax (f32)
    ctx = jnp.einsum('hqk,khd->qhd', p.astype(cdt), v,
                     preferred_element_type=jnp.float32).reshape(S, D)
    attn = mm(ctx, out_w_ref) + out_b_ref[...]

    # ---- post-LN encoder layer (all dropout = identity) ----
    h1 = _layernorm(x + attn, ln1_g_ref[...], ln1_b_ref[...])
    ff = jnp.maximum(mm(h1, ff1_w_ref) + ff1_b_ref[...], 0.0)
    ff = mm(ff, ff2_w_ref) + ff2_b_ref[...]
    h2 = _layernorm(h1 + ff, ln2_g_ref[...], ln2_b_ref[...])
    o_ref[...] = h2                                 # resident activation for next layer

    # ---- KAN head epilogue + final residual, fused into the same kernel ----
    @pl.when(layer == pl.num_programs(1) - 1)
    def _():
        t = hidden_ref[...]                         # (S, D) hidden_states
        fused = jnp.concatenate([h2, t], axis=-1)   # torch.cat([audio_encoded, hidden], -1)
        kf = jnp.maximum(mm(fused, k1_w_ref), 0.0)  # KANLayer1 kernel features
        h = jnp.maximum(mm(kf, l1_w_ref) + l1_b_ref[...], 0.0)
        kf = jnp.maximum(mm(h, k2_w_ref), 0.0)      # KANLayer2
        h = jnp.maximum(mm(kf, l2_w_ref) + l2_b_ref[...], 0.0)
        kf = jnp.maximum(mm(h, k3_w_ref), 0.0)      # KANLayer3
        h = jnp.maximum(mm(kf, l3_w_ref) + l3_b_ref[...], 0.0)
        o_ref[...] = t + h                          # hidden_states + hidden_states_new


# ---------------------------- BlockSpec helpers ----------------------------

def _fixed_spec(a):                 # full array, same block for every grid step
    nd = a.ndim
    return pl.BlockSpec(a.shape, lambda b, l: (0,) * nd)


def _batch_spec(a):                 # (B, ...) indexed by the parallel batch axis
    nd = a.ndim
    return pl.BlockSpec((None,) + a.shape[1:], lambda b, l: (b,) + (0,) * (nd - 1))


def _layer_spec(a):                 # (L, ...) indexed by the arbitrary layer axis
    nd = a.ndim
    return pl.BlockSpec((None,) + a.shape[1:], lambda b, l: (l,) + (0,) * (nd - 1))


# ---------------------------- forward ----------------------------

def finetune_forward(packed, hidden_states, visual, acoustic):
    # use_kan=True path: vision_encoded is computed but never consumed in the
    # reference module, so the vision branch is skipped (output-identical).
    del visual
    B, S, D = hidden_states.shape
    assert D == TEXT_DIM
    if S > MAX_LEN:
        raise ValueError(f"sequence length {S} exceeds positional-encoding max_len {MAX_LEN}")

    ep, kp = packed['enc'], packed['kan']
    pe = packed['pe'][:S]                                        # (S, D), built at pack time
    L = ep['qkv_w'].shape[0]

    batch_args = (acoustic, hidden_states)
    fixed_args = (pe, ep['conv_w'])
    layer_args = (ep['qkv_w'], ep['qkv_b'], ep['out_w'], ep['out_b'],
                  ep['ff1_w'], ep['ff1_b'], ep['ff2_w'], ep['ff2_b'],
                  ep['ln1_g'], ep['ln1_b'], ep['ln2_g'], ep['ln2_b'])
    kan_args = (kp['k1_w'], kp['l1_w'], kp['l1_b'],
                kp['k2_w'], kp['l2_w'], kp['l2_b'],
                kp['k3_w'], kp['l3_w'], kp['l3_b'])

    in_specs = ([_batch_spec(a) for a in batch_args]
                + [_fixed_spec(a) for a in fixed_args]
                + [_layer_spec(a) for a in layer_args]
                + [_fixed_spec(a) for a in kan_args])

    return pl.pallas_call(
        partial(_finetune_kernel, n_head=N_HEAD),
        grid=(B, L),
        in_specs=in_specs,
        out_specs=pl.BlockSpec((None, S, D), lambda b, l: (b, 0, 0)),
        out_shape=jax.ShapeDtypeStruct((B, S, D), jnp.float32),
        compiler_params=pltpu.CompilerParams(
            # batch axis parallel (second TensorCore on v7x), layer axis sequential.
            dimension_semantics=("parallel", "arbitrary")),
        # NOTE: at real XLNet dims (D=768, F=2048) set vmem_limit_bytes and keep
        # WEIGHT_DTYPE=bf16 so the per-layer weight blocks fit v7x's 64 MiB VMEM.
    )(*batch_args, *fixed_args, *layer_args, *kan_args)


# ---------------------------- parameters ----------------------------

def init_params(key):
    """PyTorch-shaped parameters (row-major nn.Linear / Conv1d layouts)."""
    keys = iter(jax.random.split(key, 64))
    D, F, A = TEXT_DIM, DIM_FF, ACOUSTIC_DIM

    def nrm(shape, std=0.02):
        return jax.random.normal(next(keys), shape, jnp.float32) * std

    def enc_layer():
        return dict(
            in_w=nrm((3 * D, D)), in_b=nrm((3 * D,)),
            out_w=nrm((D, D)), out_b=nrm((D,)),
            ff1_w=nrm((F, D)), ff1_b=nrm((F,)),
            ff2_w=nrm((D, F)), ff2_b=nrm((D,)),
            ln1_g=jnp.ones((D,), jnp.float32), ln1_b=jnp.zeros((D,), jnp.float32),
            ln2_g=jnp.ones((D,), jnp.float32), ln2_b=jnp.zeros((D,), jnp.float32),
        )

    return dict(
        # Conv1d(ACOUSTIC_DIM, TEXT_DIM, kernel_size=1, bias=False).weight squeezed: (D, A)
        audio_conv_w=nrm((D, A)),
        # vision_conv / v_transformer_encoder omitted: output unused when use_kan=True.
        a_layers=[enc_layer() for _ in range(N_AUDIO_LAYERS)],
        kan1_kw=nrm((KAN_KERNEL, 2 * D)), kan1_lw=nrm((D, KAN_KERNEL)), kan1_lb=nrm((D,)),
        kan2_kw=nrm((KAN_KERNEL, D)),     kan2_lw=nrm((D, KAN_KERNEL)), kan2_lb=nrm((D,)),
        kan3_kw=nrm((KAN_KERNEL, D)),     kan3_lw=nrm((D, KAN_KERNEL)), kan3_lb=nrm((D,)),
    )


def make_pe(d_model, max_len):
    position = jnp.arange(max_len, dtype=jnp.float32)[:, None]
    div_term = jnp.exp(jnp.arange(0, d_model, 2, dtype=jnp.float32)
                       * (-math.log(10000.0) / d_model))
    pe = jnp.zeros((max_len, d_model), jnp.float32)
    pe = pe.at[:, 0::2].set(jnp.sin(position * div_term))
    pe = pe.at[:, 1::2].set(jnp.cos(position * div_term))
    return pe                                                   # (max_len, d_model)


def pack_params(p):
    """One-time packing: pre-transpose to (K, N), stack layers along (L, ...), store
    matmul weight slabs in WEIGHT_DTYPE (lane-dense last dims), biases/LN in f32."""
    layers = p['a_layers']
    wdt = WEIGHT_DTYPE

    def stack(fn, dtype=jnp.float32):
        return jnp.stack([fn(lp) for lp in layers]).astype(dtype)

    ep = dict(
        conv_w=p['audio_conv_w'].T.astype(wdt),                 # (A, D)
        qkv_w=stack(lambda lp: lp['in_w'].T, wdt),              # (L, D, 3D) -> [q|k|v] lanes
        qkv_b=stack(lambda lp: lp['in_b'][None, :]),            # (L, 1, 3D)
        out_w=stack(lambda lp: lp['out_w'].T, wdt),             # (L, D, D)
        out_b=stack(lambda lp: lp['out_b'][None, :]),           # (L, 1, D)
        ff1_w=stack(lambda lp: lp['ff1_w'].T, wdt),             # (L, D, F)
        ff1_b=stack(lambda lp: lp['ff1_b'][None, :]),           # (L, 1, F)
        ff2_w=stack(lambda lp: lp['ff2_w'].T, wdt),             # (L, F, D)
        ff2_b=stack(lambda lp: lp['ff2_b'][None, :]),           # (L, 1, D)
        ln1_g=stack(lambda lp: lp['ln1_g'][None, :]),
        ln1_b=stack(lambda lp: lp['ln1_b'][None, :]),
        ln2_g=stack(lambda lp: lp['ln2_g'][None, :]),
        ln2_b=stack(lambda lp: lp['ln2_b'][None, :]),
    )
    kp = dict(
        # rows [:D] multiply audio_encoded, rows [D:] multiply hidden_states —
        # matches torch.cat((audio_encoded, hidden_states), dim=2) order.
        k1_w=p['kan1_kw'].T.astype(wdt),                        # (2D, K)
        l1_w=p['kan1_lw'].T.astype(wdt), l1_b=p['kan1_lb'][None, :],
        k2_w=p['kan2_kw'].T.astype(wdt),
        l2_w=p['kan2_lw'].T.astype(wdt), l2_b=p['kan2_lb'][None, :],
        k3_w=p['kan3_kw'].T.astype(wdt),
        l3_w=p['kan3_lw'].T.astype(wdt), l3_b=p['kan3_lb'][None, :],
    )
    return {'enc': ep, 'kan': kp, 'pe': make_pe(TEXT_DIM, MAX_LEN)}


# ---------------------------- demo ----------------------------

if __name__ == "__main__":
    key = jax.random.PRNGKey(0)
    k_param, kh, kv, ka = jax.random.split(key, 4)
    B, S = 2, 8

    packed = pack_params(init_params(k_param))                  # packed once, outside jit
    hidden_states = jax.random.normal(kh, (B, S, TEXT_DIM), jnp.float32)
    visual = jax.random.normal(kv, (B, S, VISUAL_DIM), jnp.float32)
    acoustic = jax.random.normal(ka, (B, S, ACOUSTIC_DIM), jnp.float32)

    out = jax.jit(finetune_forward)(packed, hidden_states, visual, acoustic)
    jax.block_until_ready(out)
    assert out.shape == (B, S, TEXT_DIM) and out.dtype == jnp.float32
    assert bool(jnp.all(jnp.isfinite(out)))
    print("KERNEL_OK")
</pallas_src>

<mosaic_0001>
module attributes {stable_mosaic.version = 11 : i64} {
  func.func @_finetune_kernel(%arg0: i32, %arg1: i32, %arg2: memref<1x8x16xf32, #tpu.memory_space<vmem>>, %arg3: memref<1x8x128xf32, #tpu.memory_space<vmem>>, %arg4: memref<8x128xf32, #tpu.memory_space<vmem>>, %arg5: memref<16x128xbf16, #tpu.memory_space<vmem>>, %arg6: memref<1x128x384xbf16, #tpu.memory_space<vmem>>, %arg7: memref<1x1x384xf32, #tpu.memory_space<vmem>>, %arg8: memref<1x128x128xbf16, #tpu.memory_space<vmem>>, %arg9: memref<1x1x128xf32, #tpu.memory_space<vmem>>, %arg10: memref<1x128x256xbf16, #tpu.memory_space<vmem>>, %arg11: memref<1x1x256xf32, #tpu.memory_space<vmem>>, %arg12: memref<1x256x128xbf16, #tpu.memory_space<vmem>>, %arg13: memref<1x1x128xf32, #tpu.memory_space<vmem>>, %arg14: memref<1x1x128xf32, #tpu.memory_space<vmem>>, %arg15: memref<1x1x128xf32, #tpu.memory_space<vmem>>, %arg16: memref<1x1x128xf32, #tpu.memory_space<vmem>>, %arg17: memref<1x1x128xf32, #tpu.memory_space<vmem>>, %arg18: memref<256x8xbf16, #tpu.memory_space<vmem>>, %arg19: memref<8x128xbf16, #tpu.memory_space<vmem>>, %arg20: memref<1x128xf32, #tpu.memory_space<vmem>>, %arg21: memref<128x8xbf16, #tpu.memory_space<vmem>>, %arg22: memref<8x128xbf16, #tpu.memory_space<vmem>>, %arg23: memref<1x128xf32, #tpu.memory_space<vmem>>, %arg24: memref<128x8xbf16, #tpu.memory_space<vmem>>, %arg25: memref<8x128xbf16, #tpu.memory_space<vmem>>, %arg26: memref<1x128xf32, #tpu.memory_space<vmem>>, %arg27: memref<1x8x128xf32, #tpu.memory_space<vmem>>) attributes {dimension_semantics = [#tpu.dimension_semantics<parallel>, #tpu.dimension_semantics<arbitrary>], iteration_bounds = array<i64: 2, 4>, scalar_prefetch = 0 : i64, scratch_operands = 0 : i64, tpu.core_type = #tpu.core_type<tc>, window_params = [{transform_indices = @transform_0, window_bounds = array<i64: 1, 8, 16>}, {transform_indices = @transform_1, window_bounds = array<i64: 1, 8, 128>}, {pipeline_mode = #tpu.pipeline_mode<synchronous>, transform_indices = @transform_2, window_bounds = array<i64: 8, 128>}, {pipeline_mode = #tpu.pipeline_mode<synchronous>, transform_indices = @transform_3, window_bounds = array<i64: 16, 128>}, {transform_indices = @transform_4, window_bounds = array<i64: 1, 128, 384>}, {transform_indices = @transform_5, window_bounds = array<i64: 1, 1, 384>}, {transform_indices = @transform_6, window_bounds = array<i64: 1, 128, 128>}, {transform_indices = @transform_7, window_bounds = array<i64: 1, 1, 128>}, {transform_indices = @transform_8, window_bounds = array<i64: 1, 128, 256>}, {transform_indices = @transform_9, window_bounds = array<i64: 1, 1, 256>}, {transform_indices = @transform_10, window_bounds = array<i64: 1, 256, 128>}, {transform_indices = @transform_11, window_bounds = array<i64: 1, 1, 128>}, {transform_indices = @transform_12, window_bounds = array<i64: 1, 1, 128>}, {transform_indices = @transform_13, window_bounds = array<i64: 1, 1, 128>}, {transform_indices = @transform_14, window_bounds = array<i64: 1, 1, 128>}, {transform_indices = @transform_15, window_bounds = array<i64: 1, 1, 128>}, {pipeline_mode = #tpu.pipeline_mode<synchronous>, transform_indices = @transform_16, window_bounds = array<i64: 256, 8>}, {pipeline_mode = #tpu.pipeline_mode<synchronous>, transform_indices = @transform_17, window_bounds = array<i64: 8, 128>}, {pipeline_mode = #tpu.pipeline_mode<synchronous>, transform_indices = @transform_18, window_bounds = array<i64: 1, 128>}, {pipeline_mode = #tpu.pipeline_mode<synchronous>, transform_indices = @transform_19, window_bounds = array<i64: 128, 8>}, {pipeline_mode = #tpu.pipeline_mode<synchronous>, transform_indices = @transform_20, window_bounds = array<i64: 8, 128>}, {pipeline_mode = #tpu.pipeline_mode<synchronous>, transform_indices = @transform_21, window_bounds = array<i64: 1, 128>}, {pipeline_mode = #tpu.pipeline_mode<synchronous>, transform_indices = @transform_22, window_bounds = array<i64: 128, 8>}, {pipeline_mode = #tpu.pipeline_mode<synchronous>, transform_indices = @transform_23, window_bounds = array<i64: 8, 128>}, {pipeline_mode = #tpu.pipeline_mode<synchronous>, transform_indices = @transform_24, window_bounds = array<i64: 1, 128>}, {transform_indices = @transform_25, window_bounds = array<i64: 1, 8, 128>}]} {
    %c0_i32 = arith.constant 0 : i32
    %0 = arith.cmpi eq, %arg1, %c0_i32 : i32
    %1 = arith.extui %0 : i1 to i32
    %c0_i32_0 = arith.constant 0 : i32
    %2 = arith.cmpi ne, %1, %c0_i32_0 : i32
    scf.if %2 {
      %c0_62 = arith.constant 0 : index
      %c0_63 = arith.constant 0 : index
      %c0_64 = arith.constant 0 : index
      %124 = vector.load %arg2[%c0_62, %c0_63, %c0_64] : memref<1x8x16xf32, #tpu.memory_space<vmem>>, vector<1x8x16xf32>
      %125 = vector.shape_cast %124 : vector<1x8x16xf32> to vector<8x16xf32>
      %126 = arith.truncf %125 : vector<8x16xf32> to vector<8x16xbf16>
      %c0_65 = arith.constant 0 : index
      %c0_66 = arith.constant 0 : index
      %127 = vector.load %arg5[%c0_65, %c0_66] : memref<16x128xbf16, #tpu.memory_space<vmem>>, vector<16x128xbf16>
      %cst_67 = arith.constant dense<0.000000e+00> : vector<8x128xf32>
      %128 = tpu.matmul %126, %127, %cst_67 {dimension_numbers = #tpu.dot_dimension_numbers<[1], [0], [0], [1], [0, 0, 1, 1], [], []>} : vector<8x16xbf16>, vector<16x128xbf16>, vector<8x128xf32> -> vector<8x128xf32>
      %c0_68 = arith.constant 0 : index
      %c0_69 = arith.constant 0 : index
      %129 = vector.load %arg4[%c0_68, %c0_69] : memref<8x128xf32, #tpu.memory_space<vmem>>, vector<8x128xf32>
      %130 = arith.addf %128, %129 : vector<8x128xf32>
      %c0_70 = arith.constant 0 : index
      %c0_71 = arith.constant 0 : index
      %c0_72 = arith.constant 0 : index
      %131 = vector.load %arg27[%c0_70, %c0_71, %c0_72] : memref<1x8x128xf32, #tpu.memory_space<vmem>>, vector<1x8x128xf32>
      %132 = vector.shape_cast %131 : vector<1x8x128xf32> to vector<8x128xf32>
      %133 = vector.shape_cast %130 : vector<8x128xf32> to vector<1x8x128xf32>
      tpu.vector_store %arg27[%c0_70, %c0_71, %c0_72], %133 {strides = array<i32>} : memref<1x8x128xf32, #tpu.memory_space<vmem>>, vector<1x8x128xf32>,
    } else {
    }
    %c0 = arith.constant 0 : index
    %c0_1 = arith.constant 0 : index
    %c0_2 = arith.constant 0 : index
    %3 = vector.load %arg27[%c0, %c0_1, %c0_2] : memref<1x8x128xf32, #tpu.memory_space<vmem>>, vector<1x8x128xf32>
    %4 = vector.shape_cast %3 : vector<1x8x128xf32> to vector<8x128xf32>
    %5 = arith.truncf %4 : vector<8x128xf32> to vector<8x128xbf16>
    %c0_3 = arith.constant 0 : index
    %c0_4 = arith.constant 0 : index
    %c0_5 = arith.constant 0 : index
    %6 = vector.load %arg6[%c0_3, %c0_4, %c0_5] : memref<1x128x384xbf16, #tpu.memory_space<vmem>>, vector<1x128x384xbf16>
    %7 = vector.shape_cast %6 : vector<1x128x384xbf16> to vector<128x384xbf16>
    %cst = arith.constant dense<0.000000e+00> : vector<8x384xf32>
    %8 = tpu.matmul %5, %7, %cst {dimension_numbers = #tpu.dot_dimension_numbers<[1], [0], [0], [1], [0, 0, 1, 1], [], []>} : vector<8x128xbf16>, vector<128x384xbf16>, vector<8x384xf32> -> vector<8x384xf32>
    %c0_6 = arith.constant 0 : index
    %c0_7 = arith.constant 0 : index
    %c0_8 = arith.constant 0 : index
    %9 = vector.load %arg7[%c0_6, %c0_7, %c0_8] : memref<1x1x384xf32, #tpu.memory_space<vmem>>, vector<1x1x384xf32>
    %10 = vector.shape_cast %9 : vector<1x1x384xf32> to vector<1x384xf32>
    %11 = vector.broadcast %10 : vector<1x384xf32> to vector<8x384xf32>
    %12 = arith.addf %8, %11 : vector<8x384xf32>
    %13 = vector.extract_strided_slice %12 {offsets = [0, 0], sizes = [8, 128], strides = [1, 1]} : vector<8x384xf32> to vector<8x128xf32>
    %cst_9 = arith.constant 0.176776692 : f32
    %14 = vector.broadcast %cst_9 : f32 to vector<8x128xf32>
    %15 = arith.mulf %13, %14 : vector<8x128xf32>
    %16 = vector.shape_cast %15 : vector<8x128xf32> to vector<8x4x32xf32>
    %17 = arith.truncf %16 : vector<8x4x32xf32> to vector<8x4x32xbf16>
    %18 = vector.extract_strided_slice %12 {offsets = [0, 128], sizes = [8, 128], strides = [1, 1]} : vector<8x384xf32> to vector<8x128xf32>
    %19 = vector.shape_cast %18 : vector<8x128xf32> to vector<8x4x32xf32>
    %20 = arith.truncf %19 : vector<8x4x32xf32> to vector<8x4x32xbf16>
    %21 = vector.extract_strided_slice %12 {offsets = [0, 256], sizes = [8, 128], strides = [1, 1]} : vector<8x384xf32> to vector<8x128xf32>
    %22 = vector.shape_cast %21 : vector<8x128xf32> to vector<8x4x32xf32>
    %23 = arith.truncf %22 : vector<8x4x32xf32> to vector<8x4x32xbf16>
    "tpu.trace_start"() <{level = 10 : i32, message = "qhd,khd->hqk"}> : () -> ()
    %cst_10 = arith.constant dense<0.000000e+00> : vector<4x8x8xf32>
    %24 = tpu.matmul %17, %20, %cst_10 {dimension_numbers = #tpu.dot_dimension_numbers<[2], [2], [0], [0], [0, 1, 0, 0, 1, 0], [1], [1]>} : vector<8x4x32xbf16>, vector<8x4x32xbf16>, vector<4x8x8xf32> -> vector<4x8x8xf32>
    "tpu.trace_stop"() : () -> ()
    %cst_11 = arith.constant dense<0xFF800000> : vector<4x8xf32>
    %25 = vector.multi_reduction <maximumf>, %24, %cst_11 [2] : vector<4x8x8xf32> to vector<4x8xf32>
    %26 = vector.shape_cast %25 : vector<4x8xf32> to vector<4x8x1xf32>
    %27 = vector.broadcast %26 : vector<4x8x1xf32> to vector<4x8x8xf32>
    %28 = arith.subf %24, %27 : vector<4x8x8xf32>
    %29 = math.exp %28 : vector<4x8x8xf32>
    %cst_12 = arith.constant dense<0.000000e+00> : vector<4x8xf32>
    %30 = vector.multi_reduction <add>, %29, %cst_12 [2] : vector<4x8x8xf32> to vector<4x8xf32>
    %31 = vector.shape_cast %30 : vector<4x8xf32> to vector<4x8x1xf32>
    %32 = vector.broadcast %31 : vector<4x8x1xf32> to vector<4x8x8xf32>
    %33 = arith.divf %29, %32 : vector<4x8x8xf32>
    %34 = arith.truncf %33 : vector<4x8x8xf32> to vector<4x8x8xbf16>
    "tpu.trace_start"() <{level = 10 : i32, message = "hqk,khd->qhd"}> : () -> ()
    %cst_13 = arith.constant dense<0.000000e+00> : vector<4x32x8xf32>
    %35 = tpu.matmul %23, %34, %cst_13 {dimension_numbers = #tpu.dot_dimension_numbers<[0], [2], [2], [1], [0, 1, 0, 2, 1, 1], [1], [0]>} : vector<8x4x32xbf16>, vector<4x8x8xbf16>, vector<4x32x8xf32> -> vector<4x32x8xf32>
    %36 = tpu.transpose %35, [2, 0, 1] : vector<4x32x8xf32> -> vector<8x4x32xf32>
    "tpu.trace_stop"() : () -> ()
    %37 = vector.shape_cast %36 : vector<8x4x32xf32> to vector<8x128xf32>
    %38 = arith.truncf %37 : vector<8x128xf32> to vector<8x128xbf16>
    %c0_14 = arith.constant 0 : index
    %c0_15 = arith.constant 0 : index
    %c0_16 = arith.constant 0 : index
    %39 = vector.load %arg8[%c0_14, %c0_15, %c0_16] : memref<1x128x128xbf16, #tpu.memory_space<vmem>>, vector<1x128x128xbf16>
    %40 = vector.shape_cast %39 : vector<1x128x128xbf16> to vector<128x128xbf16>
    %cst_17 = arith.constant dense<0.000000e+00> : vector<8x128xf32>
    %41 = tpu.matmul %38, %40, %cst_17 {dimension_numbers = #tpu.dot_dimension_numbers<[1], [0], [0], [1], [0, 0, 1, 1], [], []>} : vector<8x128xbf16>, vector<128x128xbf16>, vector<8x128xf32> -> vector<8x128xf32>
    %c0_18 = arith.constant 0 : index
    %c0_19 = arith.constant 0 : index
    %c0_20 = arith.constant 0 : index
    %42 = vector.load %arg9[%c0_18, %c0_19, %c0_20] : memref<1x1x128xf32, #tpu.memory_space<vmem>>, vector<1x1x128xf32>
    %43 = vector.shape_cast %42 : vector<1x1x128xf32> to vector<1x128xf32>
    %44 = vector.broadcast %43 : vector<1x128xf32> to vector<8x128xf32>
    %45 = arith.addf %41, %44 : vector<8x128xf32>
    %46 = arith.addf %4, %45 : vector<8x128xf32>
    %c0_21 = arith.constant 0 : index
    %c0_22 = arith.constant 0 : index
    %c0_23 = arith.constant 0 : index
    %47 = vector.load %arg14[%c0_21, %c0_22, %c0_23] : memref<1x1x128xf32, #tpu.memory_space<vmem>>, vector<1x1x128xf32>
    %48 = vector.shape_cast %47 : vector<1x1x128xf32> to vector<1x128xf32>
    %c0_24 = arith.constant 0 : index
    %c0_25 = arith.constant 0 : index
    %c0_26 = arith.constant 0 : index
    %49 = vector.load %arg15[%c0_24, %c0_25, %c0_26] : memref<1x1x128xf32, #tpu.memory_space<vmem>>, vector<1x1x128xf32>
    %50 = vector.shape_cast %49 : vector<1x1x128xf32> to vector<1x128xf32>
    %cst_27 = arith.constant dense<0.000000e+00> : vector<8xf32>
    %51 = vector.multi_reduction <add>, %46, %cst_27 [1] : vector<8x128xf32> to vector<8xf32>
    %52 = vector.shape_cast %51 : vector<8xf32> to vector<8x1xf32>
    %cst_28 = arith.constant 1.280000e+02 : f32
    %53 = vector.broadcast %cst_28 : f32 to vector<8x1xf32>
    %54 = arith.divf %52, %53 : vector<8x1xf32>
    %55 = vector.broadcast %54 : vector<8x1xf32> to vector<8x128xf32>
    %56 = arith.subf %46, %55 : vector<8x128xf32>
    %57 = arith.mulf %56, %56 : vector<8x128xf32>
    %cst_29 = arith.constant dense<0.000000e+00> : vector<8xf32>
    %58 = vector.multi_reduction <add>, %57, %cst_29 [1] : vector<8x128xf32> to vector<8xf32>
    %59 = vector.shape_cast %58 : vector<8xf32> to vector<8x1xf32>
    %cst_30 = arith.constant 1.280000e+02 : f32
    %60 = vector.broadcast %cst_30 : f32 to vector<8x1xf32>
    %61 = arith.divf %59, %60 : vector<8x1xf32>
    %62 = vector.broadcast %54 : vector<8x1xf32> to vector<8x128xf32>
    %63 = arith.subf %46, %62 : vector<8x128xf32>
    %cst_31 = arith.constant 9.99999974E-6 : f32
    %64 = vector.broadcast %cst_31 : f32 to vector<8x1xf32>
    %65 = arith.addf %61, %64 : vector<8x1xf32>
    %66 = math.rsqrt %65 : vector<8x1xf32>
    %67 = vector.broadcast %66 : vector<8x1xf32> to vector<8x128xf32>
    %68 = arith.mulf %63, %67 : vector<8x128xf32>
    %69 = vector.broadcast %48 : vector<1x128xf32> to vector<8x128xf32>
    %70 = arith.mulf %68, %69 : vector<8x128xf32>
    %71 = vector.broadcast %50 : vector<1x128xf32> to vector<8x128xf32>
    %72 = arith.addf %70, %71 : vector<8x128xf32>
    %73 = arith.truncf %72 : vector<8x128xf32> to vector<8x128xbf16>
    %c0_32 = arith.constant 0 : index
    %c0_33 = arith.constant 0 : index
    %c0_34 = arith.constant 0 : index
    %74 = vector.load %arg10[%c0_32, %c0_33, %c0_34] : memref<1x128x256xbf16, #tpu.memory_space<vmem>>, vector<1x128x256xbf16>
    %75 = vector.shape_cast %74 : vector<1x128x256xbf16> to vector<128x256xbf16>
    %cst_35 = arith.constant dense<0.000000e+00> : vector<8x256xf32>
    %76 = tpu.matmul %73, %75, %cst_35 {dimension_numbers = #tpu.dot_dimension_numbers<[1], [0], [0], [1], [0, 0, 1, 1], [], []>} : vector<8x128xbf16>, vector<128x256xbf16>, vector<8x256xf32> -> vector<8x256xf32>
    %c0_36 = arith.constant 0 : index
    %c0_37 = arith.constant 0 : index
    %c0_38 = arith.constant 0 : index
    %77 = vector.load %arg11[%c0_36, %c0_37, %c0_38] : memref<1x1x256xf32, #tpu.memory_space<vmem>>, vector<1x1x256xf32>
    %78 = vector.shape_cast %77 : vector<1x1x256xf32> to vector<1x256xf32>
    %79 = vector.broadcast %78 : vector<1x256xf32> to vector<8x256xf32>
    %80 = arith.addf %76, %79 : vector<8x256xf32>
    %cst_39 = arith.constant 0.000000e+00 : f32
    %81 = vector.broadcast %cst_39 : f32 to vector<8x256xf32>
    %82 = arith.maximumf %80, %81 : vector<8x256xf32>
    %83 = arith.truncf %82 : vector<8x256xf32> to vector<8x256xbf16>
    %c0_40 = arith.constant 0 : index
    %c0_41 = arith.constant 0 : index
    %c0_42 = arith.constant 0 : index
    %84 = vector.load %arg12[%c0_40, %c0_41, %c0_42] : memref<1x256x128xbf16, #tpu.memory_space<vmem>>, vector<1x256x128xbf16>
    %85 = vector.shape_cast %84 : vector<1x256x128xbf16> to vector<256x128xbf16>
    %cst_43 = arith.constant dense<0.000000e+00> : vector<8x128xf32>
    %86 = tpu.matmul %83, %85, %cst_43 {dimension_numbers = #tpu.dot_dimension_numbers<[1], [0], [0], [1], [0, 0, 1, 1], [], []>} : vector<8x256xbf16>, vector<256x128xbf16>, vector<8x128xf32> -> vector<8x128xf32>
    %c0_44 = arith.constant 0 : index
    %c0_45 = arith.constant 0 : index
    %c0_46 = arith.constant 0 : index
    %87 = vector.load %arg13[%c0_44, %c0_45, %c0_46] : memref<1x1x128xf32, #tpu.memory_space<vmem>>, vector<1x1x128xf32>
    %88 = vector.shape_cast %87 : vector<1x1x128xf32> to vector<1x128xf32>
    %89 = vector.broadcast %88 : vector<1x128xf32> to vector<8x128xf32>
    %90 = arith.addf %86, %89 : vector<8x128xf32>
    %91 = arith.addf %72, %90 : vector<8x128xf32>
    %c0_47 = arith.constant 0 : index
    %c0_48 = arith.constant 0 : index
    %c0_49 = arith.constant 0 : index
    %92 = vector.load %arg16[%c0_47, %c0_48, %c0_49] : memref<1x1x128xf32, #tpu.memory_space<vmem>>, vector<1x1x128xf32>
    %93 = vector.shape_cast %92 : vector<1x1x128xf32> to vector<1x128xf32>
    %c0_50 = arith.constant 0 : index
    %c0_51 = arith.constant 0 : index
    %c0_52 = arith.constant 0 : index
    %94 = vector.load %arg17[%c0_50, %c0_51, %c0_52] : memref<1x1x128xf32, #tpu.memory_space<vmem>>, vector<1x1x128xf32>
    %95 = vector.shape_cast %94 : vector<1x1x128xf32> to vector<1x128xf32>
    %cst_53 = arith.constant dense<0.000000e+00> : vector<8xf32>
    %96 = vector.multi_reduction <add>, %91, %cst_53 [1] : vector<8x128xf32> to vector<8xf32>
    %97 = vector.shape_cast %96 : vector<8xf32> to vector<8x1xf32>
    %cst_54 = arith.constant 1.280000e+02 : f32
    %98 = vector.broadcast %cst_54 : f32 to vector<8x1xf32>
    %99 = arith.divf %97, %98 : vector<8x1xf32>
    %100 = vector.broadcast %99 : vector<8x1xf32> to vector<8x128xf32>
    %101 = arith.subf %91, %100 : vector<8x128xf32>
    %102 = arith.mulf %101, %101 : vector<8x128xf32>
    %cst_55 = arith.constant dense<0.000000e+00> : vector<8xf32>
    %103 = vector.multi_reduction <add>, %102, %cst_55 [1] : vector<8x128xf32> to vector<8xf32>
    %104 = vector.shape_cast %103 : vector<8xf32> to vector<8x1xf32>
    %cst_56 = arith.constant 1.280000e+02 : f32
    %105 = vector.broadcast %cst_56 : f32 to vector<8x1xf32>
    %106 = arith.divf %104, %105 : vector<8x1xf32>
    %107 = vector.broadcast %99 : vector<8x1xf32> to vector<8x128xf32>
    %108 = arith.subf %91, %107 : vector<8x128xf32>
    %cst_57 = arith.constant 9.99999974E-6 : f32
    %109 = vector.broadcast %cst_57 : f32 to vector<8x1xf32>
    %110 = arith.addf %106, %109 : vector<8x1xf32>
    %111 = math.rsqrt %110 : vector<8x1xf32>
    %112 = vector.broadcast %111 : vector<8x1xf32> to vector<8x128xf32>
    %113 = arith.mulf %108, %112 : vector<8x128xf32>
    %114 = vector.broadcast %93 : vector<1x128xf32> to vector<8x128xf32>
    %115 = arith.mulf %113, %114 : vector<8x128xf32>
    %116 = vector.broadcast %95 : vector<1x128xf32> to vector<8x128xf32>
    %117 = arith.addf %115, %116 : vector<8x128xf32>
    %c0_58 = arith.constant 0 : index
    %c0_59 = arith.constant 0 : index
    %c0_60 = arith.constant 0 : index
    %118 = vector.load %arg27[%c0_58, %c0_59, %c0_60] : memref<1x8x128xf32, #tpu.memory_space<vmem>>, vector<1x8x128xf32>
    %119 = vector.shape_cast %118 : vector<1x8x128xf32> to vector<8x128xf32>
    %120 = vector.shape_cast %117 : vector<8x128xf32> to vector<1x8x128xf32>
    tpu.vector_store %arg27[%c0_58, %c0_59, %c0_60], %120 {strides = array<i32>} : memref<1x8x128xf32, #tpu.memory_space<vmem>>, vector<1x8x128xf32>,
    %c3_i32 = arith.constant 3 : i32
    %121 = arith.cmpi eq, %arg1, %c3_i32 : i32
    %122 = arith.extui %121 : i1 to i32
    %c0_i32_61 = arith.constant 0 : i32
    %123 = arith.cmpi ne, %122, %c0_i32_61 : i32
    scf.if %123 {
      %c0_62 = arith.constant 0 : index
      %c0_63 = arith.constant 0 : index
      %c0_64 = arith.constant 0 : index
      %124 = vector.load %arg3[%c0_62, %c0_63, %c0_64] : memref<1x8x128xf32, #tpu.memory_space<vmem>>, vector<1x8x128xf32>
      %125 = vector.shape_cast %124 : vector<1x8x128xf32> to vector<8x128xf32>
      %126 = tpu.concatenate %117, %125 in 1 : vector<8x128xf32>, vector<8x128xf32> -> vector<8x256xf32>
      %127 = arith.truncf %126 : vector<8x256xf32> to vector<8x256xbf16>
      %c0_65 = arith.constant 0 : index
      %c0_66 = arith.constant 0 : index
      %128 = vector.load %arg18[%c0_65, %c0_66] : memref<256x8xbf16, #tpu.memory_space<vmem>>, vector<256x8xbf16>
      %cst_67 = arith.constant dense<0.000000e+00> : vector<8x8xf32>
      %129 = tpu.matmul %127, %128, %cst_67 {dimension_numbers = #tpu.dot_dimension_numbers<[1], [0], [0], [1], [0, 0, 1, 1], [], []>} : vector<8x256xbf16>, vector<256x8xbf16>, vector<8x8xf32> -> vector<8x8xf32>
      %cst_68 = arith.constant 0.000000e+00 : f32
      %130 = vector.broadcast %cst_68 : f32 to vector<8x8xf32>
      %131 = arith.maximumf %129, %130 : vector<8x8xf32>
      %132 = arith.truncf %131 : vector<8x8xf32> to vector<8x8xbf16>
      %c0_69 = arith.constant 0 : index
      %c0_70 = arith.constant 0 : index
      %133 = vector.load %arg19[%c0_69, %c0_70] : memref<8x128xbf16, #tpu.memory_space<vmem>>, vector<8x128xbf16>
      %cst_71 = arith.constant dense<0.000000e+00> : vector<8x128xf32>
      %134 = tpu.matmul %132, %133, %cst_71 {dimension_numbers = #tpu.dot_dimension_numbers<[1], [0], [0], [1], [0, 0, 1, 1], [], []>} : vector<8x8xbf16>, vector<8x128xbf16>, vector<8x128xf32> -> vector<8x128xf32>
      %c0_72 = arith.constant 0 : index
      %c0_73 = arith.constant 0 : index
      %135 = vector.load %arg20[%c0_72, %c0_73] : memref<1x128xf32, #tpu.memory_space<vmem>>, vector<1x128xf32>
      %136 = vector.broadcast %135 : vector<1x128xf32> to vector<8x128xf32>
      %137 = arith.addf %134, %136 : vector<8x128xf32>
      %cst_74 = arith.constant 0.000000e+00 : f32
      %138 = vector.broadcast %cst_74 : f32 to vector<8x128xf32>
      %139 = arith.maximumf %137, %138 : vector<8x128xf32>
      %140 = arith.truncf %139 : vector<8x128xf32> to vector<8x128xbf16>
      %c0_75 = arith.constant 0 : index
      %c0_76 = arith.constant 0 : index
      %141 = vector.load %arg21[%c0_75, %c0_76] : memref<128x8xbf16, #tpu.memory_space<vmem>>, vector<128x8xbf16>
      %cst_77 = arith.constant dense<0.000000e+00> : vector<8x8xf32>
      %142 = tpu.matmul %140, %141, %cst_77 {dimension_numbers = #tpu.dot_dimension_numbers<[1], [0], [0], [1], [0, 0, 1, 1], [], []>} : vector<8x128xbf16>, vector<128x8xbf16>, vector<8x8xf32> -> vector<8x8xf32>
      %cst_78 = arith.constant 0.000000e+00 : f32
      %143 = vector.broadcast %cst_78 : f32 to vector<8x8xf32>
      %144 = arith.maximumf %142, %143 : vector<8x8xf32>
      %145 = arith.truncf %144 : vector<8x8xf32> to vector<8x8xbf16>
      %c0_79 = arith.constant 0 : index
      %c0_80 = arith.constant 0 : index
      %146 = vector.load %arg22[%c0_79, %c0_80] : memref<8x128xbf16, #tpu.memory_space<vmem>>, vector<8x128xbf16>
      %cst_81 = arith.constant dense<0.000000e+00> : vector<8x128xf32>
      %147 = tpu.matmul %145, %146, %cst_81 {dimension_numbers = #tpu.dot_dimension_numbers<[1], [0], [0], [1], [0, 0, 1, 1], [], []>} : vector<8x8xbf16>, vector<8x128xbf16>, vector<8x128xf32> -> vector<8x128xf32>
      %c0_82 = arith.constant 0 : index
      %c0_83 = arith.constant 0 : index
      %148 = vector.load %arg23[%c0_82, %c0_83] : memref<1x128xf32, #tpu.memory_space<vmem>>, vector<1x128xf32>
      %149 = vector.broadcast %148 : vector<1x128xf32> to vector<8x128xf32>
      %150 = arith.addf %147, %149 : vector<8x128xf32>
      %cst_84 = arith.constant 0.000000e+00 : f32
      %151 = vector.broadcast %cst_84 : f32 to vector<8x128xf32>
      %152 = arith.maximumf %150, %151 : vector<8x128xf32>
      %153 = arith.truncf %152 : vector<8x128xf32> to vector<8x128xbf16>
      %c0_85 = arith.constant 0 : index
      %c0_86 = arith.constant 0 : index
      %154 = vector.load %arg24[%c0_85, %c0_86] : memref<128x8xbf16, #tpu.memory_space<vmem>>, vector<128x8xbf16>
      %cst_87 = arith.constant dense<0.000000e+00> : vector<8x8xf32>
      %155 = tpu.matmul %153, %154, %cst_87 {dimension_numbers = #tpu.dot_dimension_numbers<[1], [0], [0], [1], [0, 0, 1, 1], [], []>} : vector<8x128xbf16>, vector<128x8xbf16>, vector<8x8xf32> -> vector<8x8xf32>
      %cst_88 = arith.constant 0.000000e+00 : f32
      %156 = vector.broadcast %cst_88 : f32 to vector<8x8xf32>
      %157 = arith.maximumf %155, %156 : vector<8x8xf32>
      %158 = arith.truncf %157 : vector<8x8xf32> to vector<8x8xbf16>
      %c0_89 = arith.constant 0 : index
      %c0_90 = arith.constant 0 : index
      %159 = vector.load %arg25[%c0_89, %c0_90] : memref<8x128xbf16, #tpu.memory_space<vmem>>, vector<8x128xbf16>
      %cst_91 = arith.constant dense<0.000000e+00> : vector<8x128xf32>
      %160 = tpu.matmul %158, %159, %cst_91 {dimension_numbers = #tpu.dot_dimension_numbers<[1], [0], [0], [1], [0, 0, 1, 1], [], []>} : vector<8x8xbf16>, vector<8x128xbf16>, vector<8x128xf32> -> vector<8x128xf32>
      %c0_92 = arith.constant 0 : index
      %c0_93 = arith.constant 0 : index
      %161 = vector.load %arg26[%c0_92, %c0_93] : memref<1x128xf32, #tpu.memory_space<vmem>>, vector<1x128xf32>
      %162 = vector.broadcast %161 : vector<1x128xf32> to vector<8x128xf32>
      %163 = arith.addf %160, %162 : vector<8x128xf32>
      %cst_94 = arith.constant 0.000000e+00 : f32
      %164 = vector.broadcast %cst_94 : f32 to vector<8x128xf32>
      %165 = arith.maximumf %163, %164 : vector<8x128xf32>
      %166 = arith.addf %125, %165 : vector<8x128xf32>
      %c0_95 = arith.constant 0 : index
      %c0_96 = arith.constant 0 : index
      %c0_97 = arith.constant 0 : index
      %167 = vector.load %arg27[%c0_95, %c0_96, %c0_97] : memref<1x8x128xf32, #tpu.memory_space<vmem>>, vector<1x8x128xf32>
      %168 = vector.shape_cast %167 : vector<1x8x128xf32> to vector<8x128xf32>
      %169 = vector.shape_cast %166 : vector<8x128xf32> to vector<1x8x128xf32>
      tpu.vector_store %arg27[%c0_95, %c0_96, %c0_97], %169 {strides = array<i32>} : memref<1x8x128xf32, #tpu.memory_space<vmem>>, vector<1x8x128xf32>,
    } else {
    }
    return
  }
  func.func @transform_0(%arg0: i32, %arg1: i32) -> (i32, i32, i32) {
    %c0_i32 = arith.constant 0 : i32
    %c0_i32_0 = arith.constant 0 : i32
    %c0_i32_1 = arith.constant 0 : i32
    return %arg0, %c0_i32, %c0_i32_0 : i32, i32, i32
  }
  func.func @transform_1(%arg0: i32, %arg1: i32) -> (i32, i32, i32) {
    %c0_i32 = arith.constant 0 : i32
    %c0_i32_0 = arith.constant 0 : i32
    %c0_i32_1 = arith.constant 0 : i32
    return %arg0, %c0_i32, %c0_i32_0 : i32, i32, i32
  }
  func.func @transform_2(%arg0: i32, %arg1: i32) -> (i32, i32) {
    %c0_i32 = arith.constant 0 : i32
    %c0_i32_0 = arith.constant 0 : i32
    %c0_i32_1 = arith.constant 0 : i32
    return %c0_i32, %c0_i32_0 : i32, i32
  }
  func.func @transform_3(%arg0: i32, %arg1: i32) -> (i32, i32) {
    %c0_i32 = arith.constant 0 : i32
    %c0_i32_0 = arith.constant 0 : i32
    %c0_i32_1 = arith.constant 0 : i32
    return %c0_i32, %c0_i32_0 : i32, i32
  }
  func.func @transform_4(%arg0: i32, %arg1: i32) -> (i32, i32, i32) {
    %c0_i32 = arith.constant 0 : i32
    %c0_i32_0 = arith.constant 0 : i32
    %c0_i32_1 = arith.constant 0 : i32
    return %arg1, %c0_i32, %c0_i32_0 : i32, i32, i32
  }
  func.func @transform_5(%arg0: i32, %arg1: i32) -> (i32, i32, i32) {
    %c0_i32 = arith.constant 0 : i32
    %c0_i32_0 = arith.constant 0 : i32
    %c0_i32_1 = arith.constant 0 : i32
    return %arg1, %c0_i32, %c0_i32_0 : i32, i32, i32
  }
  func.func @transform_6(%arg0: i32, %arg1: i32) -> (i32, i32, i32) {
    %c0_i32 = arith.constant 0 : i32
    %c0_i32_0 = arith.constant 0 : i32
    %c0_i32_1 = arith.constant 0 : i32
    return %arg1, %c0_i32, %c0_i32_0 : i32, i32, i32
  }
  func.func @transform_7(%arg0: i32, %arg1: i32) -> (i32, i32, i32) {
    %c0_i32 = arith.constant 0 : i32
    %c0_i32_0 = arith.constant 0 : i32
    %c0_i32_1 = arith.constant 0 : i32
    return %arg1, %c0_i32, %c0_i32_0 : i32, i32, i32
  }
  func.func @transform_8(%arg0: i32, %arg1: i32) -> (i32, i32, i32) {
    %c0_i32 = arith.constant 0 : i32
    %c0_i32_0 = arith.constant 0 : i32
    %c0_i32_1 = arith.constant 0 : i32
    return %arg1, %c0_i32, %c0_i32_0 : i32, i32, i32
  }
  func.func @transform_9(%arg0: i32, %arg1: i32) -> (i32, i32, i32) {
    %c0_i32 = arith.constant 0 : i32
    %c0_i32_0 = arith.constant 0 : i32
    %c0_i32_1 = arith.constant 0 : i32
    return %arg1, %c0_i32, %c0_i32_0 : i32, i32, i32
  }
  func.func @transform_10(%arg0: i32, %arg1: i32) -> (i32, i32, i32) {
    %c0_i32 = arith.constant 0 : i32
    %c0_i32_0 = arith.constant 0 : i32
    %c0_i32_1 = arith.constant 0 : i32
    return %arg1, %c0_i32, %c0_i32_0 : i32, i32, i32
  }
  func.func @transform_11(%arg0: i32, %arg1: i32) -> (i32, i32, i32) {
    %c0_i32 = arith.constant 0 : i32
    %c0_i32_0 = arith.constant 0 : i32
    %c0_i32_1 = arith.constant 0 : i32
    return %arg1, %c0_i32, %c0_i32_0 : i32, i32, i32
  }
  func.func @transform_12(%arg0: i32, %arg1: i32) -> (i32, i32, i32) {
    %c0_i32 = arith.constant 0 : i32
    %c0_i32_0 = arith.constant 0 : i32
    %c0_i32_1 = arith.constant 0 : i32
    return %arg1, %c0_i32, %c0_i32_0 : i32, i32, i32
  }
  func.func @transform_13(%arg0: i32, %arg1: i32) -> (i32, i32, i32) {
    %c0_i32 = arith.constant 0 : i32
    %c0_i32_0 = arith.constant 0 : i32
    %c0_i32_1 = arith.constant 0 : i32
    return %arg1, %c0_i32, %c0_i32_0 : i32, i32, i32
  }
  func.func @transform_14(%arg0: i32, %arg1: i32) -> (i32, i32, i32) {
    %c0_i32 = arith.constant 0 : i32
    %c0_i32_0 = arith.constant 0 : i32
    %c0_i32_1 = arith.constant 0 : i32
    return %arg1, %c0_i32, %c0_i32_0 : i32, i32, i32
  }
  func.func @transform_15(%arg0: i32, %arg1: i32) -> (i32, i32, i32) {
    %c0_i32 = arith.constant 0 : i32
    %c0_i32_0 = arith.constant 0 : i32
    %c0_i32_1 = arith.constant 0 : i32
    return %arg1, %c0_i32, %c0_i32_0 : i32, i32, i32
  }
  func.func @transform_16(%arg0: i32, %arg1: i32) -> (i32, i32) {
    %c0_i32 = arith.constant 0 : i32
    %c0_i32_0 = arith.constant 0 : i32
    %c0_i32_1 = arith.constant 0 : i32
    return %c0_i32, %c0_i32_0 : i32, i32
  }
  func.func @transform_17(%arg0: i32, %arg1: i32) -> (i32, i32) {
    %c0_i32 = arith.constant 0 : i32
    %c0_i32_0 = arith.constant 0 : i32
    %c0_i32_1 = arith.constant 0 : i32
    return %c0_i32, %c0_i32_0 : i32, i32
  }
  func.func @transform_18(%arg0: i32, %arg1: i32) -> (i32, i32) {
    %c0_i32 = arith.constant 0 : i32
    %c0_i32_0 = arith.constant 0 : i32
    %c0_i32_1 = arith.constant 0 : i32
    return %c0_i32, %c0_i32_0 : i32, i32
  }
  func.func @transform_19(%arg0: i32, %arg1: i32) -> (i32, i32) {
    %c0_i32 = arith.constant 0 : i32
    %c0_i32_0 = arith.constant 0 : i32
    %c0_i32_1 = arith.constant 0 : i32
    return %c0_i32, %c0_i32_0 : i32, i32
  }
  func.func @transform_20(%arg0: i32, %arg1: i32) -> (i32, i32) {
    %c0_i32 = arith.constant 0 : i32
    %c0_i32_0 = arith.constant 0 : i32
    %c0_i32_1 = arith.constant 0 : i32
    return %c0_i32, %c0_i32_0 : i32, i32
  }
  func.func @transform_21(%arg0: i32, %arg1: i32) -> (i32, i32) {
    %c0_i32 = arith.constant 0 : i32
    %c0_i32_0 = arith.constant 0 : i32
    %c0_i32_1 = arith.constant 0 : i32
    return %c0_i32, %c0_i32_0 : i32, i32
  }
  func.func @transform_22(%arg0: i32, %arg1: i32) -> (i32, i32) {
    %c0_i32 = arith.constant 0 : i32
    %c0_i32_0 = arith.constant 0 : i32
    %c0_i32_1 = arith.constant 0 : i32
    return %c0_i32, %c0_i32_0 : i32, i32
  }
  func.func @transform_23(%arg0: i32, %arg1: i32) -> (i32, i32) {
    %c0_i32 = arith.constant 0 : i32
    %c0_i32_0 = arith.constant 0 : i32
    %c0_i32_1 = arith.constant 0 : i32
    return %c0_i32, %c0_i32_0 : i32, i32
  }
  func.func @transform_24(%arg0: i32, %arg1: i32) -> (i32, i32) {
    %c0_i32 = arith.constant 0 : i32
    %c0_i32_0 = arith.constant 0 : i32
    %c0_i32_1 = arith.constant 0 : i32
    return %c0_i32, %c0_i32_0 : i32, i32
  }
  func.func @transform_25(%arg0: i32, %arg1: i32) -> (i32, i32, i32) {
    %c0_i32 = arith.constant 0 : i32
    %c0_i32_0 = arith.constant 0 : i32
    %c0_i32_1 = arith.constant 0 : i32
    return %arg0, %c0_i32, %c0_i32_0 : i32, i32, i32
  }
}

</mosaic_0001>

<llo_original>
// kernel: finetune_forward.1
$region0: #{finetune_forward.1}
  #allocation0 [shape = 'u32[]', space=smem, size = 0x4, offset = 0x4, fixed_abs, tag = 'smem constant byte address 0x4 - core index']
  #allocation1 [shape = 'u32[144,128]{1,0:T(1,128)}', space=vmem, size = 0x12000, scoped, tag = 'internal scratch']
  %s0 = inlined_call_operand.vmem [shape: f32[2,8,16], index: 0, kind: input, shape index: {}]
  %s1 = inlined_call_operand.vmem [shape: f32[2,8,128], index: 1, kind: input, shape index: {}]
  %s2 = inlined_call_operand.vmem [shape: f32[8,128], index: 2, kind: input, shape index: {}]
  %s3 = inlined_call_operand.vmem [shape: bf16[16,128], index: 3, kind: input, shape index: {}]
  %s4 = inlined_call_operand.hbm [shape: bf16[4,128,384], index: 4, kind: input, shape index: {}]
  %s5 = inlined_call_operand.vmem [shape: f32[4,1,384], index: 5, kind: input, shape index: {}]
  %s6 = inlined_call_operand.vmem [shape: bf16[4,128,128], index: 6, kind: input, shape index: {}]
  %s7 = inlined_call_operand.hbm [shape: f32[4,1,128], index: 7, kind: input, shape index: {}]
  %s8 = inlined_call_operand.hbm [shape: bf16[4,128,256], index: 8, kind: input, shape index: {}]
  %s9 = inlined_call_operand.vmem [shape: f32[4,1,256], index: 9, kind: input, shape index: {}]
  %s10 = inlined_call_operand.hbm [shape: bf16[4,256,128], index: 10, kind: input, shape index: {}]
  %s11 = inlined_call_operand.hbm [shape: f32[4,1,128], index: 11, kind: input, shape index: {}]
  %s12 = inlined_call_operand.hbm [shape: f32[4,1,128], index: 12, kind: input, shape index: {}]
  %s13 = inlined_call_operand.hbm [shape: f32[4,1,128], index: 13, kind: input, shape index: {}]
  %s14 = inlined_call_operand.hbm [shape: f32[4,1,128], index: 14, kind: input, shape index: {}]
  %s15 = inlined_call_operand.hbm [shape: f32[4,1,128], index: 15, kind: input, shape index: {}]
  %s16 = inlined_call_operand.vmem [shape: bf16[256,8], index: 16, kind: input, shape index: {}]
  %s17 = inlined_call_operand.vmem [shape: bf16[8,128], index: 17, kind: input, shape index: {}]
  %s18 = inlined_call_operand.vmem [shape: f32[1,128], index: 18, kind: input, shape index: {}]
  %s19 = inlined_call_operand.vmem [shape: bf16[128,8], index: 19, kind: input, shape index: {}]
  %s20 = inlined_call_operand.vmem [shape: bf16[8,128], index: 20, kind: input, shape index: {}]
  %s21 = inlined_call_operand.vmem [shape: f32[1,128], index: 21, kind: input, shape index: {}]
  %s22 = inlined_call_operand.vmem [shape: bf16[128,8], index: 22, kind: input, shape index: {}]
  %s23 = inlined_call_operand.vmem [shape: bf16[8,128], index: 23, kind: input, shape index: {}]
  %s24 = inlined_call_operand.vmem [shape: f32[1,128], index: 24, kind: input, shape index: {}]
  %s25 = inlined_call_operand.hbm [shape: f32[2,8,128], index: 25, kind: output, shape index: {}]
  %s26 = sld [smem:[#allocation0]]
  $region177: #{finetune_forward.1} parent=0
    _
  %s28 = ssub.s32 1, %s26
  %s29 = scalar_select 0, %s28, %s26
  $region1: #{finetune_forward.1} parent=0
    #allocation2 [shape = 'u8[196608]{0}', space=vmem, size = 0x30000, scoped, tag = 'input window, operand 4']
    #allocation3 [shape = 's32[2]{0}', space=sflag, size = 0x8, scoped, tag = 'scoped memory for finetune_forward.1']
    #allocation4 [shape = 's32[2]{0}', space=sflag, size = 0x8, scoped, tag = 'scoped memory for finetune_forward.1']
    #allocation5 [shape = 'u8[1024]{0}', space=vmem, size = 0x400, scoped, tag = 'input window, operand 7']
    #allocation6 [shape = 's32[2]{0}', space=sflag, size = 0x8, scoped, tag = 'scoped memory for finetune_forward.1']
    #allocation7 [shape = 'u8[131072]{0}', space=vmem, size = 0x20000, scoped, tag = 'input window, operand 8']
    #allocation8 [shape = 'u8[131072]{0}', space=vmem, size = 0x20000, scoped, tag = 'input window, operand 10']
    #allocation9 [shape = 's32[2]{0}', space=sflag, size = 0x8, scoped, tag = 'scoped memory for finetune_forward.1']
    #allocation10 [shape = 'u8[1024]{0}', space=vmem, size = 0x400, scoped, tag = 'input window, operand 11']
    #allocation11 [shape = 'u8[1024]{0}', space=vmem, size = 0x400, scoped, tag = 'input window, operand 12']
    #allocation12 [shape = 's32[2]{0}', space=sflag, size = 0x8, scoped, tag = 'scoped memory for finetune_forward.1']
    #allocation13 [shape = 'u8[1024]{0}', space=vmem, size = 0x400, scoped, tag = 'input window, operand 13']
    #allocation14 [shape = 'u8[1024]{0}', space=vmem, size = 0x400, scoped, tag = 'input window, operand 14']
    #allocation15 [shape = 's32[2]{0}', space=sflag, size = 0x8, scoped, tag = 'scoped memory for finetune_forward.1']
    #allocation16 [shape = 'u8[1024]{0}', space=vmem, size = 0x400, scoped, tag = 'input window, operand 15']
    #allocation17 [shape = 'u8[8192]{0}', space=vmem, size = 0x2000, scoped, tag = 'output window, operand 0']
    %30 = vsyncpa [#allocation3], 0
    %s31 = scalar_lea.sflag [#allocation3], 1
    %32 = vsyncpa %s31, 0
    %33 = vsyncpa [#allocation6], 0
    %s34 = scalar_lea.sflag [#allocation6], 1
    %35 = vsyncpa %s34, 0
    %36 = vsyncpa [#allocation9], 0
    %s37 = scalar_lea.sflag [#allocation9], 1
    %38 = vsyncpa %s37, 0
    %39 = vsyncpa [#allocation12], 0
    %s40 = scalar_lea.sflag [#allocation12], 1
    %41 = vsyncpa %s40, 0
    %42 = vsyncpa [#allocation15], 0
    %s43 = scalar_lea.sflag [#allocation15], 1
    %44 = vsyncpa %s43, 0
    %45 = vsyncpa [#allocation4], 0
    %s46 = scalar_lea.sflag [#allocation4], 1
    %47 = vsyncpa %s46, 0
    loop: start=0, step=1, limit=10
    $region2: #{finetune_forward.1} parent=1 // loop_pre_header
      _
    $region3: #{finetune_forward.1} parent=1 // loop_header
      %s49 = sphi 0, %s53
      %p50 = scmp.ge.s32.totalorder %s49, 10
      %s56 = sphi 0, %s68
      %s57 = sphi 0, %s64
      %s58 = sphi 0, %s56
      %s59 = sphi 0, %s57
      %s60 = sphi 0, %s58
      %s61 = sphi 0, %s59
      %s71 = sphi 0, %s73
      %s74 = sphi 0, %s71
      %s75 = sphi 0, %s74
      %s91 = sphi 0, %s75
      %s97 = sphi 0, %s99
      %s100 = sphi 0, %s97
      %s101 = sphi 0, %s100
      %s117 = sphi 0, %s101
      %s121 = sphi 0, %s121
      %s123 = sphi 0, %s121
      %s124 = sphi 0, %s123
      %s138 = sphi 0, %s124
      %s142 = sphi 0, %s142
      %s144 = sphi 0, %s142
      %s145 = sphi 0, %s144
      %s159 = sphi 0, %s145
      %s165 = sphi 0, %s167
      %s168 = sphi 0, %s165
      %s169 = sphi 0, %s168
      %s185 = sphi 0, %s169
      %s191 = sphi 0, %s193
      %s194 = sphi 0, %s191
      %s195 = sphi 0, %s194
      %s211 = sphi 0, %s195
      %s217 = sphi 0, %s219
      %s220 = sphi 0, %s217
      %s221 = sphi 0, %s220
      %s237 = sphi 0, %s221
      %s243 = sphi 0, %s245
      %s246 = sphi 0, %s243
      %s247 = sphi 0, %s246
      %s263 = sphi 0, %s247
      %s269 = sphi 0, %s271
      %s272 = sphi 0, %s269
      %s273 = sphi 0, %s272
      %s289 = sphi 0, %s273
      %s295 = sphi 0, %s297
      %s298 = sphi 0, %s295
      %s299 = sphi 0, %s298
      %s315 = sphi 0, %s299
      %s321 = sphi 0, %s323
      %s324 = sphi 0, %s321
      %s325 = sphi 0, %s324
      %s341 = sphi 0, %s325
      %s347 = sphi 0, %s349
      %s350 = sphi 0, %s347
      %s351 = sphi 0, %s350
      %s367 = sphi 0, %s351
      %s373 = sphi 0, %s375
      %s376 = sphi 0, %s373
      %s377 = sphi 0, %s376
      %s393 = sphi 0, %s377
      %s399 = sphi 0, %s401
      %s402 = sphi 0, %s399
      %s403 = sphi 0, %s402
      %s419 = sphi 0, %s403
      %s425 = sphi 0, %s427
      %s428 = sphi 0, %s425
      %s429 = sphi 0, %s428
      %s445 = sphi 0, %s429
      %s451 = sphi 0, %s453
      %s454 = sphi 0, %s451
      %s455 = sphi 0, %s454
      %s471 = sphi 0, %s455
      %s475 = sphi 0, %s475
      %s477 = sphi 0, %s475
      %s478 = sphi 0, %s477
      %s492 = sphi 0, %s478
      %s496 = sphi 0, %s496
      %s498 = sphi 0, %s496
      %s499 = sphi 0, %s498
      %s513 = sphi 0, %s499
      %s517 = sphi 0, %s517
      %s519 = sphi 0, %s517
      %s520 = sphi 0, %s519
      %s534 = sphi 0, %s520
      %s538 = sphi 0, %s538
      %s540 = sphi 0, %s538
      %s541 = sphi 0, %s540
      %s555 = sphi 0, %s541
      %s559 = sphi 0, %s559
      %s561 = sphi 0, %s559
      %s562 = sphi 0, %s561
      %s576 = sphi 0, %s562
      %s580 = sphi 0, %s580
      %s582 = sphi 0, %s580
      %s583 = sphi 0, %s582
      %s597 = sphi 0, %s583
      %s601 = sphi 0, %s601
      %s603 = sphi 0, %s601
      %s604 = sphi 0, %s603
      %s618 = sphi 0, %s604
      %s622 = sphi 0, %s622
      %s624 = sphi 0, %s622
      %s625 = sphi 0, %s624
      %s639 = sphi 0, %s625
      %s643 = sphi 0, %s643
      %s645 = sphi 0, %s643
      %s646 = sphi 0, %s645
      %s660 = sphi 0, %s646
      %s666 = sphi 0, %s668
      %s669 = sphi 0, %s666
      %s670 = sphi 0, %s669
      %s686 = sphi 0, %s670
    $region4: #{finetune_forward.1} parent=1 // loop_header_branch
      %52 = sbr.rel (%p50) target = $region8
    $region5: #{finetune_forward.1} parent=1 // loop_body
      %s54 = ssub.s32 %s49, 1
      %s55 = ssub.s32 %s49, 2
      %s62 = sadd.s32 1, %s57
      %p63 = scmp.ge.s32.totalorder %s62, 4
      %s64 = scalar_select %p63, 0, %s62
      %s65 = sadd.s32 1, %s56
      %s66 = scalar_select %p63, %s65, %s56
      %p67 = scmp.ge.s32.totalorder %s66, 2
      %s68 = scalar_select %p67, 0, %s66
      %s69 = ssub.s32 %s56, %s68
      %p70 = scmp.eq.s32.totalorder %s69, 0
      %s72 = sadd.s32 %s71, 1
      %s73 = scalar_select %p70, %s71, %s72
      %p76 = pneg %p70
      %p77 = scmp.eq.s32.totalorder %s49, 7
      %p78 = por %p76, %p77
      %p79 = scmp.ne.s32.totalorder %s71, %s74
      %p80 = scmp.eq.s32.totalorder %s49, 0
      %p81 = por %p79, %p80
      %p82 = scmp.ne.s32.totalorder %s71, %s74
      %p83 = scmp.eq.s32.totalorder %s54, 7
      %p84 = por %p82, %p83
      %p85 = scmp.ne.s32.totalorder %s74, %s75
      %p86 = scmp.eq.s32.totalorder %s54, 0
      %p87 = por %p85, %p86
      %p88 = scmp.ne.s32.totalorder %s74, %s75
      %p89 = scmp.eq.s32.totalorder %s55, 7
      %p90 = por %p88, %p89
      %p92 = scmp.ne.s32.totalorder %s75, %s91
      %p93 = scmp.eq.s32.totalorder %s55, 0
      %p94 = por %p92, %p93
      %s95 = ssub.s32 %s56, %s68
      %p96 = scmp.eq.s32.totalorder %s95, 0
      %s98 = sadd.s32 %s97, 1
      %s99 = scalar_select %p96, %s97, %s98
      %p102 = pneg %p96
      %p103 = scmp.eq.s32.totalorder %s49, 7
      %p104 = por %p102, %p103
      %p105 = scmp.ne.s32.totalorder %s97, %s100
      %p106 = scmp.eq.s32.totalorder %s49, 0
      %p107 = por %p105, %p106
      %p108 = scmp.ne.s32.totalorder %s97, %s100
      %p109 = scmp.eq.s32.totalorder %s54, 7
      %p110 = por %p108, %p109
      %p111 = scmp.ne.s32.totalorder %s100, %s101
      %p112 = scmp.eq.s32.totalorder %s54, 0
      %p113 = por %p111, %p112
      %p114 = scmp.ne.s32.totalorder %s100, %s101
      %p115 = scmp.eq.s32.totalorder %s55, 7
      %p116 = por %p114, %p115
      %p118 = scmp.ne.s32.totalorder %s101, %s117
      %p119 = scmp.eq.s32.totalorder %s55, 0
      %p120 = por %p118, %p119
      %s122 = sadd.s32 %s121, 1
      %p125 = scmp.eq.s32.totalorder %s49, 7
      %p126 = scmp.ne.s32.totalorder %s121, %s123
      %p127 = scmp.eq.s32.totalorder %s49, 0
      %p128 = por %p126, %p127
      %p129 = scmp.ne.s32.totalorder %s121, %s123
      %p130 = scmp.eq.s32.totalorder %s54, 7
      %p131 = por %p129, %p130
      %p132 = scmp.ne.s32.totalorder %s123, %s124
      %p133 = scmp.eq.s32.totalorder %s54, 0
      %p134 = por %p132, %p133
      %p135 = scmp.ne.s32.totalorder %s123, %s124
      %p136 = scmp.eq.s32.totalorder %s55, 7
      %p137 = por %p135, %p136
      %p139 = scmp.ne.s32.totalorder %s124, %s138
      %p140 = scmp.eq.s32.totalorder %s55, 0
      %p141 = por %p139, %p140
      %s143 = sadd.s32 %s142, 1
      %p146 = scmp.eq.s32.totalorder %s49, 7
      %p147 = scmp.ne.s32.totalorder %s142, %s144
      %p148 = scmp.eq.s32.totalorder %s49, 0
      %p149 = por %p147, %p148
      %p150 = scmp.ne.s32.totalorder %s142, %s144
      %p151 = scmp.eq.s32.totalorder %s54, 7
      %p152 = por %p150, %p151
      %p153 = scmp.ne.s32.totalorder %s144, %s145
      %p154 = scmp.eq.s32.totalorder %s54, 0
      %p155 = por %p153, %p154
      %p156 = scmp.ne.s32.totalorder %s144, %s145
      %p157 = scmp.eq.s32.totalorder %s55, 7
      %p158 = por %p156, %p157
      %p160 = scmp.ne.s32.totalorder %s145, %s159
      %p161 = scmp.eq.s32.totalorder %s55, 0
      %p162 = por %p160, %p161
      %s163 = ssub.s32 %s57, %s64
      %p164 = scmp.eq.s32.totalorder %s163, 0
      %s166 = sadd.s32 %s165, 1
      %s167 = scalar_select %p164, %s165, %s166
      %p170 = pneg %p164
      %p171 = scmp.eq.s32.totalorder %s49, 7
      %p172 = por %p170, %p171
      %p173 = scmp.ne.s32.totalorder %s165, %s168
      %p174 = scmp.eq.s32.totalorder %s49, 0
      %p175 = por %p173, %p174
      %p176 = scmp.ne.s32.totalorder %s165, %s168
      %p177 = scmp.eq.s32.totalorder %s54, 7
      %p178 = por %p176, %p177
      %p179 = scmp.ne.s32.totalorder %s168, %s169
      %p180 = scmp.eq.s32.totalorder %s54, 0
      %p181 = por %p179, %p180
      %p182 = scmp.ne.s32.totalorder %s168, %s169
      %p183 = scmp.eq.s32.totalorder %s55, 7
      %p184 = por %p182, %p183
      %p186 = scmp.ne.s32.totalorder %s169, %s185
      %p187 = scmp.eq.s32.totalorder %s55, 0
      %p188 = por %p186, %p187
      %s189 = ssub.s32 %s57, %s64
      %p190 = scmp.eq.s32.totalorder %s189, 0
      %s192 = sadd.s32 %s191, 1
      %s193 = scalar_select %p190, %s191, %s192
      %p196 = pneg %p190
      %p197 = scmp.eq.s32.totalorder %s49, 7
      %p198 = por %p196, %p197
      %p199 = scmp.ne.s32.totalorder %s191, %s194
      %p200 = scmp.eq.s32.totalorder %s49, 0
      %p201 = por %p199, %p200
      %p202 = scmp.ne.s32.totalorder %s191, %s194
      %p203 = scmp.eq.s32.totalorder %s54, 7
      %p204 = por %p202, %p203
      %p205 = scmp.ne.s32.totalorder %s194, %s195
      %p206 = scmp.eq.s32.totalorder %s54, 0
      %p207 = por %p205, %p206
      %p208 = scmp.ne.s32.totalorder %s194, %s195
      %p209 = scmp.eq.s32.totalorder %s55, 7
      %p210 = por %p208, %p209
      %p212 = scmp.ne.s32.totalorder %s195, %s211
      %p213 = scmp.eq.s32.totalorder %s55, 0
      %p214 = por %p212, %p213
      %s215 = ssub.s32 %s57, %s64
      %p216 = scmp.eq.s32.totalorder %s215, 0
      %s218 = sadd.s32 %s217, 1
      %s219 = scalar_select %p216, %s217, %s218
      %p222 = pneg %p216
      %p223 = scmp.eq.s32.totalorder %s49, 7
      %p224 = por %p222, %p223
      %p225 = scmp.ne.s32.totalorder %s217, %s220
      %p226 = scmp.eq.s32.totalorder %s49, 0
      %p227 = por %p225, %p226
      %p228 = scmp.ne.s32.totalorder %s217, %s220
      %p229 = scmp.eq.s32.totalorder %s54, 7
      %p230 = por %p228, %p229
      %p231 = scmp.ne.s32.totalorder %s220, %s221
      %p232 = scmp.eq.s32.totalorder %s54, 0
      %p233 = por %p231, %p232
      %p234 = scmp.ne.s32.totalorder %s220, %s221
      %p235 = scmp.eq.s32.totalorder %s55, 7
      %p236 = por %p234, %p235
      %p238 = scmp.ne.s32.totalorder %s221, %s237
      %p239 = scmp.eq.s32.totalorder %s55, 0
      %p240 = por %p238, %p239
      %s241 = ssub.s32 %s57, %s64
      %p242 = scmp.eq.s32.totalorder %s241, 0
      %s244 = sadd.s32 %s243, 1
      %s245 = scalar_select %p242, %s243, %s244
      %p248 = pneg %p242
      %p249 = scmp.eq.s32.totalorder %s49, 7
      %p250 = por %p248, %p249
      %p251 = scmp.ne.s32.totalorder %s243, %s246
      %p252 = scmp.eq.s32.totalorder %s49, 0
      %p253 = por %p251, %p252
      %p254 = scmp.ne.s32.totalorder %s243, %s246
      %p255 = scmp.eq.s32.totalorder %s54, 7
      %p256 = por %p254, %p255
      %p257 = scmp.ne.s32.totalorder %s246, %s247
      %p258 = scmp.eq.s32.totalorder %s54, 0
      %p259 = por %p257, %p258
      %p260 = scmp.ne.s32.totalorder %s246, %s247
      %p261 = scmp.eq.s32.totalorder %s55, 7
      %p262 = por %p260, %p261
      %p264 = scmp.ne.s32.totalorder %s247, %s263
      %p265 = scmp.eq.s32.totalorder %s55, 0
      %p266 = por %p264, %p265
      %s267 = ssub.s32 %s57, %s64
      %p268 = scmp.eq.s32.totalorder %s267, 0
      %s270 = sadd.s32 %s269, 1
      %s271 = scalar_select %p268, %s269, %s270
      %p274 = pneg %p268
      %p275 = scmp.eq.s32.totalorder %s49, 7
      %p276 = por %p274, %p275
      %p277 = scmp.ne.s32.totalorder %s269, %s272
      %p278 = scmp.eq.s32.totalorder %s49, 0
      %p279 = por %p277, %p278
      %p280 = scmp.ne.s32.totalorder %s269, %s272
      %p281 = scmp.eq.s32.totalorder %s54, 7
      %p282 = por %p280, %p281
      %p283 = scmp.ne.s32.totalorder %s272, %s273
      %p284 = scmp.eq.s32.totalorder %s54, 0
      %p285 = por %p283, %p284
      %p286 = scmp.ne.s32.totalorder %s272, %s273
      %p287 = scmp.eq.s32.totalorder %s55, 7
      %p288 = por %p286, %p287
      %p290 = scmp.ne.s32.totalorder %s273, %s289
      %p291 = scmp.eq.s32.totalorder %s55, 0
      %p292 = por %p290, %p291
      %s293 = ssub.s32 %s57, %s64
      %p294 = scmp.eq.s32.totalorder %s293, 0
      %s296 = sadd.s32 %s295, 1
      %s297 = scalar_select %p294, %s295, %s296
      %p300 = pneg %p294
      %p301 = scmp.eq.s32.totalorder %s49, 7
      %p302 = por %p300, %p301
      %p303 = scmp.ne.s32.totalorder %s295, %s298
      %p304 = scmp.eq.s32.totalorder %s49, 0
      %p305 = por %p303, %p304
      %p306 = scmp.ne.s32.totalorder %s295, %s298
      %p307 = scmp.eq.s32.totalorder %s54, 7
      %p308 = por %p306, %p307
      %p309 = scmp.ne.s32.totalorder %s298, %s299
      %p310 = scmp.eq.s32.totalorder %s54, 0
      %p311 = por %p309, %p310
      %p312 = scmp.ne.s32.totalorder %s298, %s299
      %p313 = scmp.eq.s32.totalorder %s55, 7
      %p314 = por %p312, %p313
      %p316 = scmp.ne.s32.totalorder %s299, %s315
      %p317 = scmp.eq.s32.totalorder %s55, 0
      %p318 = por %p316, %p317
      %s319 = ssub.s32 %s57, %s64
      %p320 = scmp.eq.s32.totalorder %s319, 0
      %s322 = sadd.s32 %s321, 1
      %s323 = scalar_select %p320, %s321, %s322
      %p326 = pneg %p320
      %p327 = scmp.eq.s32.totalorder %s49, 7
      %p328 = por %p326, %p327
      %p329 = scmp.ne.s32.totalorder %s321, %s324
      %p330 = scmp.eq.s32.totalorder %s49, 0
      %p331 = por %p329, %p330
      %p332 = scmp.ne.s32.totalorder %s321, %s324
      %p333 = scmp.eq.s32.totalorder %s54, 7
      %p334 = por %p332, %p333
      %p335 = scmp.ne.s32.totalorder %s324, %s325
      %p336 = scmp.eq.s32.totalorder %s54, 0
      %p337 = por %p335, %p336
      %p338 = scmp.ne.s32.totalorder %s324, %s325
      %p339 = scmp.eq.s32.totalorder %s55, 7
      %p340 = por %p338, %p339
      %p342 = scmp.ne.s32.totalorder %s325, %s341
      %p343 = scmp.eq.s32.totalorder %s55, 0
      %p344 = por %p342, %p343
      %s345 = ssub.s32 %s57, %s64
      %p346 = scmp.eq.s32.totalorder %s345, 0
      %s348 = sadd.s32 %s347, 1
      %s349 = scalar_select %p346, %s347, %s348
      %p352 = pneg %p346
      %p353 = scmp.eq.s32.totalorder %s49, 7
      %p354 = por %p352, %p353
      %p355 = scmp.ne.s32.totalorder %s347, %s350
      %p356 = scmp.eq.s32.totalorder %s49, 0
      %p357 = por %p355, %p356
      %p358 = scmp.ne.s32.totalorder %s347, %s350
      %p359 = scmp.eq.s32.totalorder %s54, 7
      %p360 = por %p358, %p359
      %p361 = scmp.ne.s32.totalorder %s350, %s351
      %p362 = scmp.eq.s32.totalorder %s54, 0
      %p363 = por %p361, %p362
      %p364 = scmp.ne.s32.totalorder %s350, %s351
      %p365 = scmp.eq.s32.totalorder %s55, 7
      %p366 = por %p364, %p365
      %p368 = scmp.ne.s32.totalorder %s351, %s367
      %p369 = scmp.eq.s32.totalorder %s55, 0
      %p370 = por %p368, %p369
      %s371 = ssub.s32 %s57, %s64
      %p372 = scmp.eq.s32.totalorder %s371, 0
      %s374 = sadd.s32 %s373, 1
      %s375 = scalar_select %p372, %s373, %s374
      %p378 = pneg %p372
      %p379 = scmp.eq.s32.totalorder %s49, 7
      %p380 = por %p378, %p379
      %p381 = scmp.ne.s32.totalorder %s373, %s376
      %p382 = scmp.eq.s32.totalorder %s49, 0
      %p383 = por %p381, %p382
      %p384 = scmp.ne.s32.totalorder %s373, %s376
      %p385 = scmp.eq.s32.totalorder %s54, 7
      %p386 = por %p384, %p385
      %p387 = scmp.ne.s32.totalorder %s376, %s377
      %p388 = scmp.eq.s32.totalorder %s54, 0
      %p389 = por %p387, %p388
      %p390 = scmp.ne.s32.totalorder %s376, %s377
      %p391 = scmp.eq.s32.totalorder %s55, 7
      %p392 = por %p390, %p391
      %p394 = scmp.ne.s32.totalorder %s377, %s393
      %p395 = scmp.eq.s32.totalorder %s55, 0
      %p396 = por %p394, %p395
      %s397 = ssub.s32 %s57, %s64
      %p398 = scmp.eq.s32.totalorder %s397, 0
      %s400 = sadd.s32 %s399, 1
      %s401 = scalar_select %p398, %s399, %s400
      %p404 = pneg %p398
      %p405 = scmp.eq.s32.totalorder %s49, 7
      %p406 = por %p404, %p405
      %p407 = scmp.ne.s32.totalorder %s399, %s402
      %p408 = scmp.eq.s32.totalorder %s49, 0
      %p409 = por %p407, %p408
      %p410 = scmp.ne.s32.totalorder %s399, %s402
      %p411 = scmp.eq.s32.totalorder %s54, 7
      %p412 = por %p410, %p411
      %p413 = scmp.ne.s32.totalorder %s402, %s403
      %p414 = scmp.eq.s32.totalorder %s54, 0
      %p415 = por %p413, %p414
      %p416 = scmp.ne.s32.totalorder %s402, %s403
      %p417 = scmp.eq.s32.totalorder %s55, 7
      %p418 = por %p416, %p417
      %p420 = scmp.ne.s32.totalorder %s403, %s419
      %p421 = scmp.eq.s32.totalorder %s55, 0
      %p422 = por %p420, %p421
      %s423 = ssub.s32 %s57, %s64
      %p424 = scmp.eq.s32.totalorder %s423, 0
      %s426 = sadd.s32 %s425, 1
      %s427 = scalar_select %p424, %s425, %s426
      %p430 = pneg %p424
      %p431 = scmp.eq.s32.totalorder %s49, 7
      %p432 = por %p430, %p431
      %p433 = scmp.ne.s32.totalorder %s425, %s428
      %p434 = scmp.eq.s32.totalorder %s49, 0
      %p435 = por %p433, %p434
      %p436 = scmp.ne.s32.totalorder %s425, %s428
      %p437 = scmp.eq.s32.totalorder %s54, 7
      %p438 = por %p436, %p437
      %p439 = scmp.ne.s32.totalorder %s428, %s429
      %p440 = scmp.eq.s32.totalorder %s54, 0
      %p441 = por %p439, %p440
      %p442 = scmp.ne.s32.totalorder %s428, %s429
      %p443 = scmp.eq.s32.totalorder %s55, 7
      %p444 = por %p442, %p443
      %p446 = scmp.ne.s32.totalorder %s429, %s445
      %p447 = scmp.eq.s32.totalorder %s55, 0
      %p448 = por %p446, %p447
      %s449 = ssub.s32 %s57, %s64
      %p450 = scmp.eq.s32.totalorder %s449, 0
      %s452 = sadd.s32 %s451, 1
      %s453 = scalar_select %p450, %s451, %s452
      %p456 = pneg %p450
      %p457 = scmp.eq.s32.totalorder %s49, 7
      %p458 = por %p456, %p457
      %p459 = scmp.ne.s32.totalorder %s451, %s454
      %p460 = scmp.eq.s32.totalorder %s49, 0
      %p461 = por %p459, %p460
      %p462 = scmp.ne.s32.totalorder %s451, %s454
      %p463 = scmp.eq.s32.totalorder %s54, 7
      %p464 = por %p462, %p463
      %p465 = scmp.ne.s32.totalorder %s454, %s455
      %p466 = scmp.eq.s32.totalorder %s54, 0
      %p467 = por %p465, %p466
      %p468 = scmp.ne.s32.totalorder %s454, %s455
      %p469 = scmp.eq.s32.totalorder %s55, 7
      %p470 = por %p468, %p469
      %p472 = scmp.ne.s32.totalorder %s455, %s471
      %p473 = scmp.eq.s32.totalorder %s55, 0
      %p474 = por %p472, %p473
      %s476 = sadd.s32 %s475, 1
      %p479 = scmp.eq.s32.totalorder %s49, 7
      %p480 = scmp.ne.s32.totalorder %s475, %s477
      %p481 = scmp.eq.s32.totalorder %s49, 0
      %p482 = por %p480, %p481
      %p483 = scmp.ne.s32.totalorder %s475, %s477
      %p484 = scmp.eq.s32.totalorder %s54, 7
      %p485 = por %p483, %p484
      %p486 = scmp.ne.s32.totalorder %s477, %s478
      %p487 = scmp.eq.s32.totalorder %s54, 0
      %p488 = por %p486, %p487
      %p489 = scmp.ne.s32.totalorder %s477, %s478
      %p490 = scmp.eq.s32.totalorder %s55, 7
      %p491 = por %p489, %p490
      %p493 = scmp.ne.s32.totalorder %s478, %s492
      %p494 = scmp.eq.s32.totalorder %s55, 0
      %p495 = por %p493, %p494
      %s497 = sadd.s32 %s496, 1
      %p500 = scmp.eq.s32.totalorder %s49, 7
      %p501 = scmp.ne.s32.totalorder %s496, %s498
      %p502 = scmp.eq.s32.totalorder %s49, 0
      %p503 = por %p501, %p502
      %p504 = scmp.ne.s32.totalorder %s496, %s498
      %p505 = scmp.eq.s32.totalorder %s54, 7
      %p506 = por %p504, %p505
      %p507 = scmp.ne.s32.totalorder %s498, %s499
      %p508 = scmp.eq.s32.totalorder %s54, 0
      %p509 = por %p507, %p508
      %p510 = scmp.ne.s32.totalorder %s498, %s499
      %p511 = scmp.eq.s32.totalorder %s55, 7
      %p512 = por %p510, %p511
      %p514 = scmp.ne.s32.totalorder %s499, %s513
      %p515 = scmp.eq.s32.totalorder %s55, 0
      %p516 = por %p514, %p515
      %s518 = sadd.s32 %s517, 1
      %p521 = scmp.eq.s32.totalorder %s49, 7
      %p522 = scmp.ne.s32.totalorder %s517, %s519
      %p523 = scmp.eq.s32.totalorder %s49, 0
      %p524 = por %p522, %p523
      %p525 = scmp.ne.s32.totalorder %s517, %s519
      %p526 = scmp.eq.s32.totalorder %s54, 7
      %p527 = por %p525, %p526
      %p528 = scmp.ne.s32.totalorder %s519, %s520
      %p529 = scmp.eq.s32.totalorder %s54, 0
      %p530 = por %p528, %p529
      %p531 = scmp.ne.s32.totalorder %s519, %s520
      %p532 = scmp.eq.s32.totalorder %s55, 7
      %p533 = por %p531, %p532
      %p535 = scmp.ne.s32.totalorder %s520, %s534
      %p536 = scmp.eq.s32.totalorder %s55, 0
      %p537 = por %p535, %p536
      %s539 = sadd.s32 %s538, 1
      %p542 = scmp.eq.s32.totalorder %s49, 7
      %p543 = scmp.ne.s32.totalorder %s538, %s540
      %p544 = scmp.eq.s32.totalorder %s49, 0
      %p545 = por %p543, %p544
      %p546 = scmp.ne.s32.totalorder %s538, %s540
      %p547 = scmp.eq.s32.totalorder %s54, 7
      %p548 = por %p546, %p547
      %p549 = scmp.ne.s32.totalorder %s540, %s541
      %p550 = scmp.eq.s32.totalorder %s54, 0
      %p551 = por %p549, %p550
      %p552 = scmp.ne.s32.totalorder %s540, %s541
      %p553 = scmp.eq.s32.totalorder %s55, 7
      %p554 = por %p552, %p553
      %p556 = scmp.ne.s32.totalorder %s541, %s555
      %p557 = scmp.eq.s32.totalorder %s55, 0
      %p558 = por %p556, %p557
      %s560 = sadd.s32 %s559, 1
      %p563 = scmp.eq.s32.totalorder %s49, 7
      %p564 = scmp.ne.s32.totalorder %s559, %s561
      %p565 = scmp.eq.s32.totalorder %s49, 0
      %p566 = por %p564, %p565
      %p567 = scmp.ne.s32.totalorder %s559, %s561
      %p568 = scmp.eq.s32.totalorder %s54, 7
      %p569 = por %p567, %p568
      %p570 = scmp.ne.s32.totalorder %s561, %s562
      %p571 = scmp.eq.s32.totalorder %s54, 0
      %p572 = por %p570, %p571
      %p573 = scmp.ne.s32.totalorder %s561, %s562
      %p574 = scmp.eq.s32.totalorder %s55, 7
      %p575 = por %p573, %p574
      %p577 = scmp.ne.s32.totalorder %s562, %s576
      %p578 = scmp.eq.s32.totalorder %s55, 0
      %p579 = por %p577, %p578
      %s581 = sadd.s32 %s580, 1
      %p584 = scmp.eq.s32.totalorder %s49, 7
      %p585 = scmp.ne.s32.totalorder %s580, %s582
      %p586 = scmp.eq.s32.totalorder %s49, 0
      %p587 = por %p585, %p586
      %p588 = scmp.ne.s32.totalorder %s580, %s582
      %p589 = scmp.eq.s32.totalorder %s54, 7
      %p590 = por %p588, %p589
      %p591 = scmp.ne.s32.totalorder %s582, %s583
      %p592 = scmp.eq.s32.totalorder %s54, 0
      %p593 = por %p591, %p592
      %p594 = scmp.ne.s32.totalorder %s582, %s583
      %p595 = scmp.eq.s32.totalorder %s55, 7
      %p596 = por %p594, %p595
      %p598 = scmp.ne.s32.totalorder %s583, %s597
      %p599 = scmp.eq.s32.totalorder %s55, 0
      %p600 = por %p598, %p599
      %s602 = sadd.s32 %s601, 1
      %p605 = scmp.eq.s32.totalorder %s49, 7
      %p606 = scmp.ne.s32.totalorder %s601, %s603
      %p607 = scmp.eq.s32.totalorder %s49, 0
      %p608 = por %p606, %p607
      %p609 = scmp.ne.s32.totalorder %s601, %s603
      %p610 = scmp.eq.s32.totalorder %s54, 7
      %p611 = por %p609, %p610
      %p612 = scmp.ne.s32.totalorder %s603, %s604
      %p613 = scmp.eq.s32.totalorder %s54, 0
      %p614 = por %p612, %p613
      %p615 = scmp.ne.s32.totalorder %s603, %s604
      %p616 = scmp.eq.s32.totalorder %s55, 7
      %p617 = por %p615, %p616
      %p619 = scmp.ne.s32.totalorder %s604, %s618
      %p620 = scmp.eq.s32.totalorder %s55, 0
      %p621 = por %p619, %p620
      %s623 = sadd.s32 %s622, 1
      %p626 = scmp.eq.s32.totalorder %s49, 7
      %p627 = scmp.ne.s32.totalorder %s622, %s624
      %p628 = scmp.eq.s32.totalorder %s49, 0
      %p629 = por %p627, %p628
      %p630 = scmp.ne.s32.totalorder %s622, %s624
      %p631 = scmp.eq.s32.totalorder %s54, 7
      %p632 = por %p630, %p631
      %p633 = scmp.ne.s32.totalorder %s624, %s625
      %p634 = scmp.eq.s32.totalorder %s54, 0
      %p635 = por %p633, %p634
      %p636 = scmp.ne.s32.totalorder %s624, %s625
      %p637 = scmp.eq.s32.totalorder %s55, 7
      %p638 = por %p636, %p637
      %p640 = scmp.ne.s32.totalorder %s625, %s639
      %p641 = scmp.eq.s32.totalorder %s55, 0
      %p642 = por %p640, %p641
      %s644 = sadd.s32 %s643, 1
      %p647 = scmp.eq.s32.totalorder %s49, 7
      %p648 = scmp.ne.s32.totalorder %s643, %s645
      %p649 = scmp.eq.s32.totalorder %s49, 0
      %p650 = por %p648, %p649
      %p651 = scmp.ne.s32.totalorder %s643, %s645
      %p652 = scmp.eq.s32.totalorder %s54, 7
      %p653 = por %p651, %p652
      %p654 = scmp.ne.s32.totalorder %s645, %s646
      %p655 = scmp.eq.s32.totalorder %s54, 0
      %p656 = por %p654, %p655
      %p657 = scmp.ne.s32.totalorder %s645, %s646
      %p658 = scmp.eq.s32.totalorder %s55, 7
      %p659 = por %p657, %p658
      %p661 = scmp.ne.s32.totalorder %s646, %s660
      %p662 = scmp.eq.s32.totalorder %s55, 0
      %p663 = por %p661, %p662
      %s664 = ssub.s32 %s56, %s68
      %p665 = scmp.eq.s32.totalorder %s664, 0
      %s667 = sadd.s32 %s666, 1
      %s668 = scalar_select %p665, %s666, %s667
      %p671 = pneg %p665
      %p672 = scmp.eq.s32.totalorder %s49, 7
      %p673 = por %p671, %p672
      %p674 = scmp.ne.s32.totalorder %s666, %s669
      %p675 = scmp.eq.s32.totalorder %s49, 0
      %p676 = por %p674, %p675
      %p677 = scmp.ne.s32.totalorder %s666, %s669
      %p678 = scmp.eq.s32.totalorder %s54, 7
      %p679 = por %p677, %p678
      %p680 = scmp.ne.s32.totalorder %s669, %s670
      %p681 = scmp.eq.s32.totalorder %s54, 0
      %p682 = por %p680, %p681
      %p683 = scmp.ne.s32.totalorder %s669, %s670
      %p684 = scmp.eq.s32.totalorder %s55, 7
      %p685 = por %p683, %p684
      %p687 = scmp.ne.s32.totalorder %s670, %s686
      %p688 = scmp.eq.s32.totalorder %s55, 0
      %p689 = por %p687, %p688
      %p690 = scmp.le.s32.totalorder 1, %s49
      %p691 = scmp.lt.s32.totalorder %s49, 9
      %p692 = pnand %p690, %p691
      %p693 = pneg %p692
      // Predicated region
      $region9: #{finetune_forward.1} parent=5 // pred_check
        _
      $region10: #{finetune_forward.1} parent=5 // pred_check_branch
        %695 = sbr.rel (%p692) target = $region12
      $region11: #{finetune_forward.1} parent=5 // pred_region
        %s696 = ssub.s32 %s49, 1
        // Predicated region
        $region13: #{finetune_forward.1} parent=11 // pred_check
          %p697 = pneg %p134
        $region14: #{finetune_forward.1} parent=11 // pred_check_branch
          %699 = sbr.rel (%p697) target = $region16
        $region15: #{finetune_forward.1} parent=11 // pred_region
          _
        $region16: #{finetune_forward.1} parent=11 // pred_fallthru
          _
        // Predicated region
        $region17: #{finetune_forward.1} parent=11 // pred_check
          %p700 = pneg %p155
        $region18: #{finetune_forward.1} parent=11 // pred_check_branch
          %702 = sbr.rel (%p700) target = $region20
        $region19: #{finetune_forward.1} parent=11 // pred_region
          _
        $region20: #{finetune_forward.1} parent=11 // pred_fallthru
          _
        // Predicated region
        $region21: #{finetune_forward.1} parent=11 // pred_check
          %p703 = pneg %p488
        $region22: #{finetune_forward.1} parent=11 // pred_check_branch
          %705 = sbr.rel (%p703) target = $region24
        $region23: #{finetune_forward.1} parent=11 // pred_region
          _
        $region24: #{finetune_forward.1} parent=11 // pred_fallthru
          _
        // Predicated region
        $region25: #{finetune_forward.1} parent=11 // pred_check
          %p706 = pneg %p509
        $region26: #{finetune_forward.1} parent=11 // pred_check_branch
          %708 = sbr.rel (%p706) target = $region28
        $region27: #{finetune_forward.1} parent=11 // pred_region
          _
        $region28: #{finetune_forward.1} parent=11 // pred_fallthru
          _
        // Predicated region
        $region29: #{finetune_forward.1} parent=11 // pred_check
          %p709 = pneg %p530
        $region30: #{finetune_forward.1} parent=11 // pred_check_branch
          %711 = sbr.rel (%p709) target = $region32
        $region31: #{finetune_forward.1} parent=11 // pred_region
          _
        $region32: #{finetune_forward.1} parent=11 // pred_fallthru
          _
        // Predicated region
        $region33: #{finetune_forward.1} parent=11 // pred_check
          %p712 = pneg %p551
        $region34: #{finetune_forward.1} parent=11 // pred_check_branch
          %714 = sbr.rel (%p712) target = $region36
        $region35: #{finetune_forward.1} parent=11 // pred_region
          _
        $region36: #{finetune_forward.1} parent=11 // pred_fallthru
          _
        // Predicated region
        $region37: #{finetune_forward.1} parent=11 // pred_check
          %p715 = pneg %p572
        $region38: #{finetune_forward.1} parent=11 // pred_check_branch
          %717 = sbr.rel (%p715) target = $region40
        $region39: #{finetune_forward.1} parent=11 // pred_region
          _
        $region40: #{finetune_forward.1} parent=11 // pred_fallthru
          _
        // Predicated region
        $region41: #{finetune_forward.1} parent=11 // pred_check
          %p718 = pneg %p593
        $region42: #{finetune_forward.1} parent=11 // pred_check_branch
          %720 = sbr.rel (%p718) target = $region44
        $region43: #{finetune_forward.1} parent=11 // pred_region
          _
        $region44: #{finetune_forward.1} parent=11 // pred_fallthru
          _
        // Predicated region
        $region45: #{finetune_forward.1} parent=11 // pred_check
          %p721 = pneg %p614
        $region46: #{finetune_forward.1} parent=11 // pred_check_branch
          %723 = sbr.rel (%p721) target = $region48
        $region47: #{finetune_forward.1} parent=11 // pred_region
          _
        $region48: #{finetune_forward.1} parent=11 // pred_fallthru
          _
        // Predicated region
        $region49: #{finetune_forward.1} parent=11 // pred_check
          %p724 = pneg %p635
        $region50: #{finetune_forward.1} parent=11 // pred_check_branch
          %726 = sbr.rel (%p724) target = $region52
        $region51: #{finetune_forward.1} parent=11 // pred_region
          _
        $region52: #{finetune_forward.1} parent=11 // pred_fallthru
          _
        // Predicated region
        $region53: #{finetune_forward.1} parent=11 // pred_check
          %p727 = pneg %p656
        $region54: #{finetune_forward.1} parent=11 // pred_check_branch
          %729 = sbr.rel (%p727) target = $region56
        $region55: #{finetune_forward.1} parent=11 // pred_region
          _
        $region56: #{finetune_forward.1} parent=11 // pred_fallthru
          _
      $region12: #{finetune_forward.1} parent=5 // pred_fallthru
        _
      %p730 = scmp.lt.s32.totalorder %s49, 8
      // Predicated region
      $region57: #{finetune_forward.1} parent=5 // pred_check
        %p731 = pneg %p730
      $region58: #{finetune_forward.1} parent=5 // pred_check_branch
        %733 = sbr.rel (%p731) target = $region60
      $region59: #{finetune_forward.1} parent=5 // pred_region
        // Predicated region
        $region61: #{finetune_forward.1} parent=59 // pred_check
          %p734 = pneg %p81
        $region62: #{finetune_forward.1} parent=59 // pred_check_branch
          %736 = sbr.rel (%p734) target = $region64
        $region63: #{finetune_forward.1} parent=59 // pred_region
          %p737 = scmp.lt.s32.totalorder %s56, 1
          %s738 = scalar_select %p737, %s56, 1
          %s739 = smul.addr %s738, 8
          %s740 = scalar_lea.vmem %s0, %s739
        $region64: #{finetune_forward.1} parent=59 // pred_fallthru
          _
        // Predicated region
        $region65: #{finetune_forward.1} parent=59 // pred_check
          %p741 = pneg %p107
        $region66: #{finetune_forward.1} parent=59 // pred_check_branch
          %743 = sbr.rel (%p741) target = $region68
        $region67: #{finetune_forward.1} parent=59 // pred_region
          %p744 = scmp.lt.s32.totalorder %s56, 1
          %s745 = scalar_select %p744, %s56, 1
          %s746 = smul.addr %s745, 8
          %s747 = scalar_lea.vmem %s1, %s746
        $region68: #{finetune_forward.1} parent=59 // pred_fallthru
          _
        // Predicated region
        $region69: #{finetune_forward.1} parent=59 // pred_check
          %p748 = pneg %p175
        $region70: #{finetune_forward.1} parent=59 // pred_check_branch
          %750 = sbr.rel (%p748) target = $region72
        $region71: #{finetune_forward.1} parent=59 // pred_region
          %s751 = sand.u32 %s165, 1
          %s752 = scalar_lea.sflag [#allocation3], %s751
          %s753 = sand.u32 %s165, 1
          %s754 = smul.addr %s753, 192
          %s755 = scalar_lea.vmem [#allocation2], %s754
          %s757 = ssub.s32 3072, 3072
          %758 = vsyncadd %s752, %s757
          %s759 = smul.addr %s57, 48
          %s760 = smul.addr %s759, 64
          %s761 = scalar_lea.hbm %s4, %s760
          %s762 = sshll.u32 %s755, 4
          %s763 = int_to_ptr.vmem [resolvable:$true] %s762
          %768 = dma.hbm_to_vmem [thread:$0]  %s761, 3072, %s763, %s752, 192, 192, 12
        $region72: #{finetune_forward.1} parent=59 // pred_fallthru
          _
        // Predicated region
        $region73: #{finetune_forward.1} parent=59 // pred_check
          %p769 = pneg %p201
        $region74: #{finetune_forward.1} parent=59 // pred_check_branch
          %771 = sbr.rel (%p769) target = $region76
        $region75: #{finetune_forward.1} parent=59 // pred_region
          %p772 = scmp.lt.s32.totalorder %s57, 3
          %s773 = scalar_select %p772, %s57, 3
          %s774 = smul.addr %s773, 3
          %s775 = scalar_lea.vmem %s5, %s774
        $region76: #{finetune_forward.1} parent=59 // pred_fallthru
          _
        // Predicated region
        $region77: #{finetune_forward.1} parent=59 // pred_check
          %p776 = pneg %p227
        $region78: #{finetune_forward.1} parent=59 // pred_check_branch
          %778 = sbr.rel (%p776) target = $region80
        $region79: #{finetune_forward.1} parent=59 // pred_region
          %p779 = scmp.lt.s32.totalorder %s57, 3
          %s780 = scalar_select %p779, %s57, 3
          %s781 = smul.addr %s780, 16
          %s782 = smul.addr %s781, 4
          %s783 = scalar_lea.vmem %s6, %s782
        $region80: #{finetune_forward.1} parent=59 // pred_fallthru
          _
        // Predicated region
        $region81: #{finetune_forward.1} parent=59 // pred_check
          %p784 = pneg %p253
        $region82: #{finetune_forward.1} parent=59 // pred_check_branch
          %786 = sbr.rel (%p784) target = $region84
        $region83: #{finetune_forward.1} parent=59 // pred_region
          %s787 = sand.u32 %s49, 1
          %s788 = scalar_lea.sflag [#allocation6], %s787
          %s789 = sand.u32 %s243, 1
          %s790 = scalar_lea.vmem [#allocation5], %s789
          %s792 = ssub.s32 16, 16
          %793 = vsyncadd %s788, %s792
          %s794 = smul.addr %s57, 16
          %s795 = scalar_lea.hbm %s7, %s794
          %s797 = sshll.u32 %s790, 4
          %s798 = int_to_ptr.vmem [resolvable:$true] %s797
          %800 = dma.hbm_to_vmem [thread:$0]  %s795, 16, %s798, %s788
        $region84: #{finetune_forward.1} parent=59 // pred_fallthru
          _
        // Predicated region
        $region85: #{finetune_forward.1} parent=59 // pred_check
          %p801 = pneg %p279
        $region86: #{finetune_forward.1} parent=59 // pred_check_branch
          %803 = sbr.rel (%p801) target = $region88
        $region87: #{finetune_forward.1} parent=59 // pred_region
          %s804 = sand.u32 %s49, 1
          %s805 = scalar_lea.sflag [#allocation6], %s804
          %s806 = sand.u32 %s269, 1
          %s807 = smul.addr %s806, 128
          %s808 = scalar_lea.vmem [#allocation7], %s807
          %s810 = ssub.s32 2048, 2048
          %811 = vsyncadd %s805, %s810
          %s812 = smul.addr %s57, 32
          %s813 = smul.addr %s812, 64
          %s814 = scalar_lea.hbm %s8, %s813
          %s815 = sshll.u32 %s808, 4
          %s816 = int_to_ptr.vmem [resolvable:$true] %s815
          %821 = dma.hbm_to_vmem [thread:$0]  %s814, 2048, %s816, %s805, 128, 128, 8
        $region88: #{finetune_forward.1} parent=59 // pred_fallthru
          _
        // Predicated region
        $region89: #{finetune_forward.1} parent=59 // pred_check
          %p822 = pneg %p305
        $region90: #{finetune_forward.1} parent=59 // pred_check_branch
          %824 = sbr.rel (%p822) target = $region92
        $region91: #{finetune_forward.1} parent=59 // pred_region
          %p825 = scmp.lt.s32.totalorder %s57, 3
          %s826 = scalar_select %p825, %s57, 3
          %s827 = smul.addr %s826, 2
          %s828 = scalar_lea.vmem %s9, %s827
        $region92: #{finetune_forward.1} parent=59 // pred_fallthru
          _
        // Predicated region
        $region93: #{finetune_forward.1} parent=59 // pred_check
          %p829 = pneg %p331
        $region94: #{finetune_forward.1} parent=59 // pred_check_branch
          %831 = sbr.rel (%p829) target = $region96
        $region95: #{finetune_forward.1} parent=59 // pred_region
          %s832 = sand.u32 %s49, 1
          %s833 = scalar_lea.sflag [#allocation9], %s832
          %s834 = sand.u32 %s321, 1
          %s835 = smul.addr %s834, 128
          %s836 = scalar_lea.vmem [#allocation8], %s835
          %s838 = ssub.s32 2048, 2048
          %839 = vsyncadd %s833, %s838
          %s840 = smul.addr %s57, 32
          %s841 = smul.addr %s840, 64
          %s842 = scalar_lea.hbm %s10, %s841
          %s843 = sshll.u32 %s836, 4
          %s844 = int_to_ptr.vmem [resolvable:$true] %s843
          %849 = dma.hbm_to_vmem [thread:$0]  %s842, 2048, %s844, %s833, 64, 64, 4
        $region96: #{finetune_forward.1} parent=59 // pred_fallthru
          _
        // Predicated region
        $region97: #{finetune_forward.1} parent=59 // pred_check
          %p850 = pneg %p357
        $region98: #{finetune_forward.1} parent=59 // pred_check_branch
          %852 = sbr.rel (%p850) target = $region100
        $region99: #{finetune_forward.1} parent=59 // pred_region
          %s853 = sand.u32 %s49, 1
          %s854 = scalar_lea.sflag [#allocation9], %s853
          %s855 = sand.u32 %s347, 1
          %s856 = scalar_lea.vmem [#allocation10], %s855
          %s858 = ssub.s32 16, 16
          %859 = vsyncadd %s854, %s858
          %s860 = smul.addr %s57, 16
          %s861 = scalar_lea.hbm %s11, %s860
          %s863 = sshll.u32 %s856, 4
          %s864 = int_to_ptr.vmem [resolvable:$true] %s863
          %866 = dma.hbm_to_vmem [thread:$0]  %s861, 16, %s864, %s854
        $region100: #{finetune_forward.1} parent=59 // pred_fallthru
          _
        // Predicated region
        $region101: #{finetune_forward.1} parent=59 // pred_check
          %p867 = pneg %p383
        $region102: #{finetune_forward.1} parent=59 // pred_check_branch
          %869 = sbr.rel (%p867) target = $region104
        $region103: #{finetune_forward.1} parent=59 // pred_region
          %s870 = sand.u32 %s49, 1
          %s871 = scalar_lea.sflag [#allocation12], %s870
          %s872 = sand.u32 %s373, 1
          %s873 = scalar_lea.vmem [#allocation11], %s872
          %s875 = ssub.s32 16, 16
          %876 = vsyncadd %s871, %s875
          %s877 = smul.addr %s57, 16
          %s878 = scalar_lea.hbm %s12, %s877
          %s880 = sshll.u32 %s873, 4
          %s881 = int_to_ptr.vmem [resolvable:$true] %s880
          %883 = dma.hbm_to_vmem [thread:$0]  %s878, 16, %s881, %s871
        $region104: #{finetune_forward.1} parent=59 // pred_fallthru
          _
        // Predicated region
        $region105: #{finetune_forward.1} parent=59 // pred_check
          %p884 = pneg %p409
        $region106: #{finetune_forward.1} parent=59 // pred_check_branch
          %886 = sbr.rel (%p884) target = $region108
        $region107: #{finetune_forward.1} parent=59 // pred_region
          %s887 = sand.u32 %s49, 1
          %s888 = scalar_lea.sflag [#allocation12], %s887
          %s889 = sand.u32 %s399, 1
          %s890 = scalar_lea.vmem [#allocation13], %s889
          %s892 = ssub.s32 16, 16
          %893 = vsyncadd %s888, %s892
          %s894 = smul.addr %s57, 16
          %s895 = scalar_lea.hbm %s13, %s894
          %s897 = sshll.u32 %s890, 4
          %s898 = int_to_ptr.vmem [resolvable:$true] %s897
          %900 = dma.hbm_to_vmem [thread:$0]  %s895, 16, %s898, %s888
        $region108: #{finetune_forward.1} parent=59 // pred_fallthru
          _
        // Predicated region
        $region109: #{finetune_forward.1} parent=59 // pred_check
          %p901 = pneg %p435
        $region110: #{finetune_forward.1} parent=59 // pred_check_branch
          %903 = sbr.rel (%p901) target = $region112
        $region111: #{finetune_forward.1} parent=59 // pred_region
          %s904 = sand.u32 %s49, 1
          %s905 = scalar_lea.sflag [#allocation15], %s904
          %s906 = sand.u32 %s425, 1
          %s907 = scalar_lea.vmem [#allocation14], %s906
          %s909 = ssub.s32 16, 16
          %910 = vsyncadd %s905, %s909
          %s911 = smul.addr %s57, 16
          %s912 = scalar_lea.hbm %s14, %s911
          %s914 = sshll.u32 %s907, 4
          %s915 = int_to_ptr.vmem [resolvable:$true] %s914
          %917 = dma.hbm_to_vmem [thread:$0]  %s912, 16, %s915, %s905
        $region112: #{finetune_forward.1} parent=59 // pred_fallthru
          _
        // Predicated region
        $region113: #{finetune_forward.1} parent=59 // pred_check
          %p918 = pneg %p461
        $region114: #{finetune_forward.1} parent=59 // pred_check_branch
          %920 = sbr.rel (%p918) target = $region116
        $region115: #{finetune_forward.1} parent=59 // pred_region
          %s921 = sand.u32 %s49, 1
          %s922 = scalar_lea.sflag [#allocation15], %s921
          %s923 = sand.u32 %s451, 1
          %s924 = scalar_lea.vmem [#allocation16], %s923
          %s926 = ssub.s32 16, 16
          %927 = vsyncadd %s922, %s926
          %s928 = smul.addr %s57, 16
          %s929 = scalar_lea.hbm %s15, %s928
          %s931 = sshll.u32 %s924, 4
          %s932 = int_to_ptr.vmem [resolvable:$true] %s931
          %934 = dma.hbm_to_vmem [thread:$0]  %s929, 16, %s932, %s922
        $region116: #{finetune_forward.1} parent=59 // pred_fallthru
          _
      $region60: #{finetune_forward.1} parent=5 // pred_fallthru
        _
      %p935 = scmp.le.s32.totalorder 1, %s49
      %p936 = scmp.lt.s32.totalorder %s49, 9
      %p937 = pnand %p935, %p936
      %p938 = pneg %p937
      // Predicated region
      $region117: #{finetune_forward.1} parent=5 // pred_check
        _
      $region118: #{finetune_forward.1} parent=5 // pred_check_branch
        %940 = sbr.rel (%p937) target = $region120
      $region119: #{finetune_forward.1} parent=5 // pred_region
        %s941 = ssub.s32 %s49, 1
        %s942 = sand.u32 %s168, 1
        %s943 = scalar_lea.sflag [#allocation3], %s942
        %s944 = sand.u32 %s168, 1
        %s945 = smul.addr %s944, 192
        %s946 = scalar_lea.vmem [#allocation2], %s945
        // Predicated region
        $region121: #{finetune_forward.1} parent=119 // pred_check
          %p947 = pneg %p181
        $region122: #{finetune_forward.1} parent=119 // pred_check_branch
          %949 = sbr.rel (%p947) target = $region124
        $region123: #{finetune_forward.1} parent=119 // pred_region
          %950 = dma.done %s943, 3072
        $region124: #{finetune_forward.1} parent=119 // pred_fallthru
          _
        %s951 = sand.u32 %s54, 1
        %s952 = scalar_lea.sflag [#allocation6], %s951
        %s953 = sand.u32 %s246, 1
        %s954 = scalar_lea.vmem [#allocation5], %s953
        // Predicated region
        $region125: #{finetune_forward.1} parent=119 // pred_check
          %p955 = pneg %p259
        $region126: #{finetune_forward.1} parent=119 // pred_check_branch
          %957 = sbr.rel (%p955) target = $region128
        $region127: #{finetune_forward.1} parent=119 // pred_region
          %958 = dma.done %s952, 16
        $region128: #{finetune_forward.1} parent=119 // pred_fallthru
          _
        %s959 = sand.u32 %s54, 1
        %s960 = scalar_lea.sflag [#allocation6], %s959
        %s961 = sand.u32 %s272, 1
        %s962 = smul.addr %s961, 128
        %s963 = scalar_lea.vmem [#allocation7], %s962
        // Predicated region
        $region129: #{finetune_forward.1} parent=119 // pred_check
          %p964 = pneg %p285
        $region130: #{finetune_forward.1} parent=119 // pred_check_branch
          %966 = sbr.rel (%p964) target = $region132
        $region131: #{finetune_forward.1} parent=119 // pred_region
          %967 = dma.done %s960, 2048
        $region132: #{finetune_forward.1} parent=119 // pred_fallthru
          _
        %s968 = sand.u32 %s54, 1
        %s969 = scalar_lea.sflag [#allocation9], %s968
        %s970 = sand.u32 %s324, 1
        %s971 = smul.addr %s970, 128
        %s972 = scalar_lea.vmem [#allocation8], %s971
        // Predicated region
        $region133: #{finetune_forward.1} parent=119 // pred_check
          %p973 = pneg %p337
        $region134: #{finetune_forward.1} parent=119 // pred_check_branch
          %975 = sbr.rel (%p973) target = $region136
        $region135: #{finetune_forward.1} parent=119 // pred_region
          %976 = dma.done %s969, 2048
        $region136: #{finetune_forward.1} parent=119 // pred_fallthru
          _
        %s977 = sand.u32 %s54, 1
        %s978 = scalar_lea.sflag [#allocation9], %s977
        %s979 = sand.u32 %s350, 1
        %s980 = scalar_lea.vmem [#allocation10], %s979
        // Predicated region
        $region137: #{finetune_forward.1} parent=119 // pred_check
          %p981 = pneg %p363
        $region138: #{finetune_forward.1} parent=119 // pred_check_branch
          %983 = sbr.rel (%p981) target = $region140
        $region139: #{finetune_forward.1} parent=119 // pred_region
          %984 = dma.done %s978, 16
        $region140: #{finetune_forward.1} parent=119 // pred_fallthru
          _
        %s985 = sand.u32 %s54, 1
        %s986 = scalar_lea.sflag [#allocation12], %s985
        %s987 = sand.u32 %s376, 1
        %s988 = scalar_lea.vmem [#allocation11], %s987
        // Predicated region
        $region141: #{finetune_forward.1} parent=119 // pred_check
          %p989 = pneg %p389
        $region142: #{finetune_forward.1} parent=119 // pred_check_branch
          %991 = sbr.rel (%p989) target = $region144
        $region143: #{finetune_forward.1} parent=119 // pred_region
          %992 = dma.done %s986, 16
        $region144: #{finetune_forward.1} parent=119 // pred_fallthru
          _
        %s993 = sand.u32 %s54, 1
        %s994 = scalar_lea.sflag [#allocation12], %s993
        %s995 = sand.u32 %s402, 1
        %s996 = scalar_lea.vmem [#allocation13], %s995
        // Predicated region
        $region145: #{finetune_forward.1} parent=119 // pred_check
          %p997 = pneg %p415
        $region146: #{finetune_forward.1} parent=119 // pred_check_branch
          %999 = sbr.rel (%p997) target = $region148
        $region147: #{finetune_forward.1} parent=119 // pred_region
          %1000 = dma.done %s994, 16
        $region148: #{finetune_forward.1} parent=119 // pred_fallthru
          _
        %s1001 = sand.u32 %s54, 1
        %s1002 = scalar_lea.sflag [#allocation15], %s1001
        %s1003 = sand.u32 %s428, 1
        %s1004 = scalar_lea.vmem [#allocation14], %s1003
        // Predicated region
        $region149: #{finetune_forward.1} parent=119 // pred_check
          %p1005 = pneg %p441
        $region150: #{finetune_forward.1} parent=119 // pred_check_branch
          %1007 = sbr.rel (%p1005) target = $region152
        $region151: #{finetune_forward.1} parent=119 // pred_region
          %1008 = dma.done %s1002, 16
        $region152: #{finetune_forward.1} parent=119 // pred_fallthru
          _
        %s1009 = sand.u32 %s54, 1
        %s1010 = scalar_lea.sflag [#allocation15], %s1009
        %s1011 = sand.u32 %s454, 1
        %s1012 = scalar_lea.vmem [#allocation16], %s1011
        // Predicated region
        $region153: #{finetune_forward.1} parent=119 // pred_check
          %p1013 = pneg %p467
        $region154: #{finetune_forward.1} parent=119 // pred_check_branch
          %1015 = sbr.rel (%p1013) target = $region156
        $region155: #{finetune_forward.1} parent=119 // pred_region
          %1016 = dma.done %s1010, 16
        $region156: #{finetune_forward.1} parent=119 // pred_fallthru
          _
        %p1017 = scmp.lt.s32.totalorder %s58, 1
        %s1018 = scalar_select %p1017, %s58, 1
        %s1019 = smul.addr %s1018, 8
        %s1020 = scalar_lea.vmem %s0, %s1019
        %p1021 = pneg %p87
        %p1022 = pneg %p84
        %p1023 = scmp.lt.s32.totalorder %s58, 1
        %s1024 = scalar_select %p1023, %s58, 1
        %s1025 = smul.addr %s1024, 8
        %s1026 = scalar_lea.vmem %s1, %s1025
        %p1027 = pneg %p113
        %p1028 = pneg %p110
        %p1029 = pneg %p134
        %p1030 = pneg %p131
        %p1031 = pneg %p155
        %p1032 = pneg %p152
        %s1033 = sand.u32 %s168, 1
        %s1034 = scalar_lea.sflag [#allocation3], %s1033
        %s1035 = sand.u32 %s168, 1
        %s1036 = smul.addr %s1035, 192
        %s1037 = scalar_lea.vmem [#allocation2], %s1036
        %p1038 = pneg %p181
        %p1039 = pneg %p178
        %p1040 = scmp.lt.s32.totalorder %s59, 3
        %s1041 = scalar_select %p1040, %s59, 3
        %s1042 = smul.addr %s1041, 3
        %s1043 = scalar_lea.vmem %s5, %s1042
        %p1044 = pneg %p207
        %p1045 = pneg %p204
        %p1046 = scmp.lt.s32.totalorder %s59, 3
        %s1047 = scalar_select %p1046, %s59, 3
        %s1048 = smul.addr %s1047, 16
        %s1049 = smul.addr %s1048, 4
        %s1050 = scalar_lea.vmem %s6, %s1049
        %p1051 = pneg %p233
        %p1052 = pneg %p230
        %s1053 = sand.u32 %s54, 1
        %s1054 = scalar_lea.sflag [#allocation6], %s1053
        %s1055 = sand.u32 %s246, 1
        %s1056 = scalar_lea.vmem [#allocation5], %s1055
        %p1057 = pneg %p259
        %p1058 = pneg %p256
        %s1059 = sand.u32 %s54, 1
        %s1060 = scalar_lea.sflag [#allocation6], %s1059
        %s1061 = sand.u32 %s272, 1
        %s1062 = smul.addr %s1061, 128
        %s1063 = scalar_lea.vmem [#allocation7], %s1062
        %p1064 = pneg %p285
        %p1065 = pneg %p282
        %p1066 = scmp.lt.s32.totalorder %s59, 3
        %s1067 = scalar_select %p1066, %s59, 3
        %s1068 = smul.addr %s1067, 2
        %s1069 = scalar_lea.vmem %s9, %s1068
        %p1070 = pneg %p311
        %p1071 = pneg %p308
        %s1072 = sand.u32 %s54, 1
        %s1073 = scalar_lea.sflag [#allocation9], %s1072
        %s1074 = sand.u32 %s324, 1
        %s1075 = smul.addr %s1074, 128
        %s1076 = scalar_lea.vmem [#allocation8], %s1075
        %p1077 = pneg %p337
        %p1078 = pneg %p334
        %s1079 = sand.u32 %s54, 1
        %s1080 = scalar_lea.sflag [#allocation9], %s1079
        %s1081 = sand.u32 %s350, 1
        %s1082 = scalar_lea.vmem [#allocation10], %s1081
        %p1083 = pneg %p363
        %p1084 = pneg %p360
        %s1085 = sand.u32 %s54, 1
        %s1086 = scalar_lea.sflag [#allocation12], %s1085
        %s1087 = sand.u32 %s376, 1
        %s1088 = scalar_lea.vmem [#allocation11], %s1087
        %p1089 = pneg %p389
        %p1090 = pneg %p386
        %s1091 = sand.u32 %s54, 1
        %s1092 = scalar_lea.sflag [#allocation12], %s1091
        %s1093 = sand.u32 %s402, 1
        %s1094 = scalar_lea.vmem [#allocation13], %s1093
        %p1095 = pneg %p415
        %p1096 = pneg %p412
        %s1097 = sand.u32 %s54, 1
        %s1098 = scalar_lea.sflag [#allocation15], %s1097
        %s1099 = sand.u32 %s428, 1
        %s1100 = scalar_lea.vmem [#allocation14], %s1099
        %p1101 = pneg %p441
        %p1102 = pneg %p438
        %s1103 = sand.u32 %s54, 1
        %s1104 = scalar_lea.sflag [#allocation15], %s1103
        %s1105 = sand.u32 %s454, 1
        %s1106 = scalar_lea.vmem [#allocation16], %s1105
        %p1107 = pneg %p467
        %p1108 = pneg %p464
        %p1109 = pneg %p488
        %p1110 = pneg %p485
        %p1111 = pneg %p509
        %p1112 = pneg %p506
        %p1113 = pneg %p530
        %p1114 = pneg %p527
        %p1115 = pneg %p551
        %p1116 = pneg %p548
        %p1117 = pneg %p572
        %p1118 = pneg %p569
        %p1119 = pneg %p593
        %p1120 = pneg %p590
        %p1121 = pneg %p614
        %p1122 = pneg %p611
        %p1123 = pneg %p635
        %p1124 = pneg %p632
        %p1125 = pneg %p656
        %p1126 = pneg %p653
        %p1127 = pneg %p682
        %p1128 = pneg %p679
        %s1129 = sand.u32 %s669, 1
        %s1130 = scalar_lea.sflag [#allocation4], %s1129
        %s1131 = sand.u32 %s669, 1
        %s1132 = smul.addr %s1131, 8
        %s1133 = scalar_lea.vmem [#allocation17], %s1132
        %p1134 = scmp.lt.s32.totalorder %s58, 1
        %s1135 = scalar_select %p1134, %s58, 1
        %s1136 = smul.addr %s1135, 8
        %s1137 = scalar_lea.vmem %s0, %s1136
        %p1138 = scmp.lt.s32.totalorder %s58, 1
        %s1139 = scalar_select %p1138, %s58, 1
        %s1140 = smul.addr %s1139, 8
        %s1141 = scalar_lea.vmem %s1, %s1140
        %p1142 = scmp.lt.s32.totalorder %s59, 3
        %s1143 = scalar_select %p1142, %s59, 3
        %s1144 = smul.addr %s1143, 3
        %s1145 = scalar_lea.vmem %s5, %s1144
        %p1146 = scmp.lt.s32.totalorder %s59, 3
        %s1147 = scalar_select %p1146, %s59, 3
        %s1148 = smul.addr %s1147, 16
        %s1149 = smul.addr %s1148, 4
        %s1150 = scalar_lea.vmem %s6, %s1149
        %p1151 = scmp.lt.s32.totalorder %s59, 3
        %s1152 = scalar_select %p1151, %s59, 3
        %s1153 = smul.addr %s1152, 2
        %s1154 = scalar_lea.vmem %s9, %s1153
        %p1156 = scmp.eq.s32.totalorder %s59, 0
        // Predicated region
        $region157: #{finetune_forward.1} parent=119 // pred_check
          %p1157 = pneg %p1156
        $region158: #{finetune_forward.1} parent=119 // pred_check_branch
          %1159 = sbr.rel (%p1157) target = $region160
        $region159: #{finetune_forward.1} parent=119 // pred_region
          %v1160 = vld [vmem:[%s1137] sm:$0xff]
          %v1161 = vpack.c.bf16 %v1160, %v1160
          %v1162 = vld [vmem:[%s3] sm:$0xf]
          %v1163 = vld [vmem:[%s3 + $0x4] sm:$0xf]
          %v1164 = vld [vmem:[%s2] sm:$0xff]
          %v1167 = vunpack.c.l.b16 %v1162
          %v1168 = vunpack.c.l.b16 %v1163
          %v1169 = vpack.c.b16 %v1168, %v1167
          %vm1171 = vcmask 130048
          %v1173 = vsel %vm1171, %v1161, 0
          %1175 = vmatprep.subr.bf16.mxu0 0
          %1176 = vmatpush1.bf16.msra.mxu0 %v1169
          %1177 = vmatprep.subr.bf16.mxu0 0
          %1178 = vmatpush1.bf16.msra.mxu0 0
          %1179 = vmatprep.subr.bf16.mxu0 0
          %1180 = vmatpush1.bf16.msra.mxu0 0
          %1181 = vmatprep.subr.bf16.mxu0 0
          %1182 = vmatpush1.bf16.msra.mxu0 0
          %1183 = vmatprep.subr.bf16.mxu0 0
          %1184 = vmatpush1.bf16.msra.mxu0 0
          %1185 = vmatprep.subr.bf16.mxu0 0
          %1186 = vmatpush1.bf16.msra.mxu0 0
          %1187 = vmatprep.subr.bf16.mxu0 0
          %1188 = vmatpush1.bf16.msra.mxu0 0
          %1189 = vmatprep.subr.bf16.mxu0 0
          %1190 = vmatpush1.bf16.msra.mxu0 0
          %1191 = vmatprep.subr.bf16.mxu0 0
          %1192 = vmatpush1.bf16.msra.mxu0 0
          %1193 = vmatprep.subr.bf16.mxu0 0
          %1194 = vmatpush1.bf16.msra.mxu0 0
          %1195 = vmatprep.subr.bf16.mxu0 0
          %1196 = vmatpush1.bf16.msra.mxu0 0
          %1197 = vmatprep.subr.bf16.mxu0 0
          %1198 = vmatpush1.bf16.msra.mxu0 0
          %1199 = vmatprep.subr.bf16.mxu0 0
          %1200 = vmatpush1.bf16.msra.mxu0 0
          %1201 = vmatprep.subr.bf16.mxu0 0
          %1202 = vmatpush1.bf16.msra.mxu0 0
          %1203 = vmatprep.subr.bf16.mxu0 0
          %1204 = vmatpush1.bf16.msra.mxu0 0
          %1205 = vmatprep.subr.bf16.mxu0 0
          %1206 = vmatpush1.bf16.msra.mxu0 0
          %1207 = vmatprep.mubr.bf16.mxu0 0
          %1208 = vmatmul.mubr.bf16.gmra.mrb[0].mxu0 %v1173
          %v1209 = vpop.f32.mrb[0].mxu0
          %v1210 = vadd.f32 %v1164, %v1209
          %v1211 = vpop.f32.mrb[0].mxu0
          %v1212 = vpop.f32.mrb[0].mxu0
          %v1213 = vpop.f32.mrb[0].mxu0
          %1214 = vdwg.mxu0
          %1215 = vst [vmem:[%s1133] sm:$0xff] %v1210
        $region160: #{finetune_forward.1} parent=119 // pred_fallthru
          _
        %v1216 = vld [vmem:[%s1133] sm:$0xff]
        %v1217 = vpack.c.bf16 %v1216, %v1216
        %v1218 = vld [vmem:[%s946] sm:$0xff]
        %v1219 = vld [vmem:[%s946 + $0x8] sm:$0xf]
        %v1220 = vld [vmem:[%s946 + $0xc] sm:$0xff]
        %v1221 = vld [vmem:[%s946 + $0x14] sm:$0xf]
        %v1222 = vld [vmem:[%s946 + $0x18] sm:$0xff]
        %v1223 = vld [vmem:[%s946 + $0x20] sm:$0xf]
        %v1224 = vld [vmem:[%s946 + $0x24] sm:$0xff]
        %v1225 = vld [vmem:[%s946 + $0x2c] sm:$0xf]
        %v1226 = vld [vmem:[%s946 + $0x30] sm:$0xff]
        %v1227 = vld [vmem:[%s946 + $0x38] sm:$0xf]
        %v1228 = vld [vmem:[%s946 + $0x3c] sm:$0xff]
        %v1229 = vld [vmem:[%s946 + $0x44] sm:$0xf]
        %v1230 = vld [vmem:[%s946 + $0x48] sm:$0xff]
        %v1231 = vld [vmem:[%s946 + $0x50] sm:$0xf]
        %v1232 = vld [vmem:[%s946 + $0x54] sm:$0xff]
        %v1233 = vld [vmem:[%s946 + $0x5c] sm:$0xf]
        %v1234 = vld [vmem:[%s946 + $0x60] sm:$0xff]
        %v1235 = vld [vmem:[%s946 + $0x68] sm:$0xf]
        %v1236 = vld [vmem:[%s946 + $0x6c] sm:$0xff]
        %v1237 = vld [vmem:[%s946 + $0x74] sm:$0xf]
        %v1238 = vld [vmem:[%s946 + $0x78] sm:$0xff]
        %v1239 = vld [vmem:[%s946 + $0x80] sm:$0xf]
        %v1240 = vld [vmem:[%s946 + $0x84] sm:$0xff]
        %v1241 = vld [vmem:[%s946 + $0x8c] sm:$0xf]
        %v1242 = vld [vmem:[%s946 + $0x90] sm:$0xff]
        %v1243 = vld [vmem:[%s946 + $0x98] sm:$0xf]
        %v1244 = vld [vmem:[%s946 + $0x9c] sm:$0xff]
        %v1245 = vld [vmem:[%s946 + $0xa4] sm:$0xf]
        %v1246 = vld [vmem:[%s946 + $0xa8] sm:$0xff]
        %v1247 = vld [vmem:[%s946 + $0xb0] sm:$0xf]
        %v1248 = vld [vmem:[%s946 + $0xb4] sm:$0xff]
        %v1249 = vld [vmem:[%s946 + $0xbc] sm:$0xf]
        %v1250 = vld [vmem:[%s1145] sm:$0x7]
        %v1252 = vlaneseq
        %v1253 = vshrl.u32 %v1252, 7
        %v1254 = vsub.s32 0, %v1253
        %v1255 = vrot.slane %v1250, %v1254
        %v1256 = vlaneseq
        %v1257 = vshrl.u32 %v1256, 7
        %v1258 = vsub.s32 1, %v1257
        %v1259 = vrot.slane %v1250, %v1258
        %v1260 = vlaneseq
        %v1261 = vshrl.u32 %v1260, 7
        %v1262 = vsub.s32 2, %v1261
        %v1263 = vrot.slane %v1250, %v1262
        %v1299 = vunpack.c.l.b16 %v1218
        %v1300 = vunpack.c.h.b16 %v1218
        %v1301 = vunpack.c.l.b16 %v1219
        %v1302 = vunpack.c.l.b16 %v1220
        %v1303 = vunpack.c.h.b16 %v1220
        %v1304 = vunpack.c.l.b16 %v1221
        %v1305 = vunpack.c.l.b16 %v1222
        %v1306 = vunpack.c.h.b16 %v1222
        %v1307 = vunpack.c.l.b16 %v1223
        %v1308 = vunpack.c.l.b16 %v1224
        %v1309 = vunpack.c.h.b16 %v1224
        %v1310 = vunpack.c.l.b16 %v1225
        %v1311 = vunpack.c.l.b16 %v1226
        %v1312 = vunpack.c.h.b16 %v1226
        %v1313 = vunpack.c.l.b16 %v1227
        %v1314 = vunpack.c.l.b16 %v1228
        %v1315 = vunpack.c.h.b16 %v1228
        %v1316 = vunpack.c.l.b16 %v1229
        %v1317 = vunpack.c.l.b16 %v1230
        %v1318 = vunpack.c.h.b16 %v1230
        %v1319 = vunpack.c.l.b16 %v1231
        %v1320 = vunpack.c.l.b16 %v1232
        %v1321 = vunpack.c.h.b16 %v1232
        %v1322 = vunpack.c.l.b16 %v1233
        %v1323 = vunpack.c.l.b16 %v1234
        %v1324 = vunpack.c.h.b16 %v1234
        %v1325 = vunpack.c.l.b16 %v1235
        %v1326 = vunpack.c.l.b16 %v1236
        %v1327 = vunpack.c.h.b16 %v1236
        %v1328 = vunpack.c.l.b16 %v1237
        %v1329 = vunpack.c.l.b16 %v1238
        %v1330 = vunpack.c.h.b16 %v1238
        %v1331 = vunpack.c.l.b16 %v1239
        %v1332 = vunpack.c.l.b16 %v1240
        %v1333 = vunpack.c.h.b16 %v1240
        %v1334 = vunpack.c.l.b16 %v1241
        %v1335 = vunpack.c.l.b16 %v1242
        %v1336 = vunpack.c.h.b16 %v1242
        %v1337 = vunpack.c.l.b16 %v1243
        %v1338 = vunpack.c.l.b16 %v1244
        %v1339 = vunpack.c.h.b16 %v1244
        %v1340 = vunpack.c.l.b16 %v1245
        %v1341 = vunpack.c.l.b16 %v1246
        %v1342 = vunpack.c.h.b16 %v1246
        %v1343 = vunpack.c.l.b16 %v1247
        %v1344 = vunpack.c.l.b16 %v1248
        %v1345 = vunpack.c.h.b16 %v1248
        %v1346 = vunpack.c.l.b16 %v1249
        %v1347 = vpack.c.b16 %v1302, %v1299
        %v1348 = vpack.c.b16 %v1303, %v1300
        %v1349 = vpack.c.b16 %v1304, %v1301
        %v1350 = vpack.c.b16 %v1308, %v1305
        %v1351 = vpack.c.b16 %v1309, %v1306
        %v1352 = vpack.c.b16 %v1310, %v1307
        %v1353 = vpack.c.b16 %v1314, %v1311
        %v1354 = vpack.c.b16 %v1315, %v1312
        %v1355 = vpack.c.b16 %v1316, %v1313
        %v1356 = vpack.c.b16 %v1320, %v1317
        %v1357 = vpack.c.b16 %v1321, %v1318
        %v1358 = vpack.c.b16 %v1322, %v1319
        %v1359 = vpack.c.b16 %v1326, %v1323
        %v1360 = vpack.c.b16 %v1327, %v1324
        %v1361 = vpack.c.b16 %v1328, %v1325
        %v1362 = vpack.c.b16 %v1332, %v1329
        %v1363 = vpack.c.b16 %v1333, %v1330
        %v1364 = vpack.c.b16 %v1334, %v1331
        %v1365 = vpack.c.b16 %v1338, %v1335
        %v1366 = vpack.c.b16 %v1339, %v1336
        %v1367 = vpack.c.b16 %v1340, %v1337
        %v1368 = vpack.c.b16 %v1344, %v1341
        %v1369 = vpack.c.b16 %v1345, %v1342
        %v1370 = vpack.c.b16 %v1346, %v1343
        %1395 = vmatprep.subr.bf16.mxu0 %v1348
        %1396 = vmatpush1.bf16.msra.mxu0 %v1347
        %1397 = vmatprep.subr.bf16.mxu0 %v1351
        %1398 = vmatpush1.bf16.msra.mxu0 %v1350
        %1399 = vmatprep.subr.bf16.mxu0 %v1354
        %1400 = vmatpush1.bf16.msra.mxu0 %v1353
        %1401 = vmatprep.subr.bf16.mxu0 %v1357
        %1402 = vmatpush1.bf16.msra.mxu0 %v1356
        %1403 = vmatprep.subr.bf16.mxu0 %v1360
        %1404 = vmatpush1.bf16.msra.mxu0 %v1359
        %1405 = vmatprep.subr.bf16.mxu0 %v1363
        %1406 = vmatpush1.bf16.msra.mxu0 %v1362
        %1407 = vmatprep.subr.bf16.mxu0 %v1366
        %1408 = vmatpush1.bf16.msra.mxu0 %v1365
        %1409 = vmatprep.subr.bf16.mxu0 %v1369
        %1410 = vmatpush1.bf16.msra.mxu0 %v1368
        %1411 = vmatprep.subr.bf16.mxu0 0
        %1412 = vmatpush1.bf16.msra.mxu0 0
        %1413 = vmatprep.subr.bf16.mxu0 0
        %1414 = vmatpush1.bf16.msra.mxu0 0
        %1415 = vmatprep.subr.bf16.mxu0 0
        %1416 = vmatpush1.bf16.msra.mxu0 0
        %1417 = vmatprep.subr.bf16.mxu0 0
        %1418 = vmatpush1.bf16.msra.mxu0 0
        %1419 = vmatprep.subr.bf16.mxu0 0
        %1420 = vmatpush1.bf16.msra.mxu0 0
        %1421 = vmatprep.subr.bf16.mxu0 0
        %1422 = vmatpush1.bf16.msra.mxu0 0
        %1423 = vmatprep.subr.bf16.mxu0 0
        %1424 = vmatpush1.bf16.msra.mxu0 0
        %1425 = vmatprep.subr.bf16.mxu0 0
        %1426 = vmatpush1.bf16.msra.mxu0 0
        %1427 = vmatprep.mubr.bf16.mxu0 0
        %1428 = vmatmul.mubr.bf16.gmra.mrb[0].mxu0 %v1217
        %v1429 = vpop.f32.mrb[0].mxu0
        %v1430 = vadd.f32 %v1255, %v1429
        %v1431 = vpop.f32.mrb[0].mxu0
        %v1432 = vadd.f32 %v1259, %v1431
        %v1433 = vpop.f32.mrb[0].mxu0
        %v1434 = vpop.f32.mrb[0].mxu0
        %1435 = vdwg.mxu0
        %1436 = vmatprep.subr.bf16.mxu0 0
        %1437 = vmatpush1.bf16.msra.mxu0 %v1349
        %1438 = vmatprep.subr.bf16.mxu0 0
        %1439 = vmatpush1.bf16.msra.mxu0 %v1352
        %1440 = vmatprep.subr.bf16.mxu0 0
        %1441 = vmatpush1.bf16.msra.mxu0 %v1355
        %1442 = vmatprep.subr.bf16.mxu0 0
        %1443 = vmatpush1.bf16.msra.mxu0 %v1358
        %1444 = vmatprep.subr.bf16.mxu0 0
        %1445 = vmatpush1.bf16.msra.mxu0 %v1361
        %1446 = vmatprep.subr.bf16.mxu0 0
        %1447 = vmatpush1.bf16.msra.mxu0 %v1364
        %1448 = vmatprep.subr.bf16.mxu0 0
        %1449 = vmatpush1.bf16.msra.mxu0 %v1367
        %1450 = vmatprep.subr.bf16.mxu0 0
        %1451 = vmatpush1.bf16.msra.mxu0 %v1370
        %1452 = vmatprep.subr.bf16.mxu0 0
        %1453 = vmatpush1.bf16.msra.mxu0 0
        %1454 = vmatprep.subr.bf16.mxu0 0
        %1455 = vmatpush1.bf16.msra.mxu0 0
        %1456 = vmatprep.subr.bf16.mxu0 0
        %1457 = vmatpush1.bf16.msra.mxu0 0
        %1458 = vmatprep.subr.bf16.mxu0 0
        %1459 = vmatpush1.bf16.msra.mxu0 0
        %1460 = vmatprep.subr.bf16.mxu0 0
        %1461 = vmatpush1.bf16.msra.mxu0 0
        %1462 = vmatprep.subr.bf16.mxu0 0
        %1463 = vmatpush1.bf16.msra.mxu0 0
        %1464 = vmatprep.subr.bf16.mxu0 0
        %1465 = vmatpush1.bf16.msra.mxu0 0
        %1466 = vmatprep.subr.bf16.mxu0 0
        %1467 = vmatpush1.bf16.msra.mxu0 0
        %1468 = vmatprep.mubr.bf16.mxu0 0
        %1469 = vmatmul.mubr.bf16.gmra.mrb[0].mxu0 %v1217
        %v1470 = vpop.f32.mrb[0].mxu0
        %v1471 = vadd.f32 %v1263, %v1470
        %v1472 = vpop.f32.mrb[0].mxu0
        %v1473 = vpop.f32.mrb[0].mxu0
        %v1474 = vpop.f32.mrb[0].mxu0
        %1475 = vdwg.mxu0
        %v1476 = vmul.f32 %v1430, 0.17677669
        %1478 = vrot.lane.b32.xlu0 %v1476, 96
        %v1479 = vpop.permute.xlu0 %1478
        %1481 = vrot.lane.b32.xlu0 %v1476, 64
        %v1482 = vpop.permute.xlu0 %1481
        %1484 = vrot.lane.b32.xlu0 %v1476, 32
        %v1485 = vpop.permute.xlu0 %1484
        %v1487 = vcombine.low %v1476, %v1482
        %v1488 = vcombine.high %v1476, %v1482
        %v1490 = vunpack.c.l.s4 1983009808
        %v1491 = vunpack.c.0.s8 %v1490
        %v1492 = vlaneseq
        %v1493 = vshrl.u32 %v1492, 7
        %v1494 = vsub.s32 %v1491, %v1493
        %v1495 = vrot.slane %v1487, %v1494
        %v1497 = vunpack.c.l.s4 1983009808
        %v1498 = vunpack.c.0.s8 %v1497
        %v1499 = vlaneseq
        %v1500 = vshrl.u32 %v1499, 7
        %v1501 = vsub.s32 %v1498, %v1500
        %v1502 = vrot.slane %v1488, %v1501
        %v1503 = vcombine.low %v1479, %v1485
        %v1504 = vcombine.high %v1479, %v1485
        %v1506 = vunpack.c.l.s4 1983009808
        %v1507 = vunpack.c.0.s8 %v1506
        %v1508 = vlaneseq
        %v1509 = vshrl.u32 %v1508, 7
        %v1510 = vsub.s32 %v1507, %v1509
        %v1511 = vrot.slane %v1503, %v1510
        %v1513 = vunpack.c.l.s4 1983009808
        %v1514 = vunpack.c.0.s8 %v1513
        %v1515 = vlaneseq
        %v1516 = vshrl.u32 %v1515, 7
        %v1517 = vsub.s32 %v1514, %v1516
        %v1518 = vrot.slane %v1504, %v1517
        %v1519 = vcombine.low %v1495, %v1511
        %v1520 = vcombine.high %v1495, %v1511
        %v1522 = vunpack.c.l.s4 1934713408
        %v1523 = vunpack.c.0.s8 %v1522
        %v1524 = vlaneseq
        %v1525 = vshrl.u32 %v1524, 7
        %v1526 = vsub.s32 %v1523, %v1525
        %v1527 = vrot.slane %v1519, %v1526
        %v1529 = vunpack.c.l.s4 1934713408
        %v1530 = vunpack.c.0.s8 %v1529
        %v1531 = vlaneseq
        %v1532 = vshrl.u32 %v1531, 7
        %v1533 = vsub.s32 %v1530, %v1532
        %v1534 = vrot.slane %v1520, %v1533
        %v1535 = vcombine.low %v1502, %v1518
        %v1536 = vcombine.high %v1502, %v1518
        %v1538 = vunpack.c.l.s4 1934713408
        %v1539 = vunpack.c.0.s8 %v1538
        %v1540 = vlaneseq
        %v1541 = vshrl.u32 %v1540, 7
        %v1542 = vsub.s32 %v1539, %v1541
        %v1543 = vrot.slane %v1535, %v1542
        %v1545 = vunpack.c.l.s4 1934713408
        %v1546 = vunpack.c.0.s8 %v1545
        %v1547 = vlaneseq
        %v1548 = vshrl.u32 %v1547, 7
        %v1549 = vsub.s32 %v1546, %v1548
        %v1550 = vrot.slane %v1536, %v1549
        %v1551 = vcombine.high %v1527, 0.0
        %v1552 = vcombine.high %v1534, 0.0
        %v1553 = vcombine.high %v1543, 0.0
        %v1554 = vcombine.high %v1550, 0.0
        %v1555 = vpack.c.bf16 %v1527, %v1527
        %v1556 = vpack.c.bf16 %v1551, %v1551
        %v1557 = vpack.c.bf16 %v1534, %v1534
        %v1558 = vpack.c.bf16 %v1552, %v1552
        %v1559 = vpack.c.bf16 %v1543, %v1543
        %v1560 = vpack.c.bf16 %v1553, %v1553
        %v1561 = vpack.c.bf16 %v1550, %v1550
        %v1562 = vpack.c.bf16 %v1554, %v1554
        %1564 = vrot.lane.b32.xlu0 %v1432, 96
        %v1565 = vpop.permute.xlu0 %1564
        %1567 = vrot.lane.b32.xlu0 %v1432, 64
        %v1568 = vpop.permute.xlu0 %1567
        %1570 = vrot.lane.b32.xlu0 %v1432, 32
        %v1571 = vpop.permute.xlu0 %1570
        %v1573 = vcombine.low %v1432, %v1568
        %v1574 = vcombine.high %v1432, %v1568
        %v1576 = vunpack.c.l.s4 1983009808
        %v1577 = vunpack.c.0.s8 %v1576
        %v1578 = vlaneseq
        %v1579 = vshrl.u32 %v1578, 7
        %v1580 = vsub.s32 %v1577, %v1579
        %v1581 = vrot.slane %v1573, %v1580
        %v1583 = vunpack.c.l.s4 1983009808
        %v1584 = vunpack.c.0.s8 %v1583
        %v1585 = vlaneseq
        %v1586 = vshrl.u32 %v1585, 7
        %v1587 = vsub.s32 %v1584, %v1586
        %v1588 = vrot.slane %v1574, %v1587
        %v1589 = vcombine.low %v1565, %v1571
        %v1590 = vcombine.high %v1565, %v1571
        %v1592 = vunpack.c.l.s4 1983009808
        %v1593 = vunpack.c.0.s8 %v1592
        %v1594 = vlaneseq
        %v1595 = vshrl.u32 %v1594, 7
        %v1596 = vsub.s32 %v1593, %v1595
        %v1597 = vrot.slane %v1589, %v1596
        %v1599 = vunpack.c.l.s4 1983009808
        %v1600 = vunpack.c.0.s8 %v1599
        %v1601 = vlaneseq
        %v1602 = vshrl.u32 %v1601, 7
        %v1603 = vsub.s32 %v1600, %v1602
        %v1604 = vrot.slane %v1590, %v1603
        %v1605 = vcombine.low %v1581, %v1597
        %v1606 = vcombine.high %v1581, %v1597
        %v1608 = vunpack.c.l.s4 1934713408
        %v1609 = vunpack.c.0.s8 %v1608
        %v1610 = vlaneseq
        %v1611 = vshrl.u32 %v1610, 7
        %v1612 = vsub.s32 %v1609, %v1611
        %v1613 = vrot.slane %v1605, %v1612
        %v1615 = vunpack.c.l.s4 1934713408
        %v1616 = vunpack.c.0.s8 %v1615
        %v1617 = vlaneseq
        %v1618 = vshrl.u32 %v1617, 7
        %v1619 = vsub.s32 %v1616, %v1618
        %v1620 = vrot.slane %v1606, %v1619
        %v1621 = vcombine.low %v1588, %v1604
        %v1622 = vcombine.high %v1588, %v1604
        %v1624 = vunpack.c.l.s4 1934713408
        %v1625 = vunpack.c.0.s8 %v1624
        %v1626 = vlaneseq
        %v1627 = vshrl.u32 %v1626, 7
        %v1628 = vsub.s32 %v1625, %v1627
        %v1629 = vrot.slane %v1621, %v1628
        %v1631 = vunpack.c.l.s4 1934713408
        %v1632 = vunpack.c.0.s8 %v1631
        %v1633 = vlaneseq
        %v1634 = vshrl.u32 %v1633, 7
        %v1635 = vsub.s32 %v1632, %v1634
        %v1636 = vrot.slane %v1622, %v1635
        %v1637 = vcombine.high %v1613, 0.0
        %v1638 = vcombine.high %v1620, 0.0
        %v1639 = vcombine.high %v1629, 0.0
        %v1640 = vcombine.high %v1636, 0.0
        %v1641 = vpack.c.bf16 %v1613, %v1613
        %v1642 = vpack.c.bf16 %v1637, %v1637
        %v1643 = vpack.c.bf16 %v1620, %v1620
        %v1644 = vpack.c.bf16 %v1638, %v1638
        %v1645 = vpack.c.bf16 %v1629, %v1629
        %v1646 = vpack.c.bf16 %v1639, %v1639
        %v1647 = vpack.c.bf16 %v1636, %v1636
        %v1648 = vpack.c.bf16 %v1640, %v1640
        %1650 = vrot.lane.b32.xlu0 %v1471, 96
        %v1651 = vpop.permute.xlu0 %1650
        %1653 = vrot.lane.b32.xlu0 %v1471, 64
        %v1654 = vpop.permute.xlu0 %1653
        %1656 = vrot.lane.b32.xlu0 %v1471, 32
        %v1657 = vpop.permute.xlu0 %1656
        %v1659 = vcombine.low %v1471, %v1654
        %v1660 = vcombine.high %v1471, %v1654
        %v1662 = vunpack.c.l.s4 1983009808
        %v1663 = vunpack.c.0.s8 %v1662
        %v1664 = vlaneseq
        %v1665 = vshrl.u32 %v1664, 7
        %v1666 = vsub.s32 %v1663, %v1665
        %v1667 = vrot.slane %v1659, %v1666
        %v1669 = vunpack.c.l.s4 1983009808
        %v1670 = vunpack.c.0.s8 %v1669
        %v1671 = vlaneseq
        %v1672 = vshrl.u32 %v1671, 7
        %v1673 = vsub.s32 %v1670, %v1672
        %v1674 = vrot.slane %v1660, %v1673
        %v1675 = vcombine.low %v1651, %v1657
        %v1676 = vcombine.high %v1651, %v1657
        %v1678 = vunpack.c.l.s4 1983009808
        %v1679 = vunpack.c.0.s8 %v1678
        %v1680 = vlaneseq
        %v1681 = vshrl.u32 %v1680, 7
        %v1682 = vsub.s32 %v1679, %v1681
        %v1683 = vrot.slane %v1675, %v1682
        %v1685 = vunpack.c.l.s4 1983009808
        %v1686 = vunpack.c.0.s8 %v1685
        %v1687 = vlaneseq
        %v1688 = vshrl.u32 %v1687, 7
        %v1689 = vsub.s32 %v1686, %v1688
        %v1690 = vrot.slane %v1676, %v1689
        %v1691 = vcombine.low %v1667, %v1683
        %v1692 = vcombine.high %v1667, %v1683
        %v1694 = vunpack.c.l.s4 1934713408
        %v1695 = vunpack.c.0.s8 %v1694
        %v1696 = vlaneseq
        %v1697 = vshrl.u32 %v1696, 7
        %v1698 = vsub.s32 %v1695, %v1697
        %v1699 = vrot.slane %v1691, %v1698
        %v1701 = vunpack.c.l.s4 1934713408
        %v1702 = vunpack.c.0.s8 %v1701
        %v1703 = vlaneseq
        %v1704 = vshrl.u32 %v1703, 7
        %v1705 = vsub.s32 %v1702, %v1704
        %v1706 = vrot.slane %v1692, %v1705
        %v1707 = vcombine.low %v1674, %v1690
        %v1708 = vcombine.high %v1674, %v1690
        %v1710 = vunpack.c.l.s4 1934713408
        %v1711 = vunpack.c.0.s8 %v1710
        %v1712 = vlaneseq
        %v1713 = vshrl.u32 %v1712, 7
        %v1714 = vsub.s32 %v1711, %v1713
        %v1715 = vrot.slane %v1707, %v1714
        %v1717 = vunpack.c.l.s4 1934713408
        %v1718 = vunpack.c.0.s8 %v1717
        %v1719 = vlaneseq
        %v1720 = vshrl.u32 %v1719, 7
        %v1721 = vsub.s32 %v1718, %v1720
        %v1722 = vrot.slane %v1708, %v1721
        %v1723 = vcombine.high %v1699, 0.0
        %v1724 = vcombine.high %v1706, 0.0
        %v1725 = vcombine.high %v1715, 0.0
        %v1726 = vcombine.high %v1722, 0.0
        %v1727 = vpack.c.bf16 %v1699, %v1699
        %v1728 = vpack.c.bf16 %v1723, %v1723
        %v1729 = vpack.c.bf16 %v1706, %v1706
        %v1730 = vpack.c.bf16 %v1724, %v1724
        %v1731 = vpack.c.bf16 %v1715, %v1715
        %v1732 = vpack.c.bf16 %v1725, %v1725
        %v1733 = vpack.c.bf16 %v1722, %v1722
        %v1734 = vpack.c.bf16 %v1726, %v1726
        %v1735 = vcombine.low %v1555, %v1559
        %v1737 = vunpack.c.l.s4 1983009808
        %v1738 = vunpack.c.0.s8 %v1737
        %v1739 = vlaneseq
        %v1740 = vshrl.u32 %v1739, 7
        %v1741 = vsub.s32 %v1738, %v1740
        %v1742 = vrot.slane %v1735, %v1741
        %v1743 = vcombine.low %v1557, %v1561
        %v1745 = vunpack.c.l.s4 1983009808
        %v1746 = vunpack.c.0.s8 %v1745
        %v1747 = vlaneseq
        %v1748 = vshrl.u32 %v1747, 7
        %v1749 = vsub.s32 %v1746, %v1748
        %v1750 = vrot.slane %v1743, %v1749
        %v1751 = vcombine.low %v1742, %v1750
        %v1753 = vunpack.c.l.s4 1934713408
        %v1754 = vunpack.c.0.s8 %v1753
        %v1755 = vlaneseq
        %v1756 = vshrl.u32 %v1755, 7
        %v1757 = vsub.s32 %v1754, %v1756
        %v1758 = vrot.slane %v1751, %v1757
        %v1759 = vcombine.high %v1758, 0
        %v1760 = vcombine.low %v1556, %v1560
        %v1762 = vunpack.c.l.s4 1983009808
        %v1763 = vunpack.c.0.s8 %v1762
        %v1764 = vlaneseq
        %v1765 = vshrl.u32 %v1764, 7
        %v1766 = vsub.s32 %v1763, %v1765
        %v1767 = vrot.slane %v1760, %v1766
        %v1768 = vcombine.low %v1558, %v1562
        %v1770 = vunpack.c.l.s4 1983009808
        %v1771 = vunpack.c.0.s8 %v1770
        %v1772 = vlaneseq
        %v1773 = vshrl.u32 %v1772, 7
        %v1774 = vsub.s32 %v1771, %v1773
        %v1775 = vrot.slane %v1768, %v1774
        %v1776 = vcombine.low %v1767, %v1775
        %v1778 = vunpack.c.l.s4 1934713408
        %v1779 = vunpack.c.0.s8 %v1778
        %v1780 = vlaneseq
        %v1781 = vshrl.u32 %v1780, 7
        %v1782 = vsub.s32 %v1779, %v1781
        %v1783 = vrot.slane %v1776, %v1782
        %v1784 = vcombine.high %v1783, 0
        %v1787 = vpack.i.b16 %v1783, %v1758
        %v1788 = vshrl.u32 %v1758, 16
        %v1789 = vshrl.u32 %v1783, 16
        %v1790 = vpack.i.b16 %v1789, %v1788
        %v1793 = vpack.i.b16 %v1784, %v1759
        %v1794 = vshrl.u32 %v1759, 16
        %v1795 = vshrl.u32 %v1784, 16
        %v1796 = vpack.i.b16 %v1795, %v1794
        %1797 = vxpose.xlu0.c.b16.start [1/8] %v1641, 128
        %1798 = vxpose.xlu0.c.b16.cont [2/8] 0, 128
        %1799 = vxpose.xlu0.c.b16.cont [3/8] 0, 128
        %1800 = vxpose.xlu0.c.b16.cont [4/8] 0, 128
        %1801 = vxpose.xlu0.c.b16.cont [5/8] 0, 128
        %1802 = vxpose.xlu0.c.b16.cont [6/8] 0, 128
        %1803 = vxpose.xlu0.c.b16.cont [7/8] 0, 128
        %1804 = vxpose.xlu0.c.b16.end [8/8] 0, 128
        %v1805 = vpop.trf.xlu0
        %v1806 = vpop.trf.xlu0
        %v1807 = vpop.trf.xlu0
        %v1808 = vpop.trf.xlu0
        %v1809 = vpop.trf.xlu0
        %v1810 = vpop.trf.xlu0
        %v1811 = vpop.trf.xlu0
        %v1812 = vpop.trf.xlu0
        %1813 = vxpose.xlu0.c.b16.start [1/8] %v1642, 128
        %1814 = vxpose.xlu0.c.b16.cont [2/8] 0, 128
        %1815 = vxpose.xlu0.c.b16.cont [3/8] 0, 128
        %1816 = vxpose.xlu0.c.b16.cont [4/8] 0, 128
        %1817 = vxpose.xlu0.c.b16.cont [5/8] 0, 128
        %1818 = vxpose.xlu0.c.b16.cont [6/8] 0, 128
        %1819 = vxpose.xlu0.c.b16.cont [7/8] 0, 128
        %1820 = vxpose.xlu0.c.b16.end [8/8] 0, 128
        %v1821 = vpop.trf.xlu0
        %v1822 = vpop.trf.xlu0
        %v1823 = vpop.trf.xlu0
        %v1824 = vpop.trf.xlu0
        %v1825 = vpop.trf.xlu0
        %v1826 = vpop.trf.xlu0
        %v1827 = vpop.trf.xlu0
        %v1828 = vpop.trf.xlu0
        %1829 = vxpose.xlu0.c.b16.start [1/8] %v1643, 128
        %1830 = vxpose.xlu0.c.b16.cont [2/8] 0, 128
        %1831 = vxpose.xlu0.c.b16.cont [3/8] 0, 128
        %1832 = vxpose.xlu0.c.b16.cont [4/8] 0, 128
        %1833 = vxpose.xlu0.c.b16.cont [5/8] 0, 128
        %1834 = vxpose.xlu0.c.b16.cont [6/8] 0, 128
        %1835 = vxpose.xlu0.c.b16.cont [7/8] 0, 128
        %1836 = vxpose.xlu0.c.b16.end [8/8] 0, 128
        %v1837 = vpop.trf.xlu0
        %v1838 = vpop.trf.xlu0
        %v1839 = vpop.trf.xlu0
        %v1840 = vpop.trf.xlu0
        %v1841 = vpop.trf.xlu0
        %v1842 = vpop.trf.xlu0
        %v1843 = vpop.trf.xlu0
        %v1844 = vpop.trf.xlu0
        %1845 = vxpose.xlu0.c.b16.start [1/8] %v1644, 128
        %1846 = vxpose.xlu0.c.b16.cont [2/8] 0, 128
        %1847 = vxpose.xlu0.c.b16.cont [3/8] 0, 128
        %1848 = vxpose.xlu0.c.b16.cont [4/8] 0, 128
        %1849 = vxpose.xlu0.c.b16.cont [5/8] 0, 128
        %1850 = vxpose.xlu0.c.b16.cont [6/8] 0, 128
        %1851 = vxpose.xlu0.c.b16.cont [7/8] 0, 128
        %1852 = vxpose.xlu0.c.b16.end [8/8] 0, 128
        %v1853 = vpop.trf.xlu0
        %v1854 = vpop.trf.xlu0
        %v1855 = vpop.trf.xlu0
        %v1856 = vpop.trf.xlu0
        %v1857 = vpop.trf.xlu0
        %v1858 = vpop.trf.xlu0
        %v1859 = vpop.trf.xlu0
        %v1860 = vpop.trf.xlu0
        %1861 = vxpose.xlu0.c.b16.start [1/8] %v1645, 128
        %1862 = vxpose.xlu0.c.b16.cont [2/8] 0, 128
        %1863 = vxpose.xlu0.c.b16.cont [3/8] 0, 128
        %1864 = vxpose.xlu0.c.b16.cont [4/8] 0, 128
        %1865 = vxpose.xlu0.c.b16.cont [5/8] 0, 128
        %1866 = vxpose.xlu0.c.b16.cont [6/8] 0, 128
        %1867 = vxpose.xlu0.c.b16.cont [7/8] 0, 128
        %1868 = vxpose.xlu0.c.b16.end [8/8] 0, 128
        %v1869 = vpop.trf.xlu0
        %v1870 = vpop.trf.xlu0
        %v1871 = vpop.trf.xlu0
        %v1872 = vpop.trf.xlu0
        %v1873 = vpop.trf.xlu0
        %v1874 = vpop.trf.xlu0
        %v1875 = vpop.trf.xlu0
        %v1876 = vpop.trf.xlu0
        %1877 = vxpose.xlu0.c.b16.start [1/8] %v1646, 128
        %1878 = vxpose.xlu0.c.b16.cont [2/8] 0, 128
        %1879 = vxpose.xlu0.c.b16.cont [3/8] 0, 128
        %1880 = vxpose.xlu0.c.b16.cont [4/8] 0, 128
        %1881 = vxpose.xlu0.c.b16.cont [5/8] 0, 128
        %1882 = vxpose.xlu0.c.b16.cont [6/8] 0, 128
        %1883 = vxpose.xlu0.c.b16.cont [7/8] 0, 128
        %1884 = vxpose.xlu0.c.b16.end [8/8] 0, 128
        %v1885 = vpop.trf.xlu0
        %v1886 = vpop.trf.xlu0
        %v1887 = vpop.trf.xlu0
        %v1888 = vpop.trf.xlu0
        %v1889 = vpop.trf.xlu0
        %v1890 = vpop.trf.xlu0
        %v1891 = vpop.trf.xlu0
        %v1892 = vpop.trf.xlu0
        %1893 = vxpose.xlu0.c.b16.start [1/8] %v1647, 128
        %1894 = vxpose.xlu0.c.b16.cont [2/8] 0, 128
        %1895 = vxpose.xlu0.c.b16.cont [3/8] 0, 128
        %1896 = vxpose.xlu0.c.b16.cont [4/8] 0, 128
        %1897 = vxpose.xlu0.c.b16.cont [5/8] 0, 128
        %1898 = vxpose.xlu0.c.b16.cont [6/8] 0, 128
        %1899 = vxpose.xlu0.c.b16.cont [7/8] 0, 128
        %1900 = vxpose.xlu0.c.b16.end [8/8] 0, 128
        %v1901 = vpop.trf.xlu0
        %v1902 = vpop.trf.xlu0
        %v1903 = vpop.trf.xlu0
        %v1904 = vpop.trf.xlu0
        %v1905 = vpop.trf.xlu0
        %v1906 = vpop.trf.xlu0
        %v1907 = vpop.trf.xlu0
        %v1908 = vpop.trf.xlu0
        %1909 = vxpose.xlu0.c.b16.start [1/8] %v1648, 128
        %1910 = vxpose.xlu0.c.b16.cont [2/8] 0, 128
        %1911 = vxpose.xlu0.c.b16.cont [3/8] 0, 128
        %1912 = vxpose.xlu0.c.b16.cont [4/8] 0, 128
        %1913 = vxpose.xlu0.c.b16.cont [5/8] 0, 128
        %1914 = vxpose.xlu0.c.b16.cont [6/8] 0, 128
        %1915 = vxpose.xlu0.c.b16.cont [7/8] 0, 128
        %1916 = vxpose.xlu0.c.b16.end [8/8] 0, 128
        %v1917 = vpop.trf.xlu0
        %v1918 = vpop.trf.xlu0
        %v1919 = vpop.trf.xlu0
        %v1920 = vpop.trf.xlu0
        %v1921 = vpop.trf.xlu0
        %v1922 = vpop.trf.xlu0
        %v1923 = vpop.trf.xlu0
        %v1924 = vpop.trf.xlu0
        %v1927 = vpack.i.b16 %v1821, %v1805
        %v1929 = vshrl.u32 %v1805, 16
        %v1930 = vshrl.u32 %v1821, 16
        %v1931 = vpack.i.b16 %v1930, %v1929
        %v1935 = vpack.i.b16 %v1853, %v1837
        %v1937 = vshrl.u32 %v1837, 16
        %v1938 = vshrl.u32 %v1853, 16
        %v1939 = vpack.i.b16 %v1938, %v1937
        %v1943 = vpack.i.b16 %v1885, %v1869
        %v1945 = vshrl.u32 %v1869, 16
        %v1946 = vshrl.u32 %v1885, 16
        %v1947 = vpack.i.b16 %v1946, %v1945
        %v1951 = vpack.i.b16 %v1917, %v1901
        %v1953 = vshrl.u32 %v1901, 16
        %v1954 = vshrl.u32 %v1917, 16
        %v1955 = vpack.i.b16 %v1954, %v1953
        %v1959 = vpack.i.b16 %v1822, %v1806
        %v1961 = vshrl.u32 %v1806, 16
        %v1962 = vshrl.u32 %v1822, 16
        %v1963 = vpack.i.b16 %v1962, %v1961
        %v1967 = vpack.i.b16 %v1854, %v1838
        %v1969 = vshrl.u32 %v1838, 16
        %v1970 = vshrl.u32 %v1854, 16
        %v1971 = vpack.i.b16 %v1970, %v1969
        %v1975 = vpack.i.b16 %v1886, %v1870
        %v1977 = vshrl.u32 %v1870, 16
        %v1978 = vshrl.u32 %v1886, 16
        %v1979 = vpack.i.b16 %v1978, %v1977
        %v1983 = vpack.i.b16 %v1918, %v1902
        %v1985 = vshrl.u32 %v1902, 16
        %v1986 = vshrl.u32 %v1918, 16
        %v1987 = vpack.i.b16 %v1986, %v1985
        %v1989 = vcombine.low %v1927, %v1943
        %v1990 = vcombine.high %v1927, %v1943
        %v1992 = vunpack.c.l.s4 1983009808
        %v1993 = vunpack.c.0.s8 %v1992
        %v1994 = vlaneseq
        %v1995 = vshrl.u32 %v1994, 7
        %v1996 = vsub.s32 %v1993, %v1995
        %v1997 = vrot.slane %v1989, %v1996
        %v1999 = vunpack.c.l.s4 1983009808
        %v2000 = vunpack.c.0.s8 %v1999
        %v2001 = vlaneseq
        %v2002 = vshrl.u32 %v2001, 7
        %v2003 = vsub.s32 %v2000, %v2002
        %v2004 = vrot.slane %v1990, %v2003
        %v2005 = vcombine.low %v1935, %v1951
        %v2006 = vcombine.high %v1935, %v1951
        %v2008 = vunpack.c.l.s4 1983009808
        %v2009 = vunpack.c.0.s8 %v2008
        %v2010 = vlaneseq
        %v2011 = vshrl.u32 %v2010, 7
        %v2012 = vsub.s32 %v2009, %v2011
        %v2013 = vrot.slane %v2005, %v2012
        %v2015 = vunpack.c.l.s4 1983009808
        %v2016 = vunpack.c.0.s8 %v2015
        %v2017 = vlaneseq
        %v2018 = vshrl.u32 %v2017, 7
        %v2019 = vsub.s32 %v2016, %v2018
        %v2020 = vrot.slane %v2006, %v2019
        %v2021 = vcombine.low %v1997, %v2013
        %v2022 = vcombine.high %v1997, %v2013
        %v2024 = vunpack.c.l.s4 1934713408
        %v2025 = vunpack.c.0.s8 %v2024
        %v2026 = vlaneseq
        %v2027 = vshrl.u32 %v2026, 7
        %v2028 = vsub.s32 %v2025, %v2027
        %v2029 = vrot.slane %v2021, %v2028
        %v2031 = vunpack.c.l.s4 1934713408
        %v2032 = vunpack.c.0.s8 %v2031
        %v2033 = vlaneseq
        %v2034 = vshrl.u32 %v2033, 7
        %v2035 = vsub.s32 %v2032, %v2034
        %v2036 = vrot.slane %v2022, %v2035
        %v2037 = vcombine.low %v2004, %v2020
        %v2038 = vcombine.high %v2004, %v2020
        %v2040 = vunpack.c.l.s4 1934713408
        %v2041 = vunpack.c.0.s8 %v2040
        %v2042 = vlaneseq
        %v2043 = vshrl.u32 %v2042, 7
        %v2044 = vsub.s32 %v2041, %v2043
        %v2045 = vrot.slane %v2037, %v2044
        %v2047 = vunpack.c.l.s4 1934713408
        %v2048 = vunpack.c.0.s8 %v2047
        %v2049 = vlaneseq
        %v2050 = vshrl.u32 %v2049, 7
        %v2051 = vsub.s32 %v2048, %v2050
        %v2052 = vrot.slane %v2038, %v2051
        %v2053 = vcombine.high %v2029, 0
        %v2054 = vcombine.high %v2036, 0
        %v2055 = vcombine.high %v2045, 0
        %v2056 = vcombine.high %v2052, 0
        %v2057 = vcombine.low %v1931, %v1947
        %v2058 = vcombine.high %v1931, %v1947
        %v2060 = vunpack.c.l.s4 1983009808
        %v2061 = vunpack.c.0.s8 %v2060
        %v2062 = vlaneseq
        %v2063 = vshrl.u32 %v2062, 7
        %v2064 = vsub.s32 %v2061, %v2063
        %v2065 = vrot.slane %v2057, %v2064
        %v2067 = vunpack.c.l.s4 1983009808
        %v2068 = vunpack.c.0.s8 %v2067
        %v2069 = vlaneseq
        %v2070 = vshrl.u32 %v2069, 7
        %v2071 = vsub.s32 %v2068, %v2070
        %v2072 = vrot.slane %v2058, %v2071
        %v2073 = vcombine.low %v1939, %v1955
        %v2074 = vcombine.high %v1939, %v1955
        %v2076 = vunpack.c.l.s4 1983009808
        %v2077 = vunpack.c.0.s8 %v2076
        %v2078 = vlaneseq
        %v2079 = vshrl.u32 %v2078, 7
        %v2080 = vsub.s32 %v2077, %v2079
        %v2081 = vrot.slane %v2073, %v2080
        %v2083 = vunpack.c.l.s4 1983009808
        %v2084 = vunpack.c.0.s8 %v2083
        %v2085 = vlaneseq
        %v2086 = vshrl.u32 %v2085, 7
        %v2087 = vsub.s32 %v2084, %v2086
        %v2088 = vrot.slane %v2074, %v2087
        %v2089 = vcombine.low %v2065, %v2081
        %v2090 = vcombine.high %v2065, %v2081
        %v2092 = vunpack.c.l.s4 1934713408
        %v2093 = vunpack.c.0.s8 %v2092
        %v2094 = vlaneseq
        %v2095 = vshrl.u32 %v2094, 7
        %v2096 = vsub.s32 %v2093, %v2095
        %v2097 = vrot.slane %v2089, %v2096
        %v2099 = vunpack.c.l.s4 1934713408
        %v2100 = vunpack.c.0.s8 %v2099
        %v2101 = vlaneseq
        %v2102 = vshrl.u32 %v2101, 7
        %v2103 = vsub.s32 %v2100, %v2102
        %v2104 = vrot.slane %v2090, %v2103
        %v2105 = vcombine.low %v2072, %v2088
        %v2106 = vcombine.high %v2072, %v2088
        %v2108 = vunpack.c.l.s4 1934713408
        %v2109 = vunpack.c.0.s8 %v2108
        %v2110 = vlaneseq
        %v2111 = vshrl.u32 %v2110, 7
        %v2112 = vsub.s32 %v2109, %v2111
        %v2113 = vrot.slane %v2105, %v2112
        %v2115 = vunpack.c.l.s4 1934713408
        %v2116 = vunpack.c.0.s8 %v2115
        %v2117 = vlaneseq
        %v2118 = vshrl.u32 %v2117, 7
        %v2119 = vsub.s32 %v2116, %v2118
        %v2120 = vrot.slane %v2106, %v2119
        %v2121 = vcombine.high %v2097, 0
        %v2122 = vcombine.high %v2104, 0
        %v2123 = vcombine.high %v2113, 0
        %v2124 = vcombine.high %v2120, 0
        %v2125 = vcombine.low %v1959, %v1975
        %v2126 = vcombine.high %v1959, %v1975
        %v2128 = vunpack.c.l.s4 1983009808
        %v2129 = vunpack.c.0.s8 %v2128
        %v2130 = vlaneseq
        %v2131 = vshrl.u32 %v2130, 7
        %v2132 = vsub.s32 %v2129, %v2131
        %v2133 = vrot.slane %v2125, %v2132
        %v2135 = vunpack.c.l.s4 1983009808
        %v2136 = vunpack.c.0.s8 %v2135
        %v2137 = vlaneseq
        %v2138 = vshrl.u32 %v2137, 7
        %v2139 = vsub.s32 %v2136, %v2138
        %v2140 = vrot.slane %v2126, %v2139
        %v2141 = vcombine.low %v1967, %v1983
        %v2142 = vcombine.high %v1967, %v1983
        %v2144 = vunpack.c.l.s4 1983009808
        %v2145 = vunpack.c.0.s8 %v2144
        %v2146 = vlaneseq
        %v2147 = vshrl.u32 %v2146, 7
        %v2148 = vsub.s32 %v2145, %v2147
        %v2149 = vrot.slane %v2141, %v2148
        %v2151 = vunpack.c.l.s4 1983009808
        %v2152 = vunpack.c.0.s8 %v2151
        %v2153 = vlaneseq
        %v2154 = vshrl.u32 %v2153, 7
        %v2155 = vsub.s32 %v2152, %v2154
        %v2156 = vrot.slane %v2142, %v2155
        %v2157 = vcombine.low %v2133, %v2149
        %v2158 = vcombine.high %v2133, %v2149
        %v2160 = vunpack.c.l.s4 1934713408
        %v2161 = vunpack.c.0.s8 %v2160
        %v2162 = vlaneseq
        %v2163 = vshrl.u32 %v2162, 7
        %v2164 = vsub.s32 %v2161, %v2163
        %v2165 = vrot.slane %v2157, %v2164
        %v2167 = vunpack.c.l.s4 1934713408
        %v2168 = vunpack.c.0.s8 %v2167
        %v2169 = vlaneseq
        %v2170 = vshrl.u32 %v2169, 7
        %v2171 = vsub.s32 %v2168, %v2170
        %v2172 = vrot.slane %v2158, %v2171
        %v2173 = vcombine.low %v2140, %v2156
        %v2174 = vcombine.high %v2140, %v2156
        %v2176 = vunpack.c.l.s4 1934713408
        %v2177 = vunpack.c.0.s8 %v2176
        %v2178 = vlaneseq
        %v2179 = vshrl.u32 %v2178, 7
        %v2180 = vsub.s32 %v2177, %v2179
        %v2181 = vrot.slane %v2173, %v2180
        %v2183 = vunpack.c.l.s4 1934713408
        %v2184 = vunpack.c.0.s8 %v2183
        %v2185 = vlaneseq
        %v2186 = vshrl.u32 %v2185, 7
        %v2187 = vsub.s32 %v2184, %v2186
        %v2188 = vrot.slane %v2174, %v2187
        %v2189 = vcombine.high %v2165, 0
        %v2190 = vcombine.high %v2172, 0
        %v2191 = vcombine.high %v2181, 0
        %v2192 = vcombine.high %v2188, 0
        %v2193 = vcombine.low %v1963, %v1979
        %v2194 = vcombine.high %v1963, %v1979
        %v2196 = vunpack.c.l.s4 1983009808
        %v2197 = vunpack.c.0.s8 %v2196
        %v2198 = vlaneseq
        %v2199 = vshrl.u32 %v2198, 7
        %v2200 = vsub.s32 %v2197, %v2199
        %v2201 = vrot.slane %v2193, %v2200
        %v2203 = vunpack.c.l.s4 1983009808
        %v2204 = vunpack.c.0.s8 %v2203
        %v2205 = vlaneseq
        %v2206 = vshrl.u32 %v2205, 7
        %v2207 = vsub.s32 %v2204, %v2206
        %v2208 = vrot.slane %v2194, %v2207
        %v2209 = vcombine.low %v1971, %v1987
        %v2210 = vcombine.high %v1971, %v1987
        %v2212 = vunpack.c.l.s4 1983009808
        %v2213 = vunpack.c.0.s8 %v2212
        %v2214 = vlaneseq
        %v2215 = vshrl.u32 %v2214, 7
        %v2216 = vsub.s32 %v2213, %v2215
        %v2217 = vrot.slane %v2209, %v2216
        %v2219 = vunpack.c.l.s4 1983009808
        %v2220 = vunpack.c.0.s8 %v2219
        %v2221 = vlaneseq
        %v2222 = vshrl.u32 %v2221, 7
        %v2223 = vsub.s32 %v2220, %v2222
        %v2224 = vrot.slane %v2210, %v2223
        %v2225 = vcombine.low %v2201, %v2217
        %v2226 = vcombine.high %v2201, %v2217
        %v2228 = vunpack.c.l.s4 1934713408
        %v2229 = vunpack.c.0.s8 %v2228
        %v2230 = vlaneseq
        %v2231 = vshrl.u32 %v2230, 7
        %v2232 = vsub.s32 %v2229, %v2231
        %v2233 = vrot.slane %v2225, %v2232
        %v2235 = vunpack.c.l.s4 1934713408
        %v2236 = vunpack.c.0.s8 %v2235
        %v2237 = vlaneseq
        %v2238 = vshrl.u32 %v2237, 7
        %v2239 = vsub.s32 %v2236, %v2238
        %v2240 = vrot.slane %v2226, %v2239
        %v2241 = vcombine.low %v2208, %v2224
        %v2242 = vcombine.high %v2208, %v2224
        %v2244 = vunpack.c.l.s4 1934713408
        %v2245 = vunpack.c.0.s8 %v2244
        %v2246 = vlaneseq
        %v2247 = vshrl.u32 %v2246, 7
        %v2248 = vsub.s32 %v2245, %v2247
        %v2249 = vrot.slane %v2241, %v2248
        %v2251 = vunpack.c.l.s4 1934713408
        %v2252 = vunpack.c.0.s8 %v2251
        %v2253 = vlaneseq
        %v2254 = vshrl.u32 %v2253, 7
        %v2255 = vsub.s32 %v2252, %v2254
        %v2256 = vrot.slane %v2242, %v2255
        %v2257 = vcombine.high %v2233, 0
        %v2258 = vcombine.high %v2240, 0
        %v2259 = vcombine.high %v2249, 0
        %v2260 = vcombine.high %v2256, 0
        %2261 = vxpose.xlu0.c.b16.start [1/8] %v2029, 128
        %2262 = vxpose.xlu0.c.b16.cont [2/8] 0, 128
        %2263 = vxpose.xlu0.c.b16.cont [3/8] 0, 128
        %2264 = vxpose.xlu0.c.b16.cont [4/8] 0, 128
        %2265 = vxpose.xlu0.c.b16.cont [5/8] 0, 128
        %2266 = vxpose.xlu0.c.b16.cont [6/8] 0, 128
        %2267 = vxpose.xlu0.c.b16.cont [7/8] 0, 128
        %2268 = vxpose.xlu0.c.b16.end [8/8] 0, 128
        %v2269 = vpop.trf.xlu0
        %v2270 = vpop.trf.xlu0
        %v2271 = vpop.trf.xlu0
        %v2272 = vpop.trf.xlu0
        %v2273 = vpop.trf.xlu0
        %v2274 = vpop.trf.xlu0
        %v2275 = vpop.trf.xlu0
        %v2276 = vpop.trf.xlu0
        %2277 = vxpose.xlu0.c.b16.start [1/8] %v2097, 128
        %2278 = vxpose.xlu0.c.b16.cont [2/8] 0, 128
        %2279 = vxpose.xlu0.c.b16.cont [3/8] 0, 128
        %2280 = vxpose.xlu0.c.b16.cont [4/8] 0, 128
        %2281 = vxpose.xlu0.c.b16.cont [5/8] 0, 128
        %2282 = vxpose.xlu0.c.b16.cont [6/8] 0, 128
        %2283 = vxpose.xlu0.c.b16.cont [7/8] 0, 128
        %2284 = vxpose.xlu0.c.b16.end [8/8] 0, 128
        %v2285 = vpop.trf.xlu0
        %v2286 = vpop.trf.xlu0
        %v2287 = vpop.trf.xlu0
        %v2288 = vpop.trf.xlu0
        %v2289 = vpop.trf.xlu0
        %v2290 = vpop.trf.xlu0
        %v2291 = vpop.trf.xlu0
        %v2292 = vpop.trf.xlu0
        %2293 = vxpose.xlu0.c.b16.start [1/8] %v2053, 128
        %2294 = vxpose.xlu0.c.b16.cont [2/8] 0, 128
        %2295 = vxpose.xlu0.c.b16.cont [3/8] 0, 128
        %2296 = vxpose.xlu0.c.b16.cont [4/8] 0, 128
        %2297 = vxpose.xlu0.c.b16.cont [5/8] 0, 128
        %2298 = vxpose.xlu0.c.b16.cont [6/8] 0, 128
        %2299 = vxpose.xlu0.c.b16.cont [7/8] 0, 128
        %2300 = vxpose.xlu0.c.b16.end [8/8] 0, 128
        %v2301 = vpop.trf.xlu0
        %v2302 = vpop.trf.xlu0
        %v2303 = vpop.trf.xlu0
        %v2304 = vpop.trf.xlu0
        %v2305 = vpop.trf.xlu0
        %v2306 = vpop.trf.xlu0
        %v2307 = vpop.trf.xlu0
        %v2308 = vpop.trf.xlu0
        %2309 = vxpose.xlu0.c.b16.start [1/8] %v2121, 128
        %2310 = vxpose.xlu0.c.b16.cont [2/8] 0, 128
        %2311 = vxpose.xlu0.c.b16.cont [3/8] 0, 128
        %2312 = vxpose.xlu0.c.b16.cont [4/8] 0, 128
        %2313 = vxpose.xlu0.c.b16.cont [5/8] 0, 128
        %2314 = vxpose.xlu0.c.b16.cont [6/8] 0, 128
        %2315 = vxpose.xlu0.c.b16.cont [7/8] 0, 128
        %2316 = vxpose.xlu0.c.b16.end [8/8] 0, 128
        %v2317 = vpop.trf.xlu0
        %v2318 = vpop.trf.xlu0
        %v2319 = vpop.trf.xlu0
        %v2320 = vpop.trf.xlu0
        %v2321 = vpop.trf.xlu0
        %v2322 = vpop.trf.xlu0
        %v2323 = vpop.trf.xlu0
        %v2324 = vpop.trf.xlu0
        %2325 = vxpose.xlu0.c.b16.start [1/8] %v2036, 128
        %2326 = vxpose.xlu0.c.b16.cont [2/8] 0, 128
        %2327 = vxpose.xlu0.c.b16.cont [3/8] 0, 128
        %2328 = vxpose.xlu0.c.b16.cont [4/8] 0, 128
        %2329 = vxpose.xlu0.c.b16.cont [5/8] 0, 128
        %2330 = vxpose.xlu0.c.b16.cont [6/8] 0, 128
        %2331 = vxpose.xlu0.c.b16.cont [7/8] 0, 128
        %2332 = vxpose.xlu0.c.b16.end [8/8] 0, 128
        %v2333 = vpop.trf.xlu0
        %v2334 = vpop.trf.xlu0
        %v2335 = vpop.trf.xlu0
        %v2336 = vpop.trf.xlu0
        %v2337 = vpop.trf.xlu0
        %v2338 = vpop.trf.xlu0
        %v2339 = vpop.trf.xlu0
        %v2340 = vpop.trf.xlu0
        %2341 = vxpose.xlu0.c.b16.start [1/8] %v2104, 128
        %2342 = vxpose.xlu0.c.b16.cont [2/8] 0, 128
        %2343 = vxpose.xlu0.c.b16.cont [3/8] 0, 128
        %2344 = vxpose.xlu0.c.b16.cont [4/8] 0, 128
        %2345 = vxpose.xlu0.c.b16.cont [5/8] 0, 128
        %2346 = vxpose.xlu0.c.b16.cont [6/8] 0, 128
        %2347 = vxpose.xlu0.c.b16.cont [7/8] 0, 128
        %2348 = vxpose.xlu0.c.b16.end [8/8] 0, 128
        %v2349 = vpop.trf.xlu0
        %v2350 = vpop.trf.xlu0
        %v2351 = vpop.trf.xlu0
        %v2352 = vpop.trf.xlu0
        %v2353 = vpop.trf.xlu0
        %v2354 = vpop.trf.xlu0
        %v2355 = vpop.trf.xlu0
        %v2356 = vpop.trf.xlu0
        %2357 = vxpose.xlu0.c.b16.start [1/8] %v2054, 128
        %2358 = vxpose.xlu0.c.b16.cont [2/8] 0, 128
        %2359 = vxpose.xlu0.c.b16.cont [3/8] 0, 128
        %2360 = vxpose.xlu0.c.b16.cont [4/8] 0, 128
        %2361 = vxpose.xlu0.c.b16.cont [5/8] 0, 128
        %2362 = vxpose.xlu0.c.b16.cont [6/8] 0, 128
        %2363 = vxpose.xlu0.c.b16.cont [7/8] 0, 128
        %2364 = vxpose.xlu0.c.b16.end [8/8] 0, 128
        %v2365 = vpop.trf.xlu0
        %v2366 = vpop.trf.xlu0
        %v2367 = vpop.trf.xlu0
        %v2368 = vpop.trf.xlu0
        %v2369 = vpop.trf.xlu0
        %v2370 = vpop.trf.xlu0
        %v2371 = vpop.trf.xlu0
        %v2372 = vpop.trf.xlu0
        %2373 = vxpose.xlu0.c.b16.start [1/8] %v2122, 128
        %2374 = vxpose.xlu0.c.b16.cont [2/8] 0, 128
        %2375 = vxpose.xlu0.c.b16.cont [3/8] 0, 128
        %2376 = vxpose.xlu0.c.b16.cont [4/8] 0, 128
        %2377 = vxpose.xlu0.c.b16.cont [5/8] 0, 128
        %2378 = vxpose.xlu0.c.b16.cont [6/8] 0, 128
        %2379 = vxpose.xlu0.c.b16.cont [7/8] 0, 128
        %2380 = vxpose.xlu0.c.b16.end [8/8] 0, 128
        %v2381 = vpop.trf.xlu0
        %v2382 = vpop.trf.xlu0
        %v2383 = vpop.trf.xlu0
        %v2384 = vpop.trf.xlu0
        %v2385 = vpop.trf.xlu0
        %v2386 = vpop.trf.xlu0
        %v2387 = vpop.trf.xlu0
        %v2388 = vpop.trf.xlu0
        %2389 = vxpose.xlu0.c.b16.start [1/8] %v2045, 128
        %2390 = vxpose.xlu0.c.b16.cont [2/8] 0, 128
        %2391 = vxpose.xlu0.c.b16.cont [3/8] 0, 128
        %2392 = vxpose.xlu0.c.b16.cont [4/8] 0, 128
        %2393 = vxpose.xlu0.c.b16.cont [5/8] 0, 128
        %2394 = vxpose.xlu0.c.b16.cont [6/8] 0, 128
        %2395 = vxpose.xlu0.c.b16.cont [7/8] 0, 128
        %2396 = vxpose.xlu0.c.b16.end [8/8] 0, 128
        %v2397 = vpop.trf.xlu0
        %v2398 = vpop.trf.xlu0
        %v2399 = vpop.trf.xlu0
        %v2400 = vpop.trf.xlu0
        %v2401 = vpop.trf.xlu0
        %v2402 = vpop.trf.xlu0
        %v2403 = vpop.trf.xlu0
        %v2404 = vpop.trf.xlu0
        %2405 = vxpose.xlu0.c.b16.start [1/8] %v2113, 128
        %2406 = vxpose.xlu0.c.b16.cont [2/8] 0, 128
        %2407 = vxpose.xlu0.c.b16.cont [3/8] 0, 128
        %2408 = vxpose.xlu0.c.b16.cont [4/8] 0, 128
        %2409 = vxpose.xlu0.c.b16.cont [5/8] 0, 128
        %2410 = vxpose.xlu0.c.b16.cont [6/8] 0, 128
        %2411 = vxpose.xlu0.c.b16.cont [7/8] 0, 128
        %2412 = vxpose.xlu0.c.b16.end [8/8] 0, 128
        %v2413 = vpop.trf.xlu0
        %v2414 = vpop.trf.xlu0
        %v2415 = vpop.trf.xlu0
        %v2416 = vpop.trf.xlu0
        %v2417 = vpop.trf.xlu0
        %v2418 = vpop.trf.xlu0
        %v2419 = vpop.trf.xlu0
        %v2420 = vpop.trf.xlu0
        %2421 = vxpose.xlu0.c.b16.start [1/8] %v2055, 128
        %2422 = vxpose.xlu0.c.b16.cont [2/8] 0, 128
        %2423 = vxpose.xlu0.c.b16.cont [3/8] 0, 128
        %2424 = vxpose.xlu0.c.b16.cont [4/8] 0, 128
        %2425 = vxpose.xlu0.c.b16.cont [5/8] 0, 128
        %2426 = vxpose.xlu0.c.b16.cont [6/8] 0, 128
        %2427 = vxpose.xlu0.c.b16.cont [7/8] 0, 128
        %2428 = vxpose.xlu0.c.b16.end [8/8] 0, 128
        %v2429 = vpop.trf.xlu0
        %v2430 = vpop.trf.xlu0
        %v2431 = vpop.trf.xlu0
        %v2432 = vpop.trf.xlu0
        %v2433 = vpop.trf.xlu0
        %v2434 = vpop.trf.xlu0
        %v2435 = vpop.trf.xlu0
        %v2436 = vpop.trf.xlu0
        %2437 = vxpose.xlu0.c.b16.start [1/8] %v2123, 128
        %2438 = vxpose.xlu0.c.b16.cont [2/8] 0, 128
        %2439 = vxpose.xlu0.c.b16.cont [3/8] 0, 128
        %2440 = vxpose.xlu0.c.b16.cont [4/8] 0, 128
        %2441 = vxpose.xlu0.c.b16.cont [5/8] 0, 128
        %2442 = vxpose.xlu0.c.b16.cont [6/8] 0, 128
        %2443 = vxpose.xlu0.c.b16.cont [7/8] 0, 128
        %2444 = vxpose.xlu0.c.b16.end [8/8] 0, 128
        %v2445 = vpop.trf.xlu0
        %v2446 = vpop.trf.xlu0
        %v2447 = vpop.trf.xlu0
        %v2448 = vpop.trf.xlu0
        %v2449 = vpop.trf.xlu0
        %v2450 = vpop.trf.xlu0
        %v2451 = vpop.trf.xlu0
        %v2452 = vpop.trf.xlu0
        %2453 = vxpose.xlu0.c.b16.start [1/8] %v2052, 128
        %2454 = vxpose.xlu0.c.b16.cont [2/8] 0, 128
        %2455 = vxpose.xlu0.c.b16.cont [3/8] 0, 128
        %2456 = vxpose.xlu0.c.b16.cont [4/8] 0, 128
        %2457 = vxpose.xlu0.c.b16.cont [5/8] 0, 128
        %2458 = vxpose.xlu0.c.b16.cont [6/8] 0, 128
        %2459 = vxpose.xlu0.c.b16.cont [7/8] 0, 128
        %2460 = vxpose.xlu0.c.b16.end [8/8] 0, 128
        %v2461 = vpop.trf.xlu0
        %v2462 = vpop.trf.xlu0
        %v2463 = vpop.trf.xlu0
        %v2464 = vpop.trf.xlu0
        %v2465 = vpop.trf.xlu0
        %v2466 = vpop.trf.xlu0
        %v2467 = vpop.trf.xlu0
        %v2468 = vpop.trf.xlu0
        %2469 = vxpose.xlu0.c.b16.start [1/8] %v2120, 128
        %2470 = vxpose.xlu0.c.b16.cont [2/8] 0, 128
        %2471 = vxpose.xlu0.c.b16.cont [3/8] 0, 128
        %2472 = vxpose.xlu0.c.b16.cont [4/8] 0, 128
        %2473 = vxpose.xlu0.c.b16.cont [5/8] 0, 128
        %2474 = vxpose.xlu0.c.b16.cont [6/8] 0, 128
        %2475 = vxpose.xlu0.c.b16.cont [7/8] 0, 128
        %2476 = vxpose.xlu0.c.b16.end [8/8] 0, 128
        %v2477 = vpop.trf.xlu0
        %v2478 = vpop.trf.xlu0
        %v2479 = vpop.trf.xlu0
        %v2480 = vpop.trf.xlu0
        %v2481 = vpop.trf.xlu0
        %v2482 = vpop.trf.xlu0
        %v2483 = vpop.trf.xlu0
        %v2484 = vpop.trf.xlu0
        %2485 = vxpose.xlu0.c.b16.start [1/8] %v2056, 128
        %2486 = vxpose.xlu0.c.b16.cont [2/8] 0, 128
        %2487 = vxpose.xlu0.c.b16.cont [3/8] 0, 128
        %2488 = vxpose.xlu0.c.b16.cont [4/8] 0, 128
        %2489 = vxpose.xlu0.c.b16.cont [5/8] 0, 128
        %2490 = vxpose.xlu0.c.b16.cont [6/8] 0, 128
        %2491 = vxpose.xlu0.c.b16.cont [7/8] 0, 128
        %2492 = vxpose.xlu0.c.b16.end [8/8] 0, 128
        %v2493 = vpop.trf.xlu0
        %v2494 = vpop.trf.xlu0
        %v2495 = vpop.trf.xlu0
        %v2496 = vpop.trf.xlu0
        %v2497 = vpop.trf.xlu0
        %v2498 = vpop.trf.xlu0
        %v2499 = vpop.trf.xlu0
        %v2500 = vpop.trf.xlu0
        %2501 = vxpose.xlu0.c.b16.start [1/8] %v2124, 128
        %2502 = vxpose.xlu0.c.b16.cont [2/8] 0, 128
        %2503 = vxpose.xlu0.c.b16.cont [3/8] 0, 128
        %2504 = vxpose.xlu0.c.b16.cont [4/8] 0, 128
        %2505 = vxpose.xlu0.c.b16.cont [5/8] 0, 128
        %2506 = vxpose.xlu0.c.b16.cont [6/8] 0, 128
        %2507 = vxpose.xlu0.c.b16.cont [7/8] 0, 128
        %2508 = vxpose.xlu0.c.b16.end [8/8] 0, 128
        %v2509 = vpop.trf.xlu0
        %v2510 = vpop.trf.xlu0
        %v2511 = vpop.trf.xlu0
        %v2512 = vpop.trf.xlu0
        %v2513 = vpop.trf.xlu0
        %v2514 = vpop.trf.xlu0
        %v2515 = vpop.trf.xlu0
        %v2516 = vpop.trf.xlu0
        %2517 = vxpose.xlu0.c.b16.start [1/8] %v2165, 128
        %2518 = vxpose.xlu0.c.b16.cont [2/8] 0, 128
        %2519 = vxpose.xlu0.c.b16.cont [3/8] 0, 128
        %2520 = vxpose.xlu0.c.b16.cont [4/8] 0, 128
        %2521 = vxpose.xlu0.c.b16.cont [5/8] 0, 128
        %2522 = vxpose.xlu0.c.b16.cont [6/8] 0, 128
        %2523 = vxpose.xlu0.c.b16.cont [7/8] 0, 128
        %2524 = vxpose.xlu0.c.b16.end [8/8] 0, 128
        %v2525 = vpop.trf.xlu0
        %v2526 = vpop.trf.xlu0
        %v2527 = vpop.trf.xlu0
        %v2528 = vpop.trf.xlu0
        %v2529 = vpop.trf.xlu0
        %v2530 = vpop.trf.xlu0
        %v2531 = vpop.trf.xlu0
        %v2532 = vpop.trf.xlu0
        %2533 = vxpose.xlu0.c.b16.start [1/8] %v2233, 128
        %2534 = vxpose.xlu0.c.b16.cont [2/8] 0, 128
        %2535 = vxpose.xlu0.c.b16.cont [3/8] 0, 128
        %2536 = vxpose.xlu0.c.b16.cont [4/8] 0, 128
        %2537 = vxpose.xlu0.c.b16.cont [5/8] 0, 128
        %2538 = vxpose.xlu0.c.b16.cont [6/8] 0, 128
        %2539 = vxpose.xlu0.c.b16.cont [7/8] 0, 128
        %2540 = vxpose.xlu0.c.b16.end [8/8] 0, 128
        %v2541 = vpop.trf.xlu0
        %v2542 = vpop.trf.xlu0
        %v2543 = vpop.trf.xlu0
        %v2544 = vpop.trf.xlu0
        %v2545 = vpop.trf.xlu0
        %v2546 = vpop.trf.xlu0
        %v2547 = vpop.trf.xlu0
        %v2548 = vpop.trf.xlu0
        %2549 = vxpose.xlu0.c.b16.start [1/8] %v2189, 128
        %2550 = vxpose.xlu0.c.b16.cont [2/8] 0, 128
        %2551 = vxpose.xlu0.c.b16.cont [3/8] 0, 128
        %2552 = vxpose.xlu0.c.b16.cont [4/8] 0, 128
        %2553 = vxpose.xlu0.c.b16.cont [5/8] 0, 128
        %2554 = vxpose.xlu0.c.b16.cont [6/8] 0, 128
        %2555 = vxpose.xlu0.c.b16.cont [7/8] 0, 128
        %2556 = vxpose.xlu0.c.b16.end [8/8] 0, 128
        %v2557 = vpop.trf.xlu0
        %v2558 = vpop.trf.xlu0
        %v2559 = vpop.trf.xlu0
        %v2560 = vpop.trf.xlu0
        %v2561 = vpop.trf.xlu0
        %v2562 = vpop.trf.xlu0
        %v2563 = vpop.trf.xlu0
        %v2564 = vpop.trf.xlu0
        %2565 = vxpose.xlu0.c.b16.start [1/8] %v2257, 128
        %2566 = vxpose.xlu0.c.b16.cont [2/8] 0, 128
        %2567 = vxpose.xlu0.c.b16.cont [3/8] 0, 128
        %2568 = vxpose.xlu0.c.b16.cont [4/8] 0, 128
        %2569 = vxpose.xlu0.c.b16.cont [5/8] 0, 128
        %2570 = vxpose.xlu0.c.b16.cont [6/8] 0, 128
        %2571 = vxpose.xlu0.c.b16.cont [7/8] 0, 128
        %2572 = vxpose.xlu0.c.b16.end [8/8] 0, 128
        %v2573 = vpop.trf.xlu0
        %v2574 = vpop.trf.xlu0
        %v2575 = vpop.trf.xlu0
        %v2576 = vpop.trf.xlu0
        %v2577 = vpop.trf.xlu0
        %v2578 = vpop.trf.xlu0
        %v2579 = vpop.trf.xlu0
        %v2580 = vpop.trf.xlu0
        %2581 = vxpose.xlu0.c.b16.start [1/8] %v2172, 128
        %2582 = vxpose.xlu0.c.b16.cont [2/8] 0, 128
        %2583 = vxpose.xlu0.c.b16.cont [3/8] 0, 128
        %2584 = vxpose.xlu0.c.b16.cont [4/8] 0, 128
        %2585 = vxpose.xlu0.c.b16.cont [5/8] 0, 128
        %2586 = vxpose.xlu0.c.b16.cont [6/8] 0, 128
        %2587 = vxpose.xlu0.c.b16.cont [7/8] 0, 128
        %2588 = vxpose.xlu0.c.b16.end [8/8] 0, 128
        %v2589 = vpop.trf.xlu0
        %v2590 = vpop.trf.xlu0
        %v2591 = vpop.trf.xlu0
        %v2592 = vpop.trf.xlu0
        %v2593 = vpop.trf.xlu0
        %v2594 = vpop.trf.xlu0
        %v2595 = vpop.trf.xlu0
        %v2596 = vpop.trf.xlu0
        %2597 = vxpose.xlu0.c.b16.start [1/8] %v2240, 128
        %2598 = vxpose.xlu0.c.b16.cont [2/8] 0, 128
        %2599 = vxpose.xlu0.c.b16.cont [3/8] 0, 128
        %2600 = vxpose.xlu0.c.b16.cont [4/8] 0, 128
        %2601 = vxpose.xlu0.c.b16.cont [5/8] 0, 128
        %2602 = vxpose.xlu0.c.b16.cont [6/8] 0, 128
        %2603 = vxpose.xlu0.c.b16.cont [7/8] 0, 128
        %2604 = vxpose.xlu0.c.b16.end [8/8] 0, 128
        %v2605 = vpop.trf.xlu0
        %v2606 = vpop.trf.xlu0
        %v2607 = vpop.trf.xlu0
        %v2608 = vpop.trf.xlu0
        %v2609 = vpop.trf.xlu0
        %v2610 = vpop.trf.xlu0
        %v2611 = vpop.trf.xlu0
        %v2612 = vpop.trf.xlu0
        %2613 = vxpose.xlu0.c.b16.start [1/8] %v2190, 128
        %2614 = vxpose.xlu0.c.b16.cont [2/8] 0, 128
        %2615 = vxpose.xlu0.c.b16.cont [3/8] 0, 128
        %2616 = vxpose.xlu0.c.b16.cont [4/8] 0, 128
        %2617 = vxpose.xlu0.c.b16.cont [5/8] 0, 128
        %2618 = vxpose.xlu0.c.b16.cont [6/8] 0, 128
        %2619 = vxpose.xlu0.c.b16.cont [7/8] 0, 128
        %2620 = vxpose.xlu0.c.b16.end [8/8] 0, 128
        %v2621 = vpop.trf.xlu0
        %v2622 = vpop.trf.xlu0
        %v2623 = vpop.trf.xlu0
        %v2624 = vpop.trf.xlu0
        %v2625 = vpop.trf.xlu0
        %v2626 = vpop.trf.xlu0
        %v2627 = vpop.trf.xlu0
        %v2628 = vpop.trf.xlu0
        %2629 = vxpose.xlu0.c.b16.start [1/8] %v2258, 128
        %2630 = vxpose.xlu0.c.b16.cont [2/8] 0, 128
        %2631 = vxpose.xlu0.c.b16.cont [3/8] 0, 128
        %2632 = vxpose.xlu0.c.b16.cont [4/8] 0, 128
        %2633 = vxpose.xlu0.c.b16.cont [5/8] 0, 128
        %2634 = vxpose.xlu0.c.b16.cont [6/8] 0, 128
        %2635 = vxpose.xlu0.c.b16.cont [7/8] 0, 128
        %2636 = vxpose.xlu0.c.b16.end [8/8] 0, 128
        %v2637 = vpop.trf.xlu0
        %v2638 = vpop.trf.xlu0
        %v2639 = vpop.trf.xlu0
        %v2640 = vpop.trf.xlu0
        %v2641 = vpop.trf.xlu0
        %v2642 = vpop.trf.xlu0
        %v2643 = vpop.trf.xlu0
        %v2644 = vpop.trf.xlu0
        %2645 = vxpose.xlu0.c.b16.start [1/8] %v2181, 128
        %2646 = vxpose.xlu0.c.b16.cont [2/8] 0, 128
        %2647 = vxpose.xlu0.c.b16.cont [3/8] 0, 128
        %2648 = vxpose.xlu0.c.b16.cont [4/8] 0, 128
        %2649 = vxpose.xlu0.c.b16.cont [5/8] 0, 128
        %2650 = vxpose.xlu0.c.b16.cont [6/8] 0, 128
        %2651 = vxpose.xlu0.c.b16.cont [7/8] 0, 128
        %2652 = vxpose.xlu0.c.b16.end [8/8] 0, 128
        %v2653 = vpop.trf.xlu0
        %v2654 = vpop.trf.xlu0
        %v2655 = vpop.trf.xlu0
        %v2656 = vpop.trf.xlu0
        %v2657 = vpop.trf.xlu0
        %v2658 = vpop.trf.xlu0
        %v2659 = vpop.trf.xlu0
        %v2660 = vpop.trf.xlu0
        %2661 = vxpose.xlu0.c.b16.start [1/8] %v2249, 128
        %2662 = vxpose.xlu0.c.b16.cont [2/8] 0, 128
        %2663 = vxpose.xlu0.c.b16.cont [3/8] 0, 128
        %2664 = vxpose.xlu0.c.b16.cont [4/8] 0, 128
        %2665 = vxpose.xlu0.c.b16.cont [5/8] 0, 128
        %2666 = vxpose.xlu0.c.b16.cont [6/8] 0, 128
        %2667 = vxpose.xlu0.c.b16.cont [7/8] 0, 128
        %2668 = vxpose.xlu0.c.b16.end [8/8] 0, 128
        %v2669 = vpop.trf.xlu0
        %v2670 = vpop.trf.xlu0
        %v2671 = vpop.trf.xlu0
        %v2672 = vpop.trf.xlu0
        %v2673 = vpop.trf.xlu0
        %v2674 = vpop.trf.xlu0
        %v2675 = vpop.trf.xlu0
        %v2676 = vpop.trf.xlu0
        %2677 = vxpose.xlu0.c.b16.start [1/8] %v2191, 128
        %2678 = vxpose.xlu0.c.b16.cont [2/8] 0, 128
        %2679 = vxpose.xlu0.c.b16.cont [3/8] 0, 128
        %2680 = vxpose.xlu0.c.b16.cont [4/8] 0, 128
        %2681 = vxpose.xlu0.c.b16.cont [5/8] 0, 128
        %2682 = vxpose.xlu0.c.b16.cont [6/8] 0, 128
        %2683 = vxpose.xlu0.c.b16.cont [7/8] 0, 128
        %2684 = vxpose.xlu0.c.b16.end [8/8] 0, 128
        %v2685 = vpop.trf.xlu0
        %v2686 = vpop.trf.xlu0
        %v2687 = vpop.trf.xlu0
        %v2688 = vpop.trf.xlu0
        %v2689 = vpop.trf.xlu0
        %v2690 = vpop.trf.xlu0
        %v2691 = vpop.trf.xlu0
        %v2692 = vpop.trf.xlu0
        %2693 = vxpose.xlu0.c.b16.start [1/8] %v2259, 128
        %2694 = vxpose.xlu0.c.b16.cont [2/8] 0, 128
        %2695 = vxpose.xlu0.c.b16.cont [3/8] 0, 128
        %2696 = vxpose.xlu0.c.b16.cont [4/8] 0, 128
        %2697 = vxpose.xlu0.c.b16.cont [5/8] 0, 128
        %2698 = vxpose.xlu0.c.b16.cont [6/8] 0, 128
        %2699 = vxpose.xlu0.c.b16.cont [7/8] 0, 128
        %2700 = vxpose.xlu0.c.b16.end [8/8] 0, 128
        %v2701 = vpop.trf.xlu0
        %v2702 = vpop.trf.xlu0
        %v2703 = vpop.trf.xlu0
        %v2704 = vpop.trf.xlu0
        %v2705 = vpop.trf.xlu0
        %v2706 = vpop.trf.xlu0
        %v2707 = vpop.trf.xlu0
        %v2708 = vpop.trf.xlu0
        %2709 = vxpose.xlu0.c.b16.start [1/8] %v2188, 128
        %2710 = vxpose.xlu0.c.b16.cont [2/8] 0, 128
        %2711 = vxpose.xlu0.c.b16.cont [3/8] 0, 128
        %2712 = vxpose.xlu0.c.b16.cont [4/8] 0, 128
        %2713 = vxpose.xlu0.c.b16.cont [5/8] 0, 128
        %2714 = vxpose.xlu0.c.b16.cont [6/8] 0, 128
        %2715 = vxpose.xlu0.c.b16.cont [7/8] 0, 128
        %2716 = vxpose.xlu0.c.b16.end [8/8] 0, 128
        %v2717 = vpop.trf.xlu0
        %v2718 = vpop.trf.xlu0
        %v2719 = vpop.trf.xlu0
        %v2720 = vpop.trf.xlu0
        %v2721 = vpop.trf.xlu0
        %v2722 = vpop.trf.xlu0
        %v2723 = vpop.trf.xlu0
        %v2724 = vpop.trf.xlu0
        %2725 = vxpose.xlu0.c.b16.start [1/8] %v2256, 128
        %2726 = vxpose.xlu0.c.b16.cont [2/8] 0, 128
        %2727 = vxpose.xlu0.c.b16.cont [3/8] 0, 128
        %2728 = vxpose.xlu0.c.b16.cont [4/8] 0, 128
        %2729 = vxpose.xlu0.c.b16.cont [5/8] 0, 128
        %2730 = vxpose.xlu0.c.b16.cont [6/8] 0, 128
        %2731 = vxpose.xlu0.c.b16.cont [7/8] 0, 128
        %2732 = vxpose.xlu0.c.b16.end [8/8] 0, 128
        %v2733 = vpop.trf.xlu0
        %v2734 = vpop.trf.xlu0
        %v2735 = vpop.trf.xlu0
        %v2736 = vpop.trf.xlu0
        %v2737 = vpop.trf.xlu0
        %v2738 = vpop.trf.xlu0
        %v2739 = vpop.trf.xlu0
        %v2740 = vpop.trf.xlu0
        %2741 = vxpose.xlu0.c.b16.start [1/8] %v2192, 128
        %2742 = vxpose.xlu0.c.b16.cont [2/8] 0, 128
        %2743 = vxpose.xlu0.c.b16.cont [3/8] 0, 128
        %2744 = vxpose.xlu0.c.b16.cont [4/8] 0, 128
        %2745 = vxpose.xlu0.c.b16.cont [5/8] 0, 128
        %2746 = vxpose.xlu0.c.b16.cont [6/8] 0, 128
        %2747 = vxpose.xlu0.c.b16.cont [7/8] 0, 128
        %2748 = vxpose.xlu0.c.b16.end [8/8] 0, 128
        %v2749 = vpop.trf.xlu0
        %v2750 = vpop.trf.xlu0
        %v2751 = vpop.trf.xlu0
        %v2752 = vpop.trf.xlu0
        %v2753 = vpop.trf.xlu0
        %v2754 = vpop.trf.xlu0
        %v2755 = vpop.trf.xlu0
        %v2756 = vpop.trf.xlu0
        %2757 = vxpose.xlu0.c.b16.start [1/8] %v2260, 128
        %2758 = vxpose.xlu0.c.b16.cont [2/8] 0, 128
        %2759 = vxpose.xlu0.c.b16.cont [3/8] 0, 128
        %2760 = vxpose.xlu0.c.b16.cont [4/8] 0, 128
        %2761 = vxpose.xlu0.c.b16.cont [5/8] 0, 128
        %2762 = vxpose.xlu0.c.b16.cont [6/8] 0, 128
        %2763 = vxpose.xlu0.c.b16.cont [7/8] 0, 128
        %2764 = vxpose.xlu0.c.b16.end [8/8] 0, 128
        %v2765 = vpop.trf.xlu0
        %v2766 = vpop.trf.xlu0
        %v2767 = vpop.trf.xlu0
        %v2768 = vpop.trf.xlu0
        %v2769 = vpop.trf.xlu0
        %v2770 = vpop.trf.xlu0
        %v2771 = vpop.trf.xlu0
        %v2772 = vpop.trf.xlu0
        %v2773 = vcombine.low %v2269, %v2333
        %v2775 = vunpack.c.l.s4 1983009808
        %v2776 = vunpack.c.0.s8 %v2775
        %v2777 = vlaneseq
        %v2778 = vshrl.u32 %v2777, 7
        %v2779 = vsub.s32 %v2776, %v2778
        %v2780 = vrot.slane %v2773, %v2779
        %v2781 = vcombine.low %v2301, %v2365
        %v2783 = vunpack.c.l.s4 1983009808
        %v2784 = vunpack.c.0.s8 %v2783
        %v2785 = vlaneseq
        %v2786 = vshrl.u32 %v2785, 7
        %v2787 = vsub.s32 %v2784, %v2786
        %v2788 = vrot.slane %v2781, %v2787
        %v2789 = vcombine.low %v2397, %v2461
        %v2791 = vunpack.c.l.s4 1983009808
        %v2792 = vunpack.c.0.s8 %v2791
        %v2793 = vlaneseq
        %v2794 = vshrl.u32 %v2793, 7
        %v2795 = vsub.s32 %v2792, %v2794
        %v2796 = vrot.slane %v2789, %v2795
        %v2797 = vcombine.low %v2429, %v2493
        %v2799 = vunpack.c.l.s4 1983009808
        %v2800 = vunpack.c.0.s8 %v2799
        %v2801 = vlaneseq
        %v2802 = vshrl.u32 %v2801, 7
        %v2803 = vsub.s32 %v2800, %v2802
        %v2804 = vrot.slane %v2797, %v2803
        %v2805 = vcombine.low %v2780, %v2788
        %v2807 = vunpack.c.l.s4 1934713408
        %v2808 = vunpack.c.0.s8 %v2807
        %v2809 = vlaneseq
        %v2810 = vshrl.u32 %v2809, 7
        %v2811 = vsub.s32 %v2808, %v2810
        %v2812 = vrot.slane %v2805, %v2811
        %v2813 = vcombine.low %v2796, %v2804
        %v2815 = vunpack.c.l.s4 1934713408
        %v2816 = vunpack.c.0.s8 %v2815
        %v2817 = vlaneseq
        %v2818 = vshrl.u32 %v2817, 7
        %v2819 = vsub.s32 %v2816, %v2818
        %v2820 = vrot.slane %v2813, %v2819
        %v2821 = vcombine.low %v2812, %v2820
        %v2822 = vcombine.high %v2812, %v2820
        %v2823 = vcombine.low %v2285, %v2349
        %v2825 = vunpack.c.l.s4 1983009808
        %v2826 = vunpack.c.0.s8 %v2825
        %v2827 = vlaneseq
        %v2828 = vshrl.u32 %v2827, 7
        %v2829 = vsub.s32 %v2826, %v2828
        %v2830 = vrot.slane %v2823, %v2829
        %v2831 = vcombine.low %v2317, %v2381
        %v2833 = vunpack.c.l.s4 1983009808
        %v2834 = vunpack.c.0.s8 %v2833
        %v2835 = vlaneseq
        %v2836 = vshrl.u32 %v2835, 7
        %v2837 = vsub.s32 %v2834, %v2836
        %v2838 = vrot.slane %v2831, %v2837
        %v2839 = vcombine.low %v2413, %v2477
        %v2841 = vunpack.c.l.s4 1983009808
        %v2842 = vunpack.c.0.s8 %v2841
        %v2843 = vlaneseq
        %v2844 = vshrl.u32 %v2843, 7
        %v2845 = vsub.s32 %v2842, %v2844
        %v2846 = vrot.slane %v2839, %v2845
        %v2847 = vcombine.low %v2445, %v2509
        %v2849 = vunpack.c.l.s4 1983009808
        %v2850 = vunpack.c.0.s8 %v2849
        %v2851 = vlaneseq
        %v2852 = vshrl.u32 %v2851, 7
        %v2853 = vsub.s32 %v2850, %v2852
        %v2854 = vrot.slane %v2847, %v2853
        %v2855 = vcombine.low %v2830, %v2838
        %v2857 = vunpack.c.l.s4 1934713408
        %v2858 = vunpack.c.0.s8 %v2857
        %v2859 = vlaneseq
        %v2860 = vshrl.u32 %v2859, 7
        %v2861 = vsub.s32 %v2858, %v2860
        %v2862 = vrot.slane %v2855, %v2861
        %v2863 = vcombine.low %v2846, %v2854
        %v2865 = vunpack.c.l.s4 1934713408
        %v2866 = vunpack.c.0.s8 %v2865
        %v2867 = vlaneseq
        %v2868 = vshrl.u32 %v2867, 7
        %v2869 = vsub.s32 %v2866, %v2868
        %v2870 = vrot.slane %v2863, %v2869
        %v2871 = vcombine.low %v2862, %v2870
        %v2872 = vcombine.high %v2862, %v2870
        %v2873 = vcombine.low %v2525, %v2589
        %v2875 = vunpack.c.l.s4 1983009808
        %v2876 = vunpack.c.0.s8 %v2875
        %v2877 = vlaneseq
        %v2878 = vshrl.u32 %v2877, 7
        %v2879 = vsub.s32 %v2876, %v2878
        %v2880 = vrot.slane %v2873, %v2879
        %v2881 = vcombine.low %v2557, %v2621
        %v2883 = vunpack.c.l.s4 1983009808
        %v2884 = vunpack.c.0.s8 %v2883
        %v2885 = vlaneseq
        %v2886 = vshrl.u32 %v2885, 7
        %v2887 = vsub.s32 %v2884, %v2886
        %v2888 = vrot.slane %v2881, %v2887
        %v2889 = vcombine.low %v2653, %v2717
        %v2891 = vunpack.c.l.s4 1983009808
        %v2892 = vunpack.c.0.s8 %v2891
        %v2893 = vlaneseq
        %v2894 = vshrl.u32 %v2893, 7
        %v2895 = vsub.s32 %v2892, %v2894
        %v2896 = vrot.slane %v2889, %v2895
        %v2897 = vcombine.low %v2685, %v2749
        %v2899 = vunpack.c.l.s4 1983009808
        %v2900 = vunpack.c.0.s8 %v2899
        %v2901 = vlaneseq
        %v2902 = vshrl.u32 %v2901, 7
        %v2903 = vsub.s32 %v2900, %v2902
        %v2904 = vrot.slane %v2897, %v2903
        %v2905 = vcombine.low %v2880, %v2888
        %v2907 = vunpack.c.l.s4 1934713408
        %v2908 = vunpack.c.0.s8 %v2907
        %v2909 = vlaneseq
        %v2910 = vshrl.u32 %v2909, 7
        %v2911 = vsub.s32 %v2908, %v2910
        %v2912 = vrot.slane %v2905, %v2911
        %v2913 = vcombine.low %v2896, %v2904
        %v2915 = vunpack.c.l.s4 1934713408
        %v2916 = vunpack.c.0.s8 %v2915
        %v2917 = vlaneseq
        %v2918 = vshrl.u32 %v2917, 7
        %v2919 = vsub.s32 %v2916, %v2918
        %v2920 = vrot.slane %v2913, %v2919
        %v2921 = vcombine.low %v2912, %v2920
        %v2922 = vcombine.high %v2912, %v2920
        %v2923 = vcombine.low %v2541, %v2605
        %v2925 = vunpack.c.l.s4 1983009808
        %v2926 = vunpack.c.0.s8 %v2925
        %v2927 = vlaneseq
        %v2928 = vshrl.u32 %v2927, 7
        %v2929 = vsub.s32 %v2926, %v2928
        %v2930 = vrot.slane %v2923, %v2929
        %v2931 = vcombine.low %v2573, %v2637
        %v2933 = vunpack.c.l.s4 1983009808
        %v2934 = vunpack.c.0.s8 %v2933
        %v2935 = vlaneseq
        %v2936 = vshrl.u32 %v2935, 7
        %v2937 = vsub.s32 %v2934, %v2936
        %v2938 = vrot.slane %v2931, %v2937
        %v2939 = vcombine.low %v2669, %v2733
        %v2941 = vunpack.c.l.s4 1983009808
        %v2942 = vunpack.c.0.s8 %v2941
        %v2943 = vlaneseq
        %v2944 = vshrl.u32 %v2943, 7
        %v2945 = vsub.s32 %v2942, %v2944
        %v2946 = vrot.slane %v2939, %v2945
        %v2947 = vcombine.low %v2701, %v2765
        %v2949 = vunpack.c.l.s4 1983009808
        %v2950 = vunpack.c.0.s8 %v2949
        %v2951 = vlaneseq
        %v2952 = vshrl.u32 %v2951, 7
        %v2953 = vsub.s32 %v2950, %v2952
        %v2954 = vrot.slane %v2947, %v2953
        %v2955 = vcombine.low %v2930, %v2938
        %v2957 = vunpack.c.l.s4 1934713408
        %v2958 = vunpack.c.0.s8 %v2957
        %v2959 = vlaneseq
        %v2960 = vshrl.u32 %v2959, 7
        %v2961 = vsub.s32 %v2958, %v2960
        %v2962 = vrot.slane %v2955, %v2961
        %v2963 = vcombine.low %v2946, %v2954
        %v2965 = vunpack.c.l.s4 1934713408
        %v2966 = vunpack.c.0.s8 %v2965
        %v2967 = vlaneseq
        %v2968 = vshrl.u32 %v2967, 7
        %v2969 = vsub.s32 %v2966, %v2968
        %v2970 = vrot.slane %v2963, %v2969
        %v2971 = vcombine.low %v2962, %v2970
        %v2972 = vcombine.high %v2962, %v2970
        %v2975 = vpack.i.b16 %v2871, %v2821
        %v2977 = vshrl.u32 %v2821, 16
        %v2978 = vshrl.u32 %v2871, 16
        %v2979 = vpack.i.b16 %v2978, %v2977
        %v2983 = vpack.i.b16 %v2872, %v2822
        %v2985 = vshrl.u32 %v2822, 16
        %v2986 = vshrl.u32 %v2872, 16
        %v2987 = vpack.i.b16 %v2986, %v2985
        %v2991 = vpack.i.b16 %v2971, %v2921
        %v2993 = vshrl.u32 %v2921, 16
        %v2994 = vshrl.u32 %v2971, 16
        %v2995 = vpack.i.b16 %v2994, %v2993
        %v2999 = vpack.i.b16 %v2972, %v2922
        %v3001 = vshrl.u32 %v2922, 16
        %v3002 = vshrl.u32 %v2972, 16
        %v3003 = vpack.i.b16 %v3002, %v3001
        %vm3005 = vcmask 261120
        %v3007 = vsel %vm3005, %v1787, 0
        %3009 = vmatprep.subr.bf16.mxu0 0
        %3010 = vmatpush1.bf16.msra.mxu0 %v2975
        %3011 = vmatprep.subr.bf16.mxu0 0
        %3012 = vmatpush1.bf16.msra.mxu0 %v2991
        %3013 = vmatprep.subr.bf16.mxu0 0
        %3014 = vmatpush1.bf16.msra.mxu0 0
        %3015 = vmatprep.subr.bf16.mxu0 0
        %3016 = vmatpush1.bf16.msra.mxu0 0
        %3017 = vmatprep.subr.bf16.mxu0 0
        %3018 = vmatpush1.bf16.msra.mxu0 0
        %3019 = vmatprep.subr.bf16.mxu0 0
        %3020 = vmatpush1.bf16.msra.mxu0 0
        %3021 = vmatprep.subr.bf16.mxu0 0
        %3022 = vmatpush1.bf16.msra.mxu0 0
        %3023 = vmatprep.subr.bf16.mxu0 0
        %3024 = vmatpush1.bf16.msra.mxu0 0
        %3025 = vmatprep.subr.bf16.mxu0 0
        %3026 = vmatpush1.bf16.msra.mxu0 0
        %3027 = vmatprep.subr.bf16.mxu0 0
        %3028 = vmatpush1.bf16.msra.mxu0 0
        %3029 = vmatprep.subr.bf16.mxu0 0
        %3030 = vmatpush1.bf16.msra.mxu0 0
        %3031 = vmatprep.subr.bf16.mxu0 0
        %3032 = vmatpush1.bf16.msra.mxu0 0
        %3033 = vmatprep.subr.bf16.mxu0 0
        %3034 = vmatpush1.bf16.msra.mxu0 0
        %3035 = vmatprep.subr.bf16.mxu0 0
        %3036 = vmatpush1.bf16.msra.mxu0 0
        %3037 = vmatprep.subr.bf16.mxu0 0
        %3038 = vmatpush1.bf16.msra.mxu0 0
        %3039 = vmatprep.subr.bf16.mxu0 0
        %3040 = vmatpush1.bf16.msra.mxu0 0
        %3041 = vmatprep.mubr.bf16.mxu0 0
        %3042 = vmatmul.mubr.bf16.gmra.mrb[0].mxu0 %v3007
        %v3043 = vpop.f32.mrb[0].mxu0
        %v3044 = vadd.f32 0.0, %v3043
        %v3045 = vpop.f32.mrb[0].mxu0
        %v3046 = vpop.f32.mrb[0].mxu0
        %v3047 = vpop.f32.mrb[0].mxu0
        %3048 = vdwg.mxu0
        %v3050 = vsel %vm3005, %v1790, 0
        %3052 = vmatprep.subr.bf16.mxu0 0
        %3053 = vmatpush1.bf16.msra.mxu0 %v2979
        %3054 = vmatprep.subr.bf16.mxu0 0
        %3055 = vmatpush1.bf16.msra.mxu0 %v2995
        %3056 = vmatprep.subr.bf16.mxu0 0
        %3057 = vmatpush1.bf16.msra.mxu0 0
        %3058 = vmatprep.subr.bf16.mxu0 0
        %3059 = vmatpush1.bf16.msra.mxu0 0
        %3060 = vmatprep.subr.bf16.mxu0 0
        %3061 = vmatpush1.bf16.msra.mxu0 0
        %3062 = vmatprep.subr.bf16.mxu0 0
        %3063 = vmatpush1.bf16.msra.mxu0 0
        %3064 = vmatprep.subr.bf16.mxu0 0
        %3065 = vmatpush1.bf16.msra.mxu0 0
        %3066 = vmatprep.subr.bf16.mxu0 0
        %3067 = vmatpush1.bf16.msra.mxu0 0
        %3068 = vmatprep.subr.bf16.mxu0 0
        %3069 = vmatpush1.bf16.msra.mxu0 0
        %3070 = vmatprep.subr.bf16.mxu0 0
        %3071 = vmatpush1.bf16.msra.mxu0 0
        %3072 = vmatprep.subr.bf16.mxu0 0
        %3073 = vmatpush1.bf16.msra.mxu0 0
        %3074 = vmatprep.subr.bf16.mxu0 0
        %3075 = vmatpush1.bf16.msra.mxu0 0
        %3076 = vmatprep.subr.bf16.mxu0 0
        %3077 = vmatpush1.bf16.msra.mxu0 0
        %3078 = vmatprep.subr.bf16.mxu0 0
        %3079 = vmatpush1.bf16.msra.mxu0 0
        %3080 = vmatprep.subr.bf16.mxu0 0
        %3081 = vmatpush1.bf16.msra.mxu0 0
        %3082 = vmatprep.subr.bf16.mxu0 0
        %3083 = vmatpush1.bf16.msra.mxu0 0
        %3084 = vmatprep.mubr.bf16.mxu0 0
        %3085 = vmatmul.mubr.bf16.gmra.mrb[0].mxu0 %v3050
        %v3086 = vpop.f32.mrb[0].mxu0
        %v3087 = vadd.f32 0.0, %v3086
        %v3088 = vpop.f32.mrb[0].mxu0
        %v3089 = vpop.f32.mrb[0].mxu0
        %v3090 = vpop.f32.mrb[0].mxu0
        %3091 = vdwg.mxu0
        %v3093 = vsel %vm3005, %v1793, 0
        %3095 = vmatprep.subr.bf16.mxu0 0
        %3096 = vmatpush1.bf16.msra.mxu0 %v2983
        %3097 = vmatprep.subr.bf16.mxu0 0
        %3098 = vmatpush1.bf16.msra.mxu0 %v2999
        %3099 = vmatprep.subr.bf16.mxu0 0
        %3100 = vmatpush1.bf16.msra.mxu0 0
        %3101 = vmatprep.subr.bf16.mxu0 0
        %3102 = vmatpush1.bf16.msra.mxu0 0
        %3103 = vmatprep.subr.bf16.mxu0 0
        %3104 = vmatpush1.bf16.msra.mxu0 0
        %3105 = vmatprep.subr.bf16.mxu0 0
        %3106 = vmatpush1.bf16.msra.mxu0 0
        %3107 = vmatprep.subr.bf16.mxu0 0
        %3108 = vmatpush1.bf16.msra.mxu0 0
        %3109 = vmatprep.subr.bf16.mxu0 0
        %3110 = vmatpush1.bf16.msra.mxu0 0
        %3111 = vmatprep.subr.bf16.mxu0 0
        %3112 = vmatpush1.bf16.msra.mxu0 0
        %3113 = vmatprep.subr.bf16.mxu0 0
        %3114 = vmatpush1.bf16.msra.mxu0 0
        %3115 = vmatprep.subr.bf16.mxu0 0
        %3116 = vmatpush1.bf16.msra.mxu0 0
        %3117 = vmatprep.subr.bf16.mxu0 0
        %3118 = vmatpush1.bf16.msra.mxu0 0
        %3119 = vmatprep.subr.bf16.mxu0 0
        %3120 = vmatpush1.bf16.msra.mxu0 0
        %3121 = vmatprep.subr.bf16.mxu0 0
        %3122 = vmatpush1.bf16.msra.mxu0 0
        %3123 = vmatprep.subr.bf16.mxu0 0
        %3124 = vmatpush1.bf16.msra.mxu0 0
        %3125 = vmatprep.subr.bf16.mxu0 0
        %3126 = vmatpush1.bf16.msra.mxu0 0
        %3127 = vmatprep.mubr.bf16.mxu0 0
        %3128 = vmatmul.mubr.bf16.gmra.mrb[0].mxu0 %v3093
        %v3129 = vpop.f32.mrb[0].mxu0
        %v3130 = vadd.f32 0.0, %v3129
        %v3131 = vpop.f32.mrb[0].mxu0
        %v3132 = vpop.f32.mrb[0].mxu0
        %v3133 = vpop.f32.mrb[0].mxu0
        %3134 = vdwg.mxu0
        %v3136 = vsel %vm3005, %v1796, 0
        %3138 = vmatprep.subr.bf16.mxu0 0
        %3139 = vmatpush1.bf16.msra.mxu0 %v2987
        %3140 = vmatprep.subr.bf16.mxu0 0
        %3141 = vmatpush1.bf16.msra.mxu0 %v3003
        %3142 = vmatprep.subr.bf16.mxu0 0
        %3143 = vmatpush1.bf16.msra.mxu0 0
        %3144 = vmatprep.subr.bf16.mxu0 0
        %3145 = vmatpush1.bf16.msra.mxu0 0
        %3146 = vmatprep.subr.bf16.mxu0 0
        %3147 = vmatpush1.bf16.msra.mxu0 0
        %3148 = vmatprep.subr.bf16.mxu0 0
        %3149 = vmatpush1.bf16.msra.mxu0 0
        %3150 = vmatprep.subr.bf16.mxu0 0
        %3151 = vmatpush1.bf16.msra.mxu0 0
        %3152 = vmatprep.subr.bf16.mxu0 0
        %3153 = vmatpush1.bf16.msra.mxu0 0
        %3154 = vmatprep.subr.bf16.mxu0 0
        %3155 = vmatpush1.bf16.msra.mxu0 0
        %3156 = vmatprep.subr.bf16.mxu0 0
        %3157 = vmatpush1.bf16.msra.mxu0 0
        %3158 = vmatprep.subr.bf16.mxu0 0
        %3159 = vmatpush1.bf16.msra.mxu0 0
        %3160 = vmatprep.subr.bf16.mxu0 0
        %3161 = vmatpush1.bf16.msra.mxu0 0
        %3162 = vmatprep.subr.bf16.mxu0 0
        %3163 = vmatpush1.bf16.msra.mxu0 0
        %3164 = vmatprep.subr.bf16.mxu0 0
        %3165 = vmatpush1.bf16.msra.mxu0 0
        %3166 = vmatprep.subr.bf16.mxu0 0
        %3167 = vmatpush1.bf16.msra.mxu0 0
        %3168 = vmatprep.subr.bf16.mxu0 0
        %3169 = vmatpush1.bf16.msra.mxu0 0
        %3170 = vmatprep.mubr.bf16.mxu0 0
        %3171 = vmatmul.mubr.bf16.gmra.mrb[0].mxu0 %v3136
        %v3172 = vpop.f32.mrb[0].mxu0
        %v3173 = vadd.f32 0.0, %v3172
        %v3174 = vpop.f32.mrb[0].mxu0
        %v3175 = vpop.f32.mrb[0].mxu0
        %v3176 = vpop.f32.mrb[0].mxu0
        %3177 = vdwg.mxu0
        %vm3178 = vcmask 64512
        %v3179 = vsel %vm3178, %v3044, -inf
        %3180 = vmax.xlane.f32.xlu0 %v3179
        %v3181 = vpop.xlane.xlu0 %3180
        %v3182 = vsel %vm3178, %v3087, -inf
        %3183 = vmax.xlane.f32.xlu0 %v3182
        %v3184 = vpop.xlane.xlu0 %3183
        %v3185 = vsel %vm3178, %v3130, -inf
        %3186 = vmax.xlane.f32.xlu0 %v3185
        %v3187 = vpop.xlane.xlu0 %3186
        %v3188 = vsel %vm3178, %v3173, -inf
        %3189 = vmax.xlane.f32.xlu0 %v3188
        %v3190 = vpop.xlane.xlu0 %3189
        %v3191 = vsub.f32 %v3044, %v3181
        %v3192 = vsub.f32 %v3087, %v3184
        %v3193 = vsub.f32 %v3130, %v3187
        %v3194 = vsub.f32 %v3173, %v3190
        %v3195 = vmul.f32 %v3191, 1.442695
        %v3196 = vpow.pop %v3195
        %v3197 = vmul.f32 %v3192, 1.442695
        %v3198 = vpow.pop %v3197
        %v3199 = vmul.f32 %v3193, 1.442695
        %v3200 = vpow.pop %v3199
        %v3201 = vmul.f32 %v3194, 1.442695
        %v3202 = vpow.pop %v3201
        %v3203 = vsel %vm3178, %v3196, 0.0
        %3204 = vadd.xlane.f32.xlu0 %v3203
        %v3205 = vpop.xlane.xlu0 %3204
        %v3206 = vsel %vm3178, %v3198, 0.0
        %3207 = vadd.xlane.f32.xlu0 %v3206
        %v3208 = vpop.xlane.xlu0 %3207
        %v3209 = vsel %vm3178, %v3200, 0.0
        %3210 = vadd.xlane.f32.xlu0 %v3209
        %v3211 = vpop.xlane.xlu0 %3210
        %v3212 = vsel %vm3178, %v3202, 0.0
        %3213 = vadd.xlane.f32.xlu0 %v3212
        %v3214 = vpop.xlane.xlu0 %3213
        %v3215 = vrcp.pop %v3205
        %v3216 = vmul.f32 %v3196, %v3215
        %v3217 = vrcp.pop %v3208
        %v3218 = vmul.f32 %v3198, %v3217
        %v3219 = vrcp.pop %v3211
        %v3220 = vmul.f32 %v3200, %v3219
        %v3221 = vrcp.pop %v3214
        %v3222 = vmul.f32 %v3202, %v3221
        %v3223 = vpack.c.bf16 %v3216, %v3216
        %v3224 = vpack.c.bf16 %v3218, %v3218
        %v3225 = vpack.c.bf16 %v3220, %v3220
        %v3226 = vpack.c.bf16 %v3222, %v3222
        %3227 = vxpose.xlu0.c.b16.start [1/8] %v1727, 128
        %3228 = vxpose.xlu0.c.b16.cont [2/8] 0, 128
        %3229 = vxpose.xlu0.c.b16.cont [3/8] 0, 128
        %3230 = vxpose.xlu0.c.b16.cont [4/8] 0, 128
        %3231 = vxpose.xlu0.c.b16.cont [5/8] 0, 128
        %3232 = vxpose.xlu0.c.b16.cont [6/8] 0, 128
        %3233 = vxpose.xlu0.c.b16.cont [7/8] 0, 128
        %3234 = vxpose.xlu0.c.b16.end [8/8] 0, 128
        %v3235 = vpop.trf.xlu0
        %v3236 = vpop.trf.xlu0
        %v3237 = vpop.trf.xlu0
        %v3238 = vpop.trf.xlu0
        %v3239 = vpop.trf.xlu0
        %v3240 = vpop.trf.xlu0
        %v3241 = vpop.trf.xlu0
        %v3242 = vpop.trf.xlu0
        %3243 = vxpose.xlu0.c.b16.start [1/8] %v1728, 128
        %3244 = vxpose.xlu0.c.b16.cont [2/8] 0, 128
        %3245 = vxpose.xlu0.c.b16.cont [3/8] 0, 128
        %3246 = vxpose.xlu0.c.b16.cont [4/8] 0, 128
        %3247 = vxpose.xlu0.c.b16.cont [5/8] 0, 128
        %3248 = vxpose.xlu0.c.b16.cont [6/8] 0, 128
        %3249 = vxpose.xlu0.c.b16.cont [7/8] 0, 128
        %3250 = vxpose.xlu0.c.b16.end [8/8] 0, 128
        %v3251 = vpop.trf.xlu0
        %v3252 = vpop.trf.xlu0
        %v3253 = vpop.trf.xlu0
        %v3254 = vpop.trf.xlu0
        %v3255 = vpop.trf.xlu0
        %v3256 = vpop.trf.xlu0
        %v3257 = vpop.trf.xlu0
        %v3258 = vpop.trf.xlu0
        %3259 = vxpose.xlu0.c.b16.start [1/8] %v1729, 128
        %3260 = vxpose.xlu0.c.b16.cont [2/8] 0, 128
        %3261 = vxpose.xlu0.c.b16.cont [3/8] 0, 128
        %3262 = vxpose.xlu0.c.b16.cont [4/8] 0, 128
        %3263 = vxpose.xlu0.c.b16.cont [5/8] 0, 128
        %3264 = vxpose.xlu0.c.b16.cont [6/8] 0, 128
        %3265 = vxpose.xlu0.c.b16.cont [7/8] 0, 128
        %3266 = vxpose.xlu0.c.b16.end [8/8] 0, 128
        %v3267 = vpop.trf.xlu0
        %v3268 = vpop.trf.xlu0
        %v3269 = vpop.trf.xlu0
        %v3270 = vpop.trf.xlu0
        %v3271 = vpop.trf.xlu0
        %v3272 = vpop.trf.xlu0
        %v3273 = vpop.trf.xlu0
        %v3274 = vpop.trf.xlu0
        %3275 = vxpose.xlu0.c.b16.start [1/8] %v1730, 128
        %3276 = vxpose.xlu0.c.b16.cont [2/8] 0, 128
        %3277 = vxpose.xlu0.c.b16.cont [3/8] 0, 128
        %3278 = vxpose.xlu0.c.b16.cont [4/8] 0, 128
        %3279 = vxpose.xlu0.c.b16.cont [5/8] 0, 128
        %3280 = vxpose.xlu0.c.b16.cont [6/8] 0, 128
        %3281 = vxpose.xlu0.c.b16.cont [7/8] 0, 128
        %3282 = vxpose.xlu0.c.b16.end [8/8] 0, 128
        %v3283 = vpop.trf.xlu0
        %v3284 = vpop.trf.xlu0
        %v3285 = vpop.trf.xlu0
        %v3286 = vpop.trf.xlu0
        %v3287 = vpop.trf.xlu0
        %v3288 = vpop.trf.xlu0
        %v3289 = vpop.trf.xlu0
        %v3290 = vpop.trf.xlu0
        %3291 = vxpose.xlu0.c.b16.start [1/8] %v1731, 128
        %3292 = vxpose.xlu0.c.b16.cont [2/8] 0, 128
        %3293 = vxpose.xlu0.c.b16.cont [3/8] 0, 128
        %3294 = vxpose.xlu0.c.b16.cont [4/8] 0, 128
        %3295 = vxpose.xlu0.c.b16.cont [5/8] 0, 128
        %3296 = vxpose.xlu0.c.b16.cont [6/8] 0, 128
        %3297 = vxpose.xlu0.c.b16.cont [7/8] 0, 128
        %3298 = vxpose.xlu0.c.b16.end [8/8] 0, 128
        %v3299 = vpop.trf.xlu0
        %v3300 = vpop.trf.xlu0
        %v3301 = vpop.trf.xlu0
        %v3302 = vpop.trf.xlu0
        %v3303 = vpop.trf.xlu0
        %v3304 = vpop.trf.xlu0
        %v3305 = vpop.trf.xlu0
        %v3306 = vpop.trf.xlu0
        %3307 = vxpose.xlu0.c.b16.start [1/8] %v1732, 128
        %3308 = vxpose.xlu0.c.b16.cont [2/8] 0, 128
        %3309 = vxpose.xlu0.c.b16.cont [3/8] 0, 128
        %3310 = vxpose.xlu0.c.b16.cont [4/8] 0, 128
        %3311 = vxpose.xlu0.c.b16.cont [5/8] 0, 128
        %3312 = vxpose.xlu0.c.b16.cont [6/8] 0, 128
        %3313 = vxpose.xlu0.c.b16.cont [7/8] 0, 128
        %3314 = vxpose.xlu0.c.b16.end [8/8] 0, 128
        %v3315 = vpop.trf.xlu0
        %v3316 = vpop.trf.xlu0
        %v3317 = vpop.trf.xlu0
        %v3318 = vpop.trf.xlu0
        %v3319 = vpop.trf.xlu0
        %v3320 = vpop.trf.xlu0
        %v3321 = vpop.trf.xlu0
        %v3322 = vpop.trf.xlu0
        %3323 = vxpose.xlu0.c.b16.start [1/8] %v1733, 128
        %3324 = vxpose.xlu0.c.b16.cont [2/8] 0, 128
        %3325 = vxpose.xlu0.c.b16.cont [3/8] 0, 128
        %3326 = vxpose.xlu0.c.b16.cont [4/8] 0, 128
        %3327 = vxpose.xlu0.c.b16.cont [5/8] 0, 128
        %3328 = vxpose.xlu0.c.b16.cont [6/8] 0, 128
        %3329 = vxpose.xlu0.c.b16.cont [7/8] 0, 128
        %3330 = vxpose.xlu0.c.b16.end [8/8] 0, 128
        %v3331 = vpop.trf.xlu0
        %v3332 = vpop.trf.xlu0
        %v3333 = vpop.trf.xlu0
        %v3334 = vpop.trf.xlu0
        %v3335 = vpop.trf.xlu0
        %v3336 = vpop.trf.xlu0
        %v3337 = vpop.trf.xlu0
        %v3338 = vpop.trf.xlu0
        %3339 = vxpose.xlu0.c.b16.start [1/8] %v1734, 128
        %3340 = vxpose.xlu0.c.b16.cont [2/8] 0, 128
        %3341 = vxpose.xlu0.c.b16.cont [3/8] 0, 128
        %3342 = vxpose.xlu0.c.b16.cont [4/8] 0, 128
        %3343 = vxpose.xlu0.c.b16.cont [5/8] 0, 128
        %3344 = vxpose.xlu0.c.b16.cont [6/8] 0, 128
        %3345 = vxpose.xlu0.c.b16.cont [7/8] 0, 128
        %3346 = vxpose.xlu0.c.b16.end [8/8] 0, 128
        %v3347 = vpop.trf.xlu0
        %v3348 = vpop.trf.xlu0
        %v3349 = vpop.trf.xlu0
        %v3350 = vpop.trf.xlu0
        %v3351 = vpop.trf.xlu0
        %v3352 = vpop.trf.xlu0
        %v3353 = vpop.trf.xlu0
        %v3354 = vpop.trf.xlu0
        %v3357 = vpack.i.b16 %v3251, %v3235
        %v3359 = vshrl.u32 %v3235, 16
        %v3360 = vshrl.u32 %v3251, 16
        %v3361 = vpack.i.b16 %v3360, %v3359
        %v3365 = vpack.i.b16 %v3283, %v3267
        %v3367 = vshrl.u32 %v3267, 16
        %v3368 = vshrl.u32 %v3283, 16
        %v3369 = vpack.i.b16 %v3368, %v3367
        %v3373 = vpack.i.b16 %v3315, %v3299
        %v3375 = vshrl.u32 %v3299, 16
        %v3376 = vshrl.u32 %v3315, 16
        %v3377 = vpack.i.b16 %v3376, %v3375
        %v3381 = vpack.i.b16 %v3347, %v3331
        %v3383 = vshrl.u32 %v3331, 16
        %v3384 = vshrl.u32 %v3347, 16
        %v3385 = vpack.i.b16 %v3384, %v3383
        %v3389 = vpack.i.b16 %v3252, %v3236
        %v3391 = vshrl.u32 %v3236, 16
        %v3392 = vshrl.u32 %v3252, 16
        %v3393 = vpack.i.b16 %v3392, %v3391
        %v3397 = vpack.i.b16 %v3284, %v3268
        %v3399 = vshrl.u32 %v3268, 16
        %v3400 = vshrl.u32 %v3284, 16
        %v3401 = vpack.i.b16 %v3400, %v3399
        %v3405 = vpack.i.b16 %v3316, %v3300
        %v3407 = vshrl.u32 %v3300, 16
        %v3408 = vshrl.u32 %v3316, 16
        %v3409 = vpack.i.b16 %v3408, %v3407
        %v3413 = vpack.i.b16 %v3348, %v3332
        %v3415 = vshrl.u32 %v3332, 16
        %v3416 = vshrl.u32 %v3348, 16
        %v3417 = vpack.i.b16 %v3416, %v3415
        %v3419 = vcombine.low %v3357, %v3373
        %v3420 = vcombine.high %v3357, %v3373
        %v3422 = vunpack.c.l.s4 1983009808
        %v3423 = vunpack.c.0.s8 %v3422
        %v3424 = vlaneseq
        %v3425 = vshrl.u32 %v3424, 7
        %v3426 = vsub.s32 %v3423, %v3425
        %v3427 = vrot.slane %v3419, %v3426
        %v3429 = vunpack.c.l.s4 1983009808
        %v3430 = vunpack.c.0.s8 %v3429
        %v3431 = vlaneseq
        %v3432 = vshrl.u32 %v3431, 7
        %v3433 = vsub.s32 %v3430, %v3432
        %v3434 = vrot.slane %v3420, %v3433
        %v3435 = vcombine.low %v3365, %v3381
        %v3436 = vcombine.high %v3365, %v3381
        %v3438 = vunpack.c.l.s4 1983009808
        %v3439 = vunpack.c.0.s8 %v3438
        %v3440 = vlaneseq
        %v3441 = vshrl.u32 %v3440, 7
        %v3442 = vsub.s32 %v3439, %v3441
        %v3443 = vrot.slane %v3435, %v3442
        %v3445 = vunpack.c.l.s4 1983009808
        %v3446 = vunpack.c.0.s8 %v3445
        %v3447 = vlaneseq
        %v3448 = vshrl.u32 %v3447, 7
        %v3449 = vsub.s32 %v3446, %v3448
        %v3450 = vrot.slane %v3436, %v3449
        %v3451 = vcombine.low %v3427, %v3443
        %v3452 = vcombine.high %v3427, %v3443
        %v3454 = vunpack.c.l.s4 1934713408
        %v3455 = vunpack.c.0.s8 %v3454
        %v3456 = vlaneseq
        %v3457 = vshrl.u32 %v3456, 7
        %v3458 = vsub.s32 %v3455, %v3457
        %v3459 = vrot.slane %v3451, %v3458
        %v3461 = vunpack.c.l.s4 1934713408
        %v3462 = vunpack.c.0.s8 %v3461
        %v3463 = vlaneseq
        %v3464 = vshrl.u32 %v3463, 7
        %v3465 = vsub.s32 %v3462, %v3464
        %v3466 = vrot.slane %v3452, %v3465
        %v3467 = vcombine.low %v3434, %v3450
        %v3468 = vcombine.high %v3434, %v3450
        %v3470 = vunpack.c.l.s4 1934713408
        %v3471 = vunpack.c.0.s8 %v3470
        %v3472 = vlaneseq
        %v3473 = vshrl.u32 %v3472, 7
        %v3474 = vsub.s32 %v3471, %v3473
        %v3475 = vrot.slane %v3467, %v3474
        %v3477 = vunpack.c.l.s4 1934713408
        %v3478 = vunpack.c.0.s8 %v3477
        %v3479 = vlaneseq
        %v3480 = vshrl.u32 %v3479, 7
        %v3481 = vsub.s32 %v3478, %v3480
        %v3482 = vrot.slane %v3468, %v3481
        %v3483 = vcombine.high %v3459, 0
        %v3484 = vcombine.high %v3466, 0
        %v3485 = vcombine.high %v3475, 0
        %v3486 = vcombine.high %v3482, 0
        %v3487 = vcombine.low %v3361, %v3377
        %v3488 = vcombine.high %v3361, %v3377
        %v3490 = vunpack.c.l.s4 1983009808
        %v3491 = vunpack.c.0.s8 %v3490
        %v3492 = vlaneseq
        %v3493 = vshrl.u32 %v3492, 7
        %v3494 = vsub.s32 %v3491, %v3493
        %v3495 = vrot.slane %v3487, %v3494
        %v3497 = vunpack.c.l.s4 1983009808
        %v3498 = vunpack.c.0.s8 %v3497
        %v3499 = vlaneseq
        %v3500 = vshrl.u32 %v3499, 7
        %v3501 = vsub.s32 %v3498, %v3500
        %v3502 = vrot.slane %v3488, %v3501
        %v3503 = vcombine.low %v3369, %v3385
        %v3504 = vcombine.high %v3369, %v3385
        %v3506 = vunpack.c.l.s4 1983009808
        %v3507 = vunpack.c.0.s8 %v3506
        %v3508 = vlaneseq
        %v3509 = vshrl.u32 %v3508, 7
        %v3510 = vsub.s32 %v3507, %v3509
        %v3511 = vrot.slane %v3503, %v3510
        %v3513 = vunpack.c.l.s4 1983009808
        %v3514 = vunpack.c.0.s8 %v3513
        %v3515 = vlaneseq
        %v3516 = vshrl.u32 %v3515, 7
        %v3517 = vsub.s32 %v3514, %v3516
        %v3518 = vrot.slane %v3504, %v3517
        %v3519 = vcombine.low %v3495, %v3511
        %v3520 = vcombine.high %v3495, %v3511
        %v3522 = vunpack.c.l.s4 1934713408
        %v3523 = vunpack.c.0.s8 %v3522
        %v3524 = vlaneseq
        %v3525 = vshrl.u32 %v3524, 7
        %v3526 = vsub.s32 %v3523, %v3525
        %v3527 = vrot.slane %v3519, %v3526
        %v3529 = vunpack.c.l.s4 1934713408
        %v3530 = vunpack.c.0.s8 %v3529
        %v3531 = vlaneseq
        %v3532 = vshrl.u32 %v3531, 7
        %v3533 = vsub.s32 %v3530, %v3532
        %v3534 = vrot.slane %v3520, %v3533
        %v3535 = vcombine.low %v3502, %v3518
        %v3536 = vcombine.high %v3502, %v3518
        %v3538 = vunpack.c.l.s4 1934713408
        %v3539 = vunpack.c.0.s8 %v3538
        %v3540 = vlaneseq
        %v3541 = vshrl.u32 %v3540, 7
        %v3542 = vsub.s32 %v3539, %v3541
        %v3543 = vrot.slane %v3535, %v3542
        %v3545 = vunpack.c.l.s4 1934713408
        %v3546 = vunpack.c.0.s8 %v3545
        %v3547 = vlaneseq
        %v3548 = vshrl.u32 %v3547, 7
        %v3549 = vsub.s32 %v3546, %v3548
        %v3550 = vrot.slane %v3536, %v3549
        %v3551 = vcombine.high %v3527, 0
        %v3552 = vcombine.high %v3534, 0
        %v3553 = vcombine.high %v3543, 0
        %v3554 = vcombine.high %v3550, 0
        %v3555 = vcombine.low %v3389, %v3405
        %v3556 = vcombine.high %v3389, %v3405
        %v3558 = vunpack.c.l.s4 1983009808
        %v3559 = vunpack.c.0.s8 %v3558
        %v3560 = vlaneseq
        %v3561 = vshrl.u32 %v3560, 7
        %v3562 = vsub.s32 %v3559, %v3561
        %v3563 = vrot.slane %v3555, %v3562
        %v3565 = vunpack.c.l.s4 1983009808
        %v3566 = vunpack.c.0.s8 %v3565
        %v3567 = vlaneseq
        %v3568 = vshrl.u32 %v3567, 7
        %v3569 = vsub.s32 %v3566, %v3568
        %v3570 = vrot.slane %v3556, %v3569
        %v3571 = vcombine.low %v3397, %v3413
        %v3572 = vcombine.high %v3397, %v3413
        %v3574 = vunpack.c.l.s4 1983009808
        %v3575 = vunpack.c.0.s8 %v3574
        %v3576 = vlaneseq
        %v3577 = vshrl.u32 %v3576, 7
        %v3578 = vsub.s32 %v3575, %v3577
        %v3579 = vrot.slane %v3571, %v3578
        %v3581 = vunpack.c.l.s4 1983009808
        %v3582 = vunpack.c.0.s8 %v3581
        %v3583 = vlaneseq
        %v3584 = vshrl.u32 %v3583, 7
        %v3585 = vsub.s32 %v3582, %v3584
        %v3586 = vrot.slane %v3572, %v3585
        %v3587 = vcombine.low %v3563, %v3579
        %v3588 = vcombine.high %v3563, %v3579
        %v3590 = vunpack.c.l.s4 1934713408
        %v3591 = vunpack.c.0.s8 %v3590
        %v3592 = vlaneseq
        %v3593 = vshrl.u32 %v3592, 7
        %v3594 = vsub.s32 %v3591, %v3593
        %v3595 = vrot.slane %v3587, %v3594
        %v3597 = vunpack.c.l.s4 1934713408
        %v3598 = vunpack.c.0.s8 %v3597
        %v3599 = vlaneseq
        %v3600 = vshrl.u32 %v3599, 7
        %v3601 = vsub.s32 %v3598, %v3600
        %v3602 = vrot.slane %v3588, %v3601
        %v3603 = vcombine.low %v3570, %v3586
        %v3604 = vcombine.high %v3570, %v3586
        %v3606 = vunpack.c.l.s4 1934713408
        %v3607 = vunpack.c.0.s8 %v3606
        %v3608 = vlaneseq
        %v3609 = vshrl.u32 %v3608, 7
        %v3610 = vsub.s32 %v3607, %v3609
        %v3611 = vrot.slane %v3603, %v3610
        %v3613 = vunpack.c.l.s4 1934713408
        %v3614 = vunpack.c.0.s8 %v3613
        %v3615 = vlaneseq
        %v3616 = vshrl.u32 %v3615, 7
        %v3617 = vsub.s32 %v3614, %v3616
        %v3618 = vrot.slane %v3604, %v3617
        %v3619 = vcombine.high %v3595, 0
        %v3620 = vcombine.high %v3602, 0
        %v3621 = vcombine.high %v3611, 0
        %v3622 = vcombine.high %v3618, 0
        %v3623 = vcombine.low %v3393, %v3409
        %v3624 = vcombine.high %v3393, %v3409
        %v3626 = vunpack.c.l.s4 1983009808
        %v3627 = vunpack.c.0.s8 %v3626
        %v3628 = vlaneseq
        %v3629 = vshrl.u32 %v3628, 7
        %v3630 = vsub.s32 %v3627, %v3629
        %v3631 = vrot.slane %v3623, %v3630
        %v3633 = vunpack.c.l.s4 1983009808
        %v3634 = vunpack.c.0.s8 %v3633
        %v3635 = vlaneseq
        %v3636 = vshrl.u32 %v3635, 7
        %v3637 = vsub.s32 %v3634, %v3636
        %v3638 = vrot.slane %v3624, %v3637
        %v3639 = vcombine.low %v3401, %v3417
        %v3640 = vcombine.high %v3401, %v3417
        %v3642 = vunpack.c.l.s4 1983009808
        %v3643 = vunpack.c.0.s8 %v3642
        %v3644 = vlaneseq
        %v3645 = vshrl.u32 %v3644, 7
        %v3646 = vsub.s32 %v3643, %v3645
        %v3647 = vrot.slane %v3639, %v3646
        %v3649 = vunpack.c.l.s4 1983009808
        %v3650 = vunpack.c.0.s8 %v3649
        %v3651 = vlaneseq
        %v3652 = vshrl.u32 %v3651, 7
        %v3653 = vsub.s32 %v3650, %v3652
        %v3654 = vrot.slane %v3640, %v3653
        %v3655 = vcombine.low %v3631, %v3647
        %v3656 = vcombine.high %v3631, %v3647
        %v3658 = vunpack.c.l.s4 1934713408
        %v3659 = vunpack.c.0.s8 %v3658
        %v3660 = vlaneseq
        %v3661 = vshrl.u32 %v3660, 7
        %v3662 = vsub.s32 %v3659, %v3661
        %v3663 = vrot.slane %v3655, %v3662
        %v3665 = vunpack.c.l.s4 1934713408
        %v3666 = vunpack.c.0.s8 %v3665
        %v3667 = vlaneseq
        %v3668 = vshrl.u32 %v3667, 7
        %v3669 = vsub.s32 %v3666, %v3668
        %v3670 = vrot.slane %v3656, %v3669
        %v3671 = vcombine.low %v3638, %v3654
        %v3672 = vcombine.high %v3638, %v3654
        %v3674 = vunpack.c.l.s4 1934713408
        %v3675 = vunpack.c.0.s8 %v3674
        %v3676 = vlaneseq
        %v3677 = vshrl.u32 %v3676, 7
        %v3678 = vsub.s32 %v3675, %v3677
        %v3679 = vrot.slane %v3671, %v3678
        %v3681 = vunpack.c.l.s4 1934713408
        %v3682 = vunpack.c.0.s8 %v3681
        %v3683 = vlaneseq
        %v3684 = vshrl.u32 %v3683, 7
        %v3685 = vsub.s32 %v3682, %v3684
        %v3686 = vrot.slane %v3672, %v3685
        %v3687 = vcombine.high %v3663, 0
        %v3688 = vcombine.high %v3670, 0
        %v3689 = vcombine.high %v3679, 0
        %v3690 = vcombine.high %v3686, 0
        %3691 = vxpose.xlu0.c.b16.start [1/8] %v3459, 128
        %3692 = vxpose.xlu0.c.b16.cont [2/8] 0, 128
        %3693 = vxpose.xlu0.c.b16.cont [3/8] 0, 128
        %3694 = vxpose.xlu0.c.b16.cont [4/8] 0, 128
        %3695 = vxpose.xlu0.c.b16.cont [5/8] 0, 128
        %3696 = vxpose.xlu0.c.b16.cont [6/8] 0, 128
        %3697 = vxpose.xlu0.c.b16.cont [7/8] 0, 128
        %3698 = vxpose.xlu0.c.b16.end [8/8] 0, 128
        %v3699 = vpop.trf.xlu0
        %v3700 = vpop.trf.xlu0
        %v3701 = vpop.trf.xlu0
        %v3702 = vpop.trf.xlu0
        %v3703 = vpop.trf.xlu0
        %v3704 = vpop.trf.xlu0
        %v3705 = vpop.trf.xlu0
        %v3706 = vpop.trf.xlu0
        %3707 = vxpose.xlu0.c.b16.start [1/8] %v3527, 128
        %3708 = vxpose.xlu0.c.b16.cont [2/8] 0, 128
        %3709 = vxpose.xlu0.c.b16.cont [3/8] 0, 128
        %3710 = vxpose.xlu0.c.b16.cont [4/8] 0, 128
        %3711 = vxpose.xlu0.c.b16.cont [5/8] 0, 128
        %3712 = vxpose.xlu0.c.b16.cont [6/8] 0, 128
        %3713 = vxpose.xlu0.c.b16.cont [7/8] 0, 128
        %3714 = vxpose.xlu0.c.b16.end [8/8] 0, 128
        %v3715 = vpop.trf.xlu0
        %v3716 = vpop.trf.xlu0
        %v3717 = vpop.trf.xlu0
        %v3718 = vpop.trf.xlu0
        %v3719 = vpop.trf.xlu0
        %v3720 = vpop.trf.xlu0
        %v3721 = vpop.trf.xlu0
        %v3722 = vpop.trf.xlu0
        %3723 = vxpose.xlu0.c.b16.start [1/8] %v3483, 128
        %3724 = vxpose.xlu0.c.b16.cont [2/8] 0, 128
        %3725 = vxpose.xlu0.c.b16.cont [3/8] 0, 128
        %3726 = vxpose.xlu0.c.b16.cont [4/8] 0, 128
        %3727 = vxpose.xlu0.c.b16.cont [5/8] 0, 128
        %3728 = vxpose.xlu0.c.b16.cont [6/8] 0, 128
        %3729 = vxpose.xlu0.c.b16.cont [7/8] 0, 128
        %3730 = vxpose.xlu0.c.b16.end [8/8] 0, 128
        %v3731 = vpop.trf.xlu0
        %v3732 = vpop.trf.xlu0
        %v3733 = vpop.trf.xlu0
        %v3734 = vpop.trf.xlu0
        %v3735 = vpop.trf.xlu0
        %v3736 = vpop.trf.xlu0
        %v3737 = vpop.trf.xlu0
        %v3738 = vpop.trf.xlu0
        %3739 = vxpose.xlu0.c.b16.start [1/8] %v3551, 128
        %3740 = vxpose.xlu0.c.b16.cont [2/8] 0, 128
        %3741 = vxpose.xlu0.c.b16.cont [3/8] 0, 128
        %3742 = vxpose.xlu0.c.b16.cont [4/8] 0, 128
        %3743 = vxpose.xlu0.c.b16.cont [5/8] 0, 128
        %3744 = vxpose.xlu0.c.b16.cont [6/8] 0, 128
        %3745 = vxpose.xlu0.c.b16.cont [7/8] 0, 128
        %3746 = vxpose.xlu0.c.b16.end [8/8] 0, 128
        %v3747 = vpop.trf.xlu0
        %v3748 = vpop.trf.xlu0
        %v3749 = vpop.trf.xlu0
        %v3750 = vpop.trf.xlu0
        %v3751 = vpop.trf.xlu0
        %v3752 = vpop.trf.xlu0
        %v3753 = vpop.trf.xlu0
        %v3754 = vpop.trf.xlu0
        %3755 = vxpose.xlu0.c.b16.start [1/8] %v3466, 128
        %3756 = vxpose.xlu0.c.b16.cont [2/8] 0, 128
        %3757 = vxpose.xlu0.c.b16.cont [3/8] 0, 128
        %3758 = vxpose.xlu0.c.b16.cont [4/8] 0, 128
        %3759 = vxpose.xlu0.c.b16.cont [5/8] 0, 128
        %3760 = vxpose.xlu0.c.b16.cont [6/8] 0, 128
        %3761 = vxpose.xlu0.c.b16.cont [7/8] 0, 128
        %3762 = vxpose.xlu0.c.b16.end [8/8] 0, 128
        %v3763 = vpop.trf.xlu0
        %v3764 = vpop.trf.xlu0
        %v3765 = vpop.trf.xlu0
        %v3766 = vpop.trf.xlu0
        %v3767 = vpop.trf.xlu0
        %v3768 = vpop.trf.xlu0
        %v3769 = vpop.trf.xlu0
        %v3770 = vpop.trf.xlu0
        %3771 = vxpose.xlu0.c.b16.start [1/8] %v3534, 128
        %3772 = vxpose.xlu0.c.b16.cont [2/8] 0, 128
        %3773 = vxpose.xlu0.c.b16.cont [3/8] 0, 128
        %3774 = vxpose.xlu0.c.b16.cont [4/8] 0, 128
        %3775 = vxpose.xlu0.c.b16.cont [5/8] 0, 128
        %3776 = vxpose.xlu0.c.b16.cont [6/8] 0, 128
        %3777 = vxpose.xlu0.c.b16.cont [7/8] 0, 128
        %3778 = vxpose.xlu0.c.b16.end [8/8] 0, 128
        %v3779 = vpop.trf.xlu0
        %v3780 = vpop.trf.xlu0
        %v3781 = vpop.trf.xlu0
        %v3782 = vpop.trf.xlu0
        %v3783 = vpop.trf.xlu0
        %v3784 = vpop.trf.xlu0
        %v3785 = vpop.trf.xlu0
        %v3786 = vpop.trf.xlu0
        %3787 = vxpose.xlu0.c.b16.start [1/8] %v3484, 128
        %3788 = vxpose.xlu0.c.b16.cont [2/8] 0, 128
        %3789 = vxpose.xlu0.c.b16.cont [3/8] 0, 128
        %3790 = vxpose.xlu0.c.b16.cont [4/8] 0, 128
        %3791 = vxpose.xlu0.c.b16.cont [5/8] 0, 128
        %3792 = vxpose.xlu0.c.b16.cont [6/8] 0, 128
        %3793 = vxpose.xlu0.c.b16.cont [7/8] 0, 128
        %3794 = vxpose.xlu0.c.b16.end [8/8] 0, 128
        %v3795 = vpop.trf.xlu0
        %v3796 = vpop.trf.xlu0
        %v3797 = vpop.trf.xlu0
        %v3798 = vpop.trf.xlu0
        %v3799 = vpop.trf.xlu0
        %v3800 = vpop.trf.xlu0
        %v3801 = vpop.trf.xlu0
        %v3802 = vpop.trf.xlu0
        %3803 = vxpose.xlu0.c.b16.start [1/8] %v3552, 128
        %3804 = vxpose.xlu0.c.b16.cont [2/8] 0, 128
        %3805 = vxpose.xlu0.c.b16.cont [3/8] 0, 128
        %3806 = vxpose.xlu0.c.b16.cont [4/8] 0, 128
        %3807 = vxpose.xlu0.c.b16.cont [5/8] 0, 128
        %3808 = vxpose.xlu0.c.b16.cont [6/8] 0, 128
        %3809 = vxpose.xlu0.c.b16.cont [7/8] 0, 128
        %3810 = vxpose.xlu0.c.b16.end [8/8] 0, 128
        %v3811 = vpop.trf.xlu0
        %v3812 = vpop.trf.xlu0
        %v3813 = vpop.trf.xlu0
        %v3814 = vpop.trf.xlu0
        %v3815 = vpop.trf.xlu0
        %v3816 = vpop.trf.xlu0
        %v3817 = vpop.trf.xlu0
        %v3818 = vpop.trf.xlu0
        %3819 = vxpose.xlu0.c.b16.start [1/8] %v3475, 128
        %3820 = vxpose.xlu0.c.b16.cont [2/8] 0, 128
        %3821 = vxpose.xlu0.c.b16.cont [3/8] 0, 128
        %3822 = vxpose.xlu0.c.b16.cont [4/8] 0, 128
        %3823 = vxpose.xlu0.c.b16.cont [5/8] 0, 128
        %3824 = vxpose.xlu0.c.b16.cont [6/8] 0, 128
        %3825 = vxpose.xlu0.c.b16.cont [7/8] 0, 128
        %3826 = vxpose.xlu0.c.b16.end [8/8] 0, 128
        %v3827 = vpop.trf.xlu0
        %v3828 = vpop.trf.xlu0
        %v3829 = vpop.trf.xlu0
        %v3830 = vpop.trf.xlu0
        %v3831 = vpop.trf.xlu0
        %v3832 = vpop.trf.xlu0
        %v3833 = vpop.trf.xlu0
        %v3834 = vpop.trf.xlu0
        %3835 = vxpose.xlu0.c.b16.start [1/8] %v3543, 128
        %3836 = vxpose.xlu0.c.b16.cont [2/8] 0, 128
        %3837 = vxpose.xlu0.c.b16.cont [3/8] 0, 128
        %3838 = vxpose.xlu0.c.b16.cont [4/8] 0, 128
        %3839 = vxpose.xlu0.c.b16.cont [5/8] 0, 128
        %3840 = vxpose.xlu0.c.b16.cont [6/8] 0, 128
        %3841 = vxpose.xlu0.c.b16.cont [7/8] 0, 128
        %3842 = vxpose.xlu0.c.b16.end [8/8] 0, 128
        %v3843 = vpop.trf.xlu0
        %v3844 = vpop.trf.xlu0
        %v3845 = vpop.trf.xlu0
        %v3846 = vpop.trf.xlu0
        %v3847 = vpop.trf.xlu0
        %v3848 = vpop.trf.xlu0
        %v3849 = vpop.trf.xlu0
        %v3850 = vpop.trf.xlu0
        %3851 = vxpose.xlu0.c.b16.start [1/8] %v3485, 128
        %3852 = vxpose.xlu0.c.b16.cont [2/8] 0, 128
        %3853 = vxpose.xlu0.c.b16.cont [3/8] 0, 128
        %3854 = vxpose.xlu0.c.b16.cont [4/8] 0, 128
        %3855 = vxpose.xlu0.c.b16.cont [5/8] 0, 128
        %3856 = vxpose.xlu0.c.b16.cont [6/8] 0, 128
        %3857 = vxpose.xlu0.c.b16.cont [7/8] 0, 128
        %3858 = vxpose.xlu0.c.b16.end [8/8] 0, 128
        %v3859 = vpop.trf.xlu0
        %v3860 = vpop.trf.xlu0
        %v3861 = vpop.trf.xlu0
        %v3862 = vpop.trf.xlu0
        %v3863 = vpop.trf.xlu0
        %v3864 = vpop.trf.xlu0
        %v3865 = vpop.trf.xlu0
        %v3866 = vpop.trf.xlu0
        %3867 = vxpose.xlu0.c.b16.start [1/8] %v3553, 128
        %3868 = vxpose.xlu0.c.b16.cont [2/8] 0, 128
        %3869 = vxpose.xlu0.c.b16.cont [3/8] 0, 128
        %3870 = vxpose.xlu0.c.b16.cont [4/8] 0, 128
        %3871 = vxpose.xlu0.c.b16.cont [5/8] 0, 128
        %3872 = vxpose.xlu0.c.b16.cont [6/8] 0, 128
        %3873 = vxpose.xlu0.c.b16.cont [7/8] 0, 128
        %3874 = vxpose.xlu0.c.b16.end [8/8] 0, 128
        %v3875 = vpop.trf.xlu0
        %v3876 = vpop.trf.xlu0
        %v3877 = vpop.trf.xlu0
        %v3878 = vpop.trf.xlu0
        %v3879 = vpop.trf.xlu0
        %v3880 = vpop.trf.xlu0
        %v3881 = vpop.trf.xlu0
        %v3882 = vpop.trf.xlu0
        %3883 = vxpose.xlu0.c.b16.start [1/8] %v3482, 128
        %3884 = vxpose.xlu0.c.b16.cont [2/8] 0, 128
        %3885 = vxpose.xlu0.c.b16.cont [3/8] 0, 128
        %3886 = vxpose.xlu0.c.b16.cont [4/8] 0, 128
        %3887 = vxpose.xlu0.c.b16.cont [5/8] 0, 128
        %3888 = vxpose.xlu0.c.b16.cont [6/8] 0, 128
        %3889 = vxpose.xlu0.c.b16.cont [7/8] 0, 128
        %3890 = vxpose.xlu0.c.b16.end [8/8] 0, 128
        %v3891 = vpop.trf.xlu0
        %v3892 = vpop.trf.xlu0
        %v3893 = vpop.trf.xlu0
        %v3894 = vpop.trf.xlu0
        %v3895 = vpop.trf.xlu0
        %v3896 = vpop.trf.xlu0
        %v3897 = vpop.trf.xlu0
        %v3898 = vpop.trf.xlu0
        %3899 = vxpose.xlu0.c.b16.start [1/8] %v3550, 128
        %3900 = vxpose.xlu0.c.b16.cont [2/8] 0, 128
        %3901 = vxpose.xlu0.c.b16.cont [3/8] 0, 128
        %3902 = vxpose.xlu0.c.b16.cont [4/8] 0, 128
        %3903 = vxpose.xlu0.c.b16.cont [5/8] 0, 128
        %3904 = vxpose.xlu0.c.b16.cont [6/8] 0, 128
        %3905 = vxpose.xlu0.c.b16.cont [7/8] 0, 128
        %3906 = vxpose.xlu0.c.b16.end [8/8] 0, 128
        %v3907 = vpop.trf.xlu0
        %v3908 = vpop.trf.xlu0
        %v3909 = vpop.trf.xlu0
        %v3910 = vpop.trf.xlu0
        %v3911 = vpop.trf.xlu0
        %v3912 = vpop.trf.xlu0
        %v3913 = vpop.trf.xlu0
        %v3914 = vpop.trf.xlu0
        %3915 = vxpose.xlu0.c.b16.start [1/8] %v3486, 128
        %3916 = vxpose.xlu0.c.b16.cont [2/8] 0, 128
        %3917 = vxpose.xlu0.c.b16.cont [3/8] 0, 128
        %3918 = vxpose.xlu0.c.b16.cont [4/8] 0, 128
        %3919 = vxpose.xlu0.c.b16.cont [5/8] 0, 128
        %3920 = vxpose.xlu0.c.b16.cont [6/8] 0, 128
        %3921 = vxpose.xlu0.c.b16.cont [7/8] 0, 128
        %3922 = vxpose.xlu0.c.b16.end [8/8] 0, 128
        %v3923 = vpop.trf.xlu0
        %v3924 = vpop.trf.xlu0
        %v3925 = vpop.trf.xlu0
        %v3926 = vpop.trf.xlu0
        %v3927 = vpop.trf.xlu0
        %v3928 = vpop.trf.xlu0
        %v3929 = vpop.trf.xlu0
        %v3930 = vpop.trf.xlu0
        %3931 = vxpose.xlu0.c.b16.start [1/8] %v3554, 128
        %3932 = vxpose.xlu0.c.b16.cont [2/8] 0, 128
        %3933 = vxpose.xlu0.c.b16.cont [3/8] 0, 128
        %3934 = vxpose.xlu0.c.b16.cont [4/8] 0, 128
        %3935 = vxpose.xlu0.c.b16.cont [5/8] 0, 128
        %3936 = vxpose.xlu0.c.b16.cont [6/8] 0, 128
        %3937 = vxpose.xlu0.c.b16.cont [7/8] 0, 128
        %3938 = vxpose.xlu0.c.b16.end [8/8] 0, 128
        %v3939 = vpop.trf.xlu0
        %v3940 = vpop.trf.xlu0
        %v3941 = vpop.trf.xlu0
        %v3942 = vpop.trf.xlu0
        %v3943 = vpop.trf.xlu0
        %v3944 = vpop.trf.xlu0
        %v3945 = vpop.trf.xlu0
        %v3946 = vpop.trf.xlu0
        %3947 = vxpose.xlu0.c.b16.start [1/8] %v3595, 128
        %3948 = vxpose.xlu0.c.b16.cont [2/8] 0, 128
        %3949 = vxpose.xlu0.c.b16.cont [3/8] 0, 128
        %3950 = vxpose.xlu0.c.b16.cont [4/8] 0, 128
        %3951 = vxpose.xlu0.c.b16.cont [5/8] 0, 128
        %3952 = vxpose.xlu0.c.b16.cont [6/8] 0, 128
        %3953 = vxpose.xlu0.c.b16.cont [7/8] 0, 128
        %3954 = vxpose.xlu0.c.b16.end [8/8] 0, 128
        %v3955 = vpop.trf.xlu0
        %v3956 = vpop.trf.xlu0
        %v3957 = vpop.trf.xlu0
        %v3958 = vpop.trf.xlu0
        %v3959 = vpop.trf.xlu0
        %v3960 = vpop.trf.xlu0
        %v3961 = vpop.trf.xlu0
        %v3962 = vpop.trf.xlu0
        %3963 = vxpose.xlu0.c.b16.start [1/8] %v3663, 128
        %3964 = vxpose.xlu0.c.b16.cont [2/8] 0, 128
        %3965 = vxpose.xlu0.c.b16.cont [3/8] 0, 128
        %3966 = vxpose.xlu0.c.b16.cont [4/8] 0, 128
        %3967 = vxpose.xlu0.c.b16.cont [5/8] 0, 128
        %3968 = vxpose.xlu0.c.b16.cont [6/8] 0, 128
        %3969 = vxpose.xlu0.c.b16.cont [7/8] 0, 128
        %3970 = vxpose.xlu0.c.b16.end [8/8] 0, 128
        %v3971 = vpop.trf.xlu0
        %v3972 = vpop.trf.xlu0
        %v3973 = vpop.trf.xlu0
        %v3974 = vpop.trf.xlu0
        %v3975 = vpop.trf.xlu0
        %v3976 = vpop.trf.xlu0
        %v3977 = vpop.trf.xlu0
        %v3978 = vpop.trf.xlu0
        %3979 = vxpose.xlu0.c.b16.start [1/8] %v3619, 128
        %3980 = vxpose.xlu0.c.b16.cont [2/8] 0, 128
        %3981 = vxpose.xlu0.c.b16.cont [3/8] 0, 128
        %3982 = vxpose.xlu0.c.b16.cont [4/8] 0, 128
        %3983 = vxpose.xlu0.c.b16.cont [5/8] 0, 128
        %3984 = vxpose.xlu0.c.b16.cont [6/8] 0, 128
        %3985 = vxpose.xlu0.c.b16.cont [7/8] 0, 128
        %3986 = vxpose.xlu0.c.b16.end [8/8] 0, 128
        %v3987 = vpop.trf.xlu0
        %v3988 = vpop.trf.xlu0
        %v3989 = vpop.trf.xlu0
        %v3990 = vpop.trf.xlu0
        %v3991 = vpop.trf.xlu0
        %v3992 = vpop.trf.xlu0
        %v3993 = vpop.trf.xlu0
        %v3994 = vpop.trf.xlu0
        %3995 = vxpose.xlu0.c.b16.start [1/8] %v3687, 128
        %3996 = vxpose.xlu0.c.b16.cont [2/8] 0, 128
        %3997 = vxpose.xlu0.c.b16.cont [3/8] 0, 128
        %3998 = vxpose.xlu0.c.b16.cont [4/8] 0, 128
        %3999 = vxpose.xlu0.c.b16.cont [5/8] 0, 128
        %4000 = vxpose.xlu0.c.b16.cont [6/8] 0, 128
        %4001 = vxpose.xlu0.c.b16.cont [7/8] 0, 128
        %4002 = vxpose.xlu0.c.b16.end [8/8] 0, 128
        %v4003 = vpop.trf.xlu0
        %v4004 = vpop.trf.xlu0
        %v4005 = vpop.trf.xlu0
        %v4006 = vpop.trf.xlu0
        %v4007 = vpop.trf.xlu0
        %v4008 = vpop.trf.xlu0
        %v4009 = vpop.trf.xlu0
        %v4010 = vpop.trf.xlu0
        %4011 = vxpose.xlu0.c.b16.start [1/8] %v3602, 128
        %4012 = vxpose.xlu0.c.b16.cont [2/8] 0, 128
        %4013 = vxpose.xlu0.c.b16.cont [3/8] 0, 128
        %4014 = vxpose.xlu0.c.b16.cont [4/8] 0, 128
        %4015 = vxpose.xlu0.c.b16.cont [5/8] 0, 128
        %4016 = vxpose.xlu0.c.b16.cont [6/8] 0, 128
        %4017 = vxpose.xlu0.c.b16.cont [7/8] 0, 128
        %4018 = vxpose.xlu0.c.b16.end [8/8] 0, 128
        %v4019 = vpop.trf.xlu0
        %v4020 = vpop.trf.xlu0
        %v4021 = vpop.trf.xlu0
        %v4022 = vpop.trf.xlu0
        %v4023 = vpop.trf.xlu0
        %v4024 = vpop.trf.xlu0
        %v4025 = vpop.trf.xlu0
        %v4026 = vpop.trf.xlu0
        %4027 = vxpose.xlu0.c.b16.start [1/8] %v3670, 128
        %4028 = vxpose.xlu0.c.b16.cont [2/8] 0, 128
        %4029 = vxpose.xlu0.c.b16.cont [3/8] 0, 128
        %4030 = vxpose.xlu0.c.b16.cont [4/8] 0, 128
        %4031 = vxpose.xlu0.c.b16.cont [5/8] 0, 128
        %4032 = vxpose.xlu0.c.b16.cont [6/8] 0, 128
        %4033 = vxpose.xlu0.c.b16.cont [7/8] 0, 128
        %4034 = vxpose.xlu0.c.b16.end [8/8] 0, 128
        %v4035 = vpop.trf.xlu0
        %v4036 = vpop.trf.xlu0
        %v4037 = vpop.trf.xlu0
        %v4038 = vpop.trf.xlu0
        %v4039 = vpop.trf.xlu0
        %v4040 = vpop.trf.xlu0
        %v4041 = vpop.trf.xlu0
        %v4042 = vpop.trf.xlu0
        %4043 = vxpose.xlu0.c.b16.start [1/8] %v3620, 128
        %4044 = vxpose.xlu0.c.b16.cont [2/8] 0, 128
        %4045 = vxpose.xlu0.c.b16.cont [3/8] 0, 128
        %4046 = vxpose.xlu0.c.b16.cont [4/8] 0, 128
        %4047 = vxpose.xlu0.c.b16.cont [5/8] 0, 128
        %4048 = vxpose.xlu0.c.b16.cont [6/8] 0, 128
        %4049 = vxpose.xlu0.c.b16.cont [7/8] 0, 128
        %4050 = vxpose.xlu0.c.b16.end [8/8] 0, 128
        %v4051 = vpop.trf.xlu0
        %v4052 = vpop.trf.xlu0
        %v4053 = vpop.trf.xlu0
        %v4054 = vpop.trf.xlu0
        %v4055 = vpop.trf.xlu0
        %v4056 = vpop.trf.xlu0
        %v4057 = vpop.trf.xlu0
        %v4058 = vpop.trf.xlu0
        %4059 = vxpose.xlu0.c.b16.start [1/8] %v3688, 128
        %4060 = vxpose.xlu0.c.b16.cont [2/8] 0, 128
        %4061 = vxpose.xlu0.c.b16.cont [3/8] 0, 128
        %4062 = vxpose.xlu0.c.b16.cont [4/8] 0, 128
        %4063 = vxpose.xlu0.c.b16.cont [5/8] 0, 128
        %4064 = vxpose.xlu0.c.b16.cont [6/8] 0, 128
        %4065 = vxpose.xlu0.c.b16.cont [7/8] 0, 128
        %4066 = vxpose.xlu0.c.b16.end [8/8] 0, 128
        %v4067 = vpop.trf.xlu0
        %v4068 = vpop.trf.xlu0
        %v4069 = vpop.trf.xlu0
        %v4070 = vpop.trf.xlu0
        %v4071 = vpop.trf.xlu0
        %v4072 = vpop.trf.xlu0
        %v4073 = vpop.trf.xlu0
        %v4074 = vpop.trf.xlu0
        %4075 = vxpose.xlu0.c.b16.start [1/8] %v3611, 128
        %4076 = vxpose.xlu0.c.b16.cont [2/8] 0, 128
        %4077 = vxpose.xlu0.c.b16.cont [3/8] 0, 128
        %4078 = vxpose.xlu0.c.b16.cont [4/8] 0, 128
        %4079 = vxpose.xlu0.c.b16.cont [5/8] 0, 128
        %4080 = vxpose.xlu0.c.b16.cont [6/8] 0, 128
        %4081 = vxpose.xlu0.c.b16.cont [7/8] 0, 128
        %4082 = vxpose.xlu0.c.b16.end [8/8] 0, 128
        %v4083 = vpop.trf.xlu0
        %v4084 = vpop.trf.xlu0
        %v4085 = vpop.trf.xlu0
        %v4086 = vpop.trf.xlu0
        %v4087 = vpop.trf.xlu0
        %v4088 = vpop.trf.xlu0
        %v4089 = vpop.trf.xlu0
        %v4090 = vpop.trf.xlu0
        %4091 = vxpose.xlu0.c.b16.start [1/8] %v3679, 128
        %4092 = vxpose.xlu0.c.b16.cont [2/8] 0, 128
        %4093 = vxpose.xlu0.c.b16.cont [3/8] 0, 128
        %4094 = vxpose.xlu0.c.b16.cont [4/8] 0, 128
        %4095 = vxpose.xlu0.c.b16.cont [5/8] 0, 128
        %4096 = vxpose.xlu0.c.b16.cont [6/8] 0, 128
        %4097 = vxpose.xlu0.c.b16.cont [7/8] 0, 128
        %4098 = vxpose.xlu0.c.b16.end [8/8] 0, 128
        %v4099 = vpop.trf.xlu0
        %v4100 = vpop.trf.xlu0
        %v4101 = vpop.trf.xlu0
        %v4102 = vpop.trf.xlu0
        %v4103 = vpop.trf.xlu0
        %v4104 = vpop.trf.xlu0
        %v4105 = vpop.trf.xlu0
        %v4106 = vpop.trf.xlu0
        %4107 = vxpose.xlu0.c.b16.start [1/8] %v3621, 128
        %4108 = vxpose.xlu0.c.b16.cont [2/8] 0, 128
        %4109 = vxpose.xlu0.c.b16.cont [3/8] 0, 128
        %4110 = vxpose.xlu0.c.b16.cont [4/8] 0, 128
        %4111 = vxpose.xlu0.c.b16.cont [5/8] 0, 128
        %4112 = vxpose.xlu0.c.b16.cont [6/8] 0, 128
        %4113 = vxpose.xlu0.c.b16.cont [7/8] 0, 128
        %4114 = vxpose.xlu0.c.b16.end [8/8] 0, 128
        %v4115 = vpop.trf.xlu0
        %v4116 = vpop.trf.xlu0
        %v4117 = vpop.trf.xlu0
        %v4118 = vpop.trf.xlu0
        %v4119 = vpop.trf.xlu0
        %v4120 = vpop.trf.xlu0
        %v4121 = vpop.trf.xlu0
        %v4122 = vpop.trf.xlu0
        %4123 = vxpose.xlu0.c.b16.start [1/8] %v3689, 128
        %4124 = vxpose.xlu0.c.b16.cont [2/8] 0, 128
        %4125 = vxpose.xlu0.c.b16.cont [3/8] 0, 128
        %4126 = vxpose.xlu0.c.b16.cont [4/8] 0, 128
        %4127 = vxpose.xlu0.c.b16.cont [5/8] 0, 128
        %4128 = vxpose.xlu0.c.b16.cont [6/8] 0, 128
        %4129 = vxpose.xlu0.c.b16.cont [7/8] 0, 128
        %4130 = vxpose.xlu0.c.b16.end [8/8] 0, 128
        %v4131 = vpop.trf.xlu0
        %v4132 = vpop.trf.xlu0
        %v4133 = vpop.trf.xlu0
        %v4134 = vpop.trf.xlu0
        %v4135 = vpop.trf.xlu0
        %v4136 = vpop.trf.xlu0
        %v4137 = vpop.trf.xlu0
        %v4138 = vpop.trf.xlu0
        %4139 = vxpose.xlu0.c.b16.start [1/8] %v3618, 128
        %4140 = vxpose.xlu0.c.b16.cont [2/8] 0, 128
        %4141 = vxpose.xlu0.c.b16.cont [3/8] 0, 128
        %4142 = vxpose.xlu0.c.b16.cont [4/8] 0, 128
        %4143 = vxpose.xlu0.c.b16.cont [5/8] 0, 128
        %4144 = vxpose.xlu0.c.b16.cont [6/8] 0, 128
        %4145 = vxpose.xlu0.c.b16.cont [7/8] 0, 128
        %4146 = vxpose.xlu0.c.b16.end [8/8] 0, 128
        %v4147 = vpop.trf.xlu0
        %v4148 = vpop.trf.xlu0
        %v4149 = vpop.trf.xlu0
        %v4150 = vpop.trf.xlu0
        %v4151 = vpop.trf.xlu0
        %v4152 = vpop.trf.xlu0
        %v4153 = vpop.trf.xlu0
        %v4154 = vpop.trf.xlu0
        %4155 = vxpose.xlu0.c.b16.start [1/8] %v3686, 128
        %4156 = vxpose.xlu0.c.b16.cont [2/8] 0, 128
        %4157 = vxpose.xlu0.c.b16.cont [3/8] 0, 128
        %4158 = vxpose.xlu0.c.b16.cont [4/8] 0, 128
        %4159 = vxpose.xlu0.c.b16.cont [5/8] 0, 128
        %4160 = vxpose.xlu0.c.b16.cont [6/8] 0, 128
        %4161 = vxpose.xlu0.c.b16.cont [7/8] 0, 128
        %4162 = vxpose.xlu0.c.b16.end [8/8] 0, 128
        %v4163 = vpop.trf.xlu0
        %v4164 = vpop.trf.xlu0
        %v4165 = vpop.trf.xlu0
        %v4166 = vpop.trf.xlu0
        %v4167 = vpop.trf.xlu0
        %v4168 = vpop.trf.xlu0
        %v4169 = vpop.trf.xlu0
        %v4170 = vpop.trf.xlu0
        %4171 = vxpose.xlu0.c.b16.start [1/8] %v3622, 128
        %4172 = vxpose.xlu0.c.b16.cont [2/8] 0, 128
        %4173 = vxpose.xlu0.c.b16.cont [3/8] 0, 128
        %4174 = vxpose.xlu0.c.b16.cont [4/8] 0, 128
        %4175 = vxpose.xlu0.c.b16.cont [5/8] 0, 128
        %4176 = vxpose.xlu0.c.b16.cont [6/8] 0, 128
        %4177 = vxpose.xlu0.c.b16.cont [7/8] 0, 128
        %4178 = vxpose.xlu0.c.b16.end [8/8] 0, 128
        %v4179 = vpop.trf.xlu0
        %v4180 = vpop.trf.xlu0
        %v4181 = vpop.trf.xlu0
        %v4182 = vpop.trf.xlu0
        %v4183 = vpop.trf.xlu0
        %v4184 = vpop.trf.xlu0
        %v4185 = vpop.trf.xlu0
        %v4186 = vpop.trf.xlu0
        %4187 = vxpose.xlu0.c.b16.start [1/8] %v3690, 128
        %4188 = vxpose.xlu0.c.b16.cont [2/8] 0, 128
        %4189 = vxpose.xlu0.c.b16.cont [3/8] 0, 128
        %4190 = vxpose.xlu0.c.b16.cont [4/8] 0, 128
        %4191 = vxpose.xlu0.c.b16.cont [5/8] 0, 128
        %4192 = vxpose.xlu0.c.b16.cont [6/8] 0, 128
        %4193 = vxpose.xlu0.c.b16.cont [7/8] 0, 128
        %4194 = vxpose.xlu0.c.b16.end [8/8] 0, 128
        %v4195 = vpop.trf.xlu0
        %v4196 = vpop.trf.xlu0
        %v4197 = vpop.trf.xlu0
        %v4198 = vpop.trf.xlu0
        %v4199 = vpop.trf.xlu0
        %v4200 = vpop.trf.xlu0
        %v4201 = vpop.trf.xlu0
        %v4202 = vpop.trf.xlu0
        %v4203 = vcombine.low %v3699, %v3763
        %v4205 = vunpack.c.l.s4 1983009808
        %v4206 = vunpack.c.0.s8 %v4205
        %v4207 = vlaneseq
        %v4208 = vshrl.u32 %v4207, 7
        %v4209 = vsub.s32 %v4206, %v4208
        %v4210 = vrot.slane %v4203, %v4209
        %v4211 = vcombine.low %v3731, %v3795
        %v4213 = vunpack.c.l.s4 1983009808
        %v4214 = vunpack.c.0.s8 %v4213
        %v4215 = vlaneseq
        %v4216 = vshrl.u32 %v4215, 7
        %v4217 = vsub.s32 %v4214, %v4216
        %v4218 = vrot.slane %v4211, %v4217
        %v4219 = vcombine.low %v3827, %v3891
        %v4221 = vunpack.c.l.s4 1983009808
        %v4222 = vunpack.c.0.s8 %v4221
        %v4223 = vlaneseq
        %v4224 = vshrl.u32 %v4223, 7
        %v4225 = vsub.s32 %v4222, %v4224
        %v4226 = vrot.slane %v4219, %v4225
        %v4227 = vcombine.low %v3859, %v3923
        %v4229 = vunpack.c.l.s4 1983009808
        %v4230 = vunpack.c.0.s8 %v4229
        %v4231 = vlaneseq
        %v4232 = vshrl.u32 %v4231, 7
        %v4233 = vsub.s32 %v4230, %v4232
        %v4234 = vrot.slane %v4227, %v4233
        %v4235 = vcombine.low %v4210, %v4218
        %v4237 = vunpack.c.l.s4 1934713408
        %v4238 = vunpack.c.0.s8 %v4237
        %v4239 = vlaneseq
        %v4240 = vshrl.u32 %v4239, 7
        %v4241 = vsub.s32 %v4238, %v4240
        %v4242 = vrot.slane %v4235, %v4241
        %v4243 = vcombine.low %v4226, %v4234
        %v4245 = vunpack.c.l.s4 1934713408
        %v4246 = vunpack.c.0.s8 %v4245
        %v4247 = vlaneseq
        %v4248 = vshrl.u32 %v4247, 7
        %v4249 = vsub.s32 %v4246, %v4248
        %v4250 = vrot.slane %v4243, %v4249
        %v4251 = vcombine.low %v4242, %v4250
        %v4252 = vcombine.high %v4242, %v4250
        %v4253 = vcombine.low %v3715, %v3779
        %v4255 = vunpack.c.l.s4 1983009808
        %v4256 = vunpack.c.0.s8 %v4255
        %v4257 = vlaneseq
        %v4258 = vshrl.u32 %v4257, 7
        %v4259 = vsub.s32 %v4256, %v4258
        %v4260 = vrot.slane %v4253, %v4259
        %v4261 = vcombine.low %v3747, %v3811
        %v4263 = vunpack.c.l.s4 1983009808
        %v4264 = vunpack.c.0.s8 %v4263
        %v4265 = vlaneseq
        %v4266 = vshrl.u32 %v4265, 7
        %v4267 = vsub.s32 %v4264, %v4266
        %v4268 = vrot.slane %v4261, %v4267
        %v4269 = vcombine.low %v3843, %v3907
        %v4271 = vunpack.c.l.s4 1983009808
        %v4272 = vunpack.c.0.s8 %v4271
        %v4273 = vlaneseq
        %v4274 = vshrl.u32 %v4273, 7
        %v4275 = vsub.s32 %v4272, %v4274
        %v4276 = vrot.slane %v4269, %v4275
        %v4277 = vcombine.low %v3875, %v3939
        %v4279 = vunpack.c.l.s4 1983009808
        %v4280 = vunpack.c.0.s8 %v4279
        %v4281 = vlaneseq
        %v4282 = vshrl.u32 %v4281, 7
        %v4283 = vsub.s32 %v4280, %v4282
        %v4284 = vrot.slane %v4277, %v4283
        %v4285 = vcombine.low %v4260, %v4268
        %v4287 = vunpack.c.l.s4 1934713408
        %v4288 = vunpack.c.0.s8 %v4287
        %v4289 = vlaneseq
        %v4290 = vshrl.u32 %v4289, 7
        %v4291 = vsub.s32 %v4288, %v4290
        %v4292 = vrot.slane %v4285, %v4291
        %v4293 = vcombine.low %v4276, %v4284
        %v4295 = vunpack.c.l.s4 1934713408
        %v4296 = vunpack.c.0.s8 %v4295
        %v4297 = vlaneseq
        %v4298 = vshrl.u32 %v4297, 7
        %v4299 = vsub.s32 %v4296, %v4298
        %v4300 = vrot.slane %v4293, %v4299
        %v4301 = vcombine.low %v4292, %v4300
        %v4302 = vcombine.high %v4292, %v4300
        %v4303 = vcombine.low %v3955, %v4019
        %v4305 = vunpack.c.l.s4 1983009808
        %v4306 = vunpack.c.0.s8 %v4305
        %v4307 = vlaneseq
        %v4308 = vshrl.u32 %v4307, 7
        %v4309 = vsub.s32 %v4306, %v4308
        %v4310 = vrot.slane %v4303, %v4309
        %v4311 = vcombine.low %v3987, %v4051
        %v4313 = vunpack.c.l.s4 1983009808
        %v4314 = vunpack.c.0.s8 %v4313
        %v4315 = vlaneseq
        %v4316 = vshrl.u32 %v4315, 7
        %v4317 = vsub.s32 %v4314, %v4316
        %v4318 = vrot.slane %v4311, %v4317
        %v4319 = vcombine.low %v4083, %v4147
        %v4321 = vunpack.c.l.s4 1983009808
        %v4322 = vunpack.c.0.s8 %v4321
        %v4323 = vlaneseq
        %v4324 = vshrl.u32 %v4323, 7
        %v4325 = vsub.s32 %v4322, %v4324
        %v4326 = vrot.slane %v4319, %v4325
        %v4327 = vcombine.low %v4115, %v4179
        %v4329 = vunpack.c.l.s4 1983009808
        %v4330 = vunpack.c.0.s8 %v4329
        %v4331 = vlaneseq
        %v4332 = vshrl.u32 %v4331, 7
        %v4333 = vsub.s32 %v4330, %v4332
        %v4334 = vrot.slane %v4327, %v4333
        %v4335 = vcombine.low %v4310, %v4318
        %v4337 = vunpack.c.l.s4 1934713408
        %v4338 = vunpack.c.0.s8 %v4337
        %v4339 = vlaneseq
        %v4340 = vshrl.u32 %v4339, 7
        %v4341 = vsub.s32 %v4338, %v4340
        %v4342 = vrot.slane %v4335, %v4341
        %v4343 = vcombine.low %v4326, %v4334
        %v4345 = vunpack.c.l.s4 1934713408
        %v4346 = vunpack.c.0.s8 %v4345
        %v4347 = vlaneseq
        %v4348 = vshrl.u32 %v4347, 7
        %v4349 = vsub.s32 %v4346, %v4348
        %v4350 = vrot.slane %v4343, %v4349
        %v4351 = vcombine.low %v4342, %v4350
        %v4352 = vcombine.high %v4342, %v4350
        %v4353 = vcombine.low %v3971, %v4035
        %v4355 = vunpack.c.l.s4 1983009808
        %v4356 = vunpack.c.0.s8 %v4355
        %v4357 = vlaneseq
        %v4358 = vshrl.u32 %v4357, 7
        %v4359 = vsub.s32 %v4356, %v4358
        %v4360 = vrot.slane %v4353, %v4359
        %v4361 = vcombine.low %v4003, %v4067
        %v4363 = vunpack.c.l.s4 1983009808
        %v4364 = vunpack.c.0.s8 %v4363
        %v4365 = vlaneseq
        %v4366 = vshrl.u32 %v4365, 7
        %v4367 = vsub.s32 %v4364, %v4366
        %v4368 = vrot.slane %v4361, %v4367
        %v4369 = vcombine.low %v4099, %v4163
        %v4371 = vunpack.c.l.s4 1983009808
        %v4372 = vunpack.c.0.s8 %v4371
        %v4373 = vlaneseq
        %v4374 = vshrl.u32 %v4373, 7
        %v4375 = vsub.s32 %v4372, %v4374
        %v4376 = vrot.slane %v4369, %v4375
        %v4377 = vcombine.low %v4131, %v4195
        %v4379 = vunpack.c.l.s4 1983009808
        %v4380 = vunpack.c.0.s8 %v4379
        %v4381 = vlaneseq
        %v4382 = vshrl.u32 %v4381, 7
        %v4383 = vsub.s32 %v4380, %v4382
        %v4384 = vrot.slane %v4377, %v4383
        %v4385 = vcombine.low %v4360, %v4368
        %v4387 = vunpack.c.l.s4 1934713408
        %v4388 = vunpack.c.0.s8 %v4387
        %v4389 = vlaneseq
        %v4390 = vshrl.u32 %v4389, 7
        %v4391 = vsub.s32 %v4388, %v4390
        %v4392 = vrot.slane %v4385, %v4391
        %v4393 = vcombine.low %v4376, %v4384
        %v4395 = vunpack.c.l.s4 1934713408
        %v4396 = vunpack.c.0.s8 %v4395
        %v4397 = vlaneseq
        %v4398 = vshrl.u32 %v4397, 7
        %v4399 = vsub.s32 %v4396, %v4398
        %v4400 = vrot.slane %v4393, %v4399
        %v4401 = vcombine.low %v4392, %v4400
        %v4402 = vcombine.high %v4392, %v4400
        %v4405 = vpack.i.b16 %v4301, %v4251
        %v4406 = vshrl.u32 %v4251, 16
        %v4407 = vshrl.u32 %v4301, 16
        %v4408 = vpack.i.b16 %v4407, %v4406
        %v4411 = vpack.i.b16 %v4302, %v4252
        %v4412 = vshrl.u32 %v4252, 16
        %v4413 = vshrl.u32 %v4302, 16
        %v4414 = vpack.i.b16 %v4413, %v4412
        %v4417 = vpack.i.b16 %v4401, %v4351
        %v4418 = vshrl.u32 %v4351, 16
        %v4419 = vshrl.u32 %v4401, 16
        %v4420 = vpack.i.b16 %v4419, %v4418
        %v4423 = vpack.i.b16 %v4402, %v4352
        %v4424 = vshrl.u32 %v4352, 16
        %v4425 = vshrl.u32 %v4402, 16
        %v4426 = vpack.i.b16 %v4425, %v4424
        %v4428 = vsel %vm3178, %v4405, 0
        %v4431 = vsel %vm3178, %v4417, 0
        %v4434 = vsel %vm3178, %v3223, 0
        %4436 = vmatprep.subr.bf16.mxu0 0
        %4437 = vmatpush1.bf16.xpose.msra.mxu0 %v4434
        %4438 = vmatprep.subr.bf16.mxu0 0
        %4439 = vmatpush1.bf16.xpose.msra.mxu0 0
        %4440 = vmatprep.subr.bf16.mxu0 0
        %4441 = vmatpush1.bf16.xpose.msra.mxu0 0
        %4442 = vmatprep.subr.bf16.mxu0 0
        %4443 = vmatpush1.bf16.xpose.msra.mxu0 0
        %4444 = vmatprep.subr.bf16.mxu0 0
        %4445 = vmatpush1.bf16.xpose.msra.mxu0 0
        %4446 = vmatprep.subr.bf16.mxu0 0
        %4447 = vmatpush1.bf16.xpose.msra.mxu0 0
        %4448 = vmatprep.subr.bf16.mxu0 0
        %4449 = vmatpush1.bf16.xpose.msra.mxu0 0
        %4450 = vmatprep.subr.bf16.mxu0 0
        %4451 = vmatpush1.bf16.xpose.msra.mxu0 0
        %4452 = vmatprep.subr.bf16.mxu0 0
        %4453 = vmatpush1.bf16.xpose.msra.mxu0 0
        %4454 = vmatprep.subr.bf16.mxu0 0
        %4455 = vmatpush1.bf16.xpose.msra.mxu0 0
        %4456 = vmatprep.subr.bf16.mxu0 0
        %4457 = vmatpush1.bf16.xpose.msra.mxu0 0
        %4458 = vmatprep.subr.bf16.mxu0 0
        %4459 = vmatpush1.bf16.xpose.msra.mxu0 0
        %4460 = vmatprep.subr.bf16.mxu0 0
        %4461 = vmatpush1.bf16.xpose.msra.mxu0 0
        %4462 = vmatprep.subr.bf16.mxu0 0
        %4463 = vmatpush1.bf16.xpose.msra.mxu0 0
        %4464 = vmatprep.subr.bf16.mxu0 0
        %4465 = vmatpush1.bf16.xpose.msra.mxu0 0
        %4466 = vmatprep.subr.bf16.mxu0 0
        %4467 = vmatpush1.bf16.xpose.msra.mxu0 0
        %4468 = vmatprep.mubr.bf16.mxu0 0
        %4469 = vmatmul.mubr.bf16.gmra.mrb[0].mxu0 %v4428
        %v4470 = vpop.f32.mrb[0].mxu0
        %v4471 = vadd.f32 0.0, %v4470
        %v4472 = vpop.f32.mrb[0].mxu0
        %v4473 = vpop.f32.mrb[0].mxu0
        %v4474 = vadd.f32 0.0, %v4473
        %v4475 = vpop.f32.mrb[0].mxu0
        %4476 = vmatprep.mubr.bf16.mxu0 0
        %4477 = vmatmul.mubr.bf16.gmra.mrb[0].mxu0 %v4431
        %v4478 = vpop.f32.mrb[0].mxu0
        %v4479 = vadd.f32 0.0, %v4478
        %v4480 = vpop.f32.mrb[0].mxu0
        %v4481 = vpop.f32.mrb[0].mxu0
        %v4482 = vadd.f32 0.0, %v4481
        %v4483 = vpop.f32.mrb[0].mxu0
        %4484 = vdwg.mxu0
        %v4486 = vsel %vm3178, %v4408, 0
        %v4489 = vsel %vm3178, %v4420, 0
        %v4492 = vsel %vm3178, %v3224, 0
        %4494 = vmatprep.subr.bf16.mxu0 0
        %4495 = vmatpush1.bf16.xpose.msra.mxu0 %v4492
        %4496 = vmatprep.subr.bf16.mxu0 0
        %4497 = vmatpush1.bf16.xpose.msra.mxu0 0
        %4498 = vmatprep.subr.bf16.mxu0 0
        %4499 = vmatpush1.bf16.xpose.msra.mxu0 0
        %4500 = vmatprep.subr.bf16.mxu0 0
        %4501 = vmatpush1.bf16.xpose.msra.mxu0 0
        %4502 = vmatprep.subr.bf16.mxu0 0
        %4503 = vmatpush1.bf16.xpose.msra.mxu0 0
        %4504 = vmatprep.subr.bf16.mxu0 0
        %4505 = vmatpush1.bf16.xpose.msra.mxu0 0
        %4506 = vmatprep.subr.bf16.mxu0 0
        %4507 = vmatpush1.bf16.xpose.msra.mxu0 0
        %4508 = vmatprep.subr.bf16.mxu0 0
        %4509 = vmatpush1.bf16.xpose.msra.mxu0 0
        %4510 = vmatprep.subr.bf16.mxu0 0
        %4511 = vmatpush1.bf16.xpose.msra.mxu0 0
        %4512 = vmatprep.subr.bf16.mxu0 0
        %4513 = vmatpush1.bf16.xpose.msra.mxu0 0
        %4514 = vmatprep.subr.bf16.mxu0 0
        %4515 = vmatpush1.bf16.xpose.msra.mxu0 0
        %4516 = vmatprep.subr.bf16.mxu0 0
        %4517 = vmatpush1.bf16.xpose.msra.mxu0 0
        %4518 = vmatprep.subr.bf16.mxu0 0
        %4519 = vmatpush1.bf16.xpose.msra.mxu0 0
        %4520 = vmatprep.subr.bf16.mxu0 0
        %4521 = vmatpush1.bf16.xpose.msra.mxu0 0
        %4522 = vmatprep.subr.bf16.mxu0 0
        %4523 = vmatpush1.bf16.xpose.msra.mxu0 0
        %4524 = vmatprep.subr.bf16.mxu0 0
        %4525 = vmatpush1.bf16.xpose.msra.mxu0 0
        %4526 = vmatprep.mubr.bf16.mxu0 0
        %4527 = vmatmul.mubr.bf16.gmra.mrb[0].mxu0 %v4486
        %v4528 = vpop.f32.mrb[0].mxu0
        %v4529 = vadd.f32 0.0, %v4528
        %v4530 = vpop.f32.mrb[0].mxu0
        %v4531 = vpop.f32.mrb[0].mxu0
        %v4532 = vadd.f32 0.0, %v4531
        %v4533 = vpop.f32.mrb[0].mxu0
        %4534 = vmatprep.mubr.bf16.mxu0 0
        %4535 = vmatmul.mubr.bf16.gmra.mrb[0].mxu0 %v4489
        %v4536 = vpop.f32.mrb[0].mxu0
        %v4537 = vadd.f32 0.0, %v4536
        %v4538 = vpop.f32.mrb[0].mxu0
        %v4539 = vpop.f32.mrb[0].mxu0
        %v4540 = vadd.f32 0.0, %v4539
        %v4541 = vpop.f32.mrb[0].mxu0
        %4542 = vdwg.mxu0
        %v4544 = vsel %vm3178, %v4411, 0
        %v4547 = vsel %vm3178, %v4423, 0
        %v4550 = vsel %vm3178, %v3225, 0
        %4552 = vmatprep.subr.bf16.mxu0 0
        %4553 = vmatpush1.bf16.xpose.msra.mxu0 %v4550
        %4554 = vmatprep.subr.bf16.mxu0 0
        %4555 = vmatpush1.bf16.xpose.msra.mxu0 0
        %4556 = vmatprep.subr.bf16.mxu0 0
        %4557 = vmatpush1.bf16.xpose.msra.mxu0 0
        %4558 = vmatprep.subr.bf16.mxu0 0
        %4559 = vmatpush1.bf16.xpose.msra.mxu0 0
        %4560 = vmatprep.subr.bf16.mxu0 0
        %4561 = vmatpush1.bf16.xpose.msra.mxu0 0
        %4562 = vmatprep.subr.bf16.mxu0 0
        %4563 = vmatpush1.bf16.xpose.msra.mxu0 0
        %4564 = vmatprep.subr.bf16.mxu0 0
        %4565 = vmatpush1.bf16.xpose.msra.mxu0 0
        %4566 = vmatprep.subr.bf16.mxu0 0
        %4567 = vmatpush1.bf16.xpose.msra.mxu0 0
        %4568 = vmatprep.subr.bf16.mxu0 0
        %4569 = vmatpush1.bf16.xpose.msra.mxu0 0
        %4570 = vmatprep.subr.bf16.mxu0 0
        %4571 = vmatpush1.bf16.xpose.msra.mxu0 0
        %4572 = vmatprep.subr.bf16.mxu0 0
        %4573 = vmatpush1.bf16.xpose.msra.mxu0 0
        %4574 = vmatprep.subr.bf16.mxu0 0
        %4575 = vmatpush1.bf16.xpose.msra.mxu0 0
        %4576 = vmatprep.subr.bf16.mxu0 0
        %4577 = vmatpush1.bf16.xpose.msra.mxu0 0
        %4578 = vmatprep.subr.bf16.mxu0 0
        %4579 = vmatpush1.bf16.xpose.msra.mxu0 0
        %4580 = vmatprep.subr.bf16.mxu0 0
        %4581 = vmatpush1.bf16.xpose.msra.mxu0 0
        %4582 = vmatprep.subr.bf16.mxu0 0
        %4583 = vmatpush1.bf16.xpose.msra.mxu0 0
        %4584 = vmatprep.mubr.bf16.mxu0 0
        %4585 = vmatmul.mubr.bf16.gmra.mrb[0].mxu0 %v4544
        %v4586 = vpop.f32.mrb[0].mxu0
        %v4587 = vadd.f32 0.0, %v4586
        %v4588 = vpop.f32.mrb[0].mxu0
        %v4589 = vpop.f32.mrb[0].mxu0
        %v4590 = vadd.f32 0.0, %v4589
        %v4591 = vpop.f32.mrb[0].mxu0
        %4592 = vmatprep.mubr.bf16.mxu0 0
        %4593 = vmatmul.mubr.bf16.gmra.mrb[0].mxu0 %v4547
        %v4594 = vpop.f32.mrb[0].mxu0
        %v4595 = vadd.f32 0.0, %v4594
        %v4596 = vpop.f32.mrb[0].mxu0
        %v4597 = vpop.f32.mrb[0].mxu0
        %v4598 = vadd.f32 0.0, %v4597
        %v4599 = vpop.f32.mrb[0].mxu0
        %4600 = vdwg.mxu0
        %v4602 = vsel %vm3178, %v4414, 0
        %v4605 = vsel %vm3178, %v4426, 0
        %v4608 = vsel %vm3178, %v3226, 0
        %4610 = vmatprep.subr.bf16.mxu0 0
        %4611 = vmatpush1.bf16.xpose.msra.mxu0 %v4608
        %4612 = vmatprep.subr.bf16.mxu0 0
        %4613 = vmatpush1.bf16.xpose.msra.mxu0 0
        %4614 = vmatprep.subr.bf16.mxu0 0
        %4615 = vmatpush1.bf16.xpose.msra.mxu0 0
        %4616 = vmatprep.subr.bf16.mxu0 0
        %4617 = vmatpush1.bf16.xpose.msra.mxu0 0
        %4618 = vmatprep.subr.bf16.mxu0 0
        %4619 = vmatpush1.bf16.xpose.msra.mxu0 0
        %4620 = vmatprep.subr.bf16.mxu0 0
        %4621 = vmatpush1.bf16.xpose.msra.mxu0 0
        %4622 = vmatprep.subr.bf16.mxu0 0
        %4623 = vmatpush1.bf16.xpose.msra.mxu0 0
        %4624 = vmatprep.subr.bf16.mxu0 0
        %4625 = vmatpush1.bf16.xpose.msra.mxu0 0
        %4626 = vmatprep.subr.bf16.mxu0 0
        %4627 = vmatpush1.bf16.xpose.msra.mxu0 0
        %4628 = vmatprep.subr.bf16.mxu0 0
        %4629 = vmatpush1.bf16.xpose.msra.mxu0 0
        %4630 = vmatprep.subr.bf16.mxu0 0
        %4631 = vmatpush1.bf16.xpose.msra.mxu0 0
        %4632 = vmatprep.subr.bf16.mxu0 0
        %4633 = vmatpush1.bf16.xpose.msra.mxu0 0
        %4634 = vmatprep.subr.bf16.mxu0 0
        %4635 = vmatpush1.bf16.xpose.msra.mxu0 0
        %4636 = vmatprep.subr.bf16.mxu0 0
        %4637 = vmatpush1.bf16.xpose.msra.mxu0 0
        %4638 = vmatprep.subr.bf16.mxu0 0
        %4639 = vmatpush1.bf16.xpose.msra.mxu0 0
        %4640 = vmatprep.subr.bf16.mxu0 0
        %4641 = vmatpush1.bf16.xpose.msra.mxu0 0
        %4642 = vmatprep.mubr.bf16.mxu0 0
        %4643 = vmatmul.mubr.bf16.gmra.mrb[0].mxu0 %v4602
        %v4644 = vpop.f32.mrb[0].mxu0
        %v4645 = vadd.f32 0.0, %v4644
        %v4646 = vpop.f32.mrb[0].mxu0
        %v4647 = vpop.f32.mrb[0].mxu0
        %v4648 = vadd.f32 0.0, %v4647
        %v4649 = vpop.f32.mrb[0].mxu0
        %4650 = vmatprep.mubr.bf16.mxu0 0
        %4651 = vmatmul.mubr.bf16.gmra.mrb[0].mxu0 %v4605
        %v4652 = vpop.f32.mrb[0].mxu0
        %v4653 = vadd.f32 0.0, %v4652
        %v4654 = vpop.f32.mrb[0].mxu0
        %v4655 = vpop.f32.mrb[0].mxu0
        %v4656 = vadd.f32 0.0, %v4655
        %v4657 = vpop.f32.mrb[0].mxu0
        %4658 = vdwg.mxu0
        %4659 = vxpose.xlu0.b32.start [1/16] %v4471, 128
        %4660 = vxpose.xlu0.b32.cont [2/16] %v4474, 128
        %4661 = vxpose.xlu0.b32.cont [3/16] %v4479, 128
        %4662 = vxpose.xlu0.b32.cont [4/16] %v4482, 128
        %4663 = vxpose.xlu0.b32.cont [5/16] 0.0, 128
        %4664 = vxpose.xlu0.b32.cont [6/16] 0.0, 128
        %4665 = vxpose.xlu0.b32.cont [7/16] 0.0, 128
        %4666 = vxpose.xlu0.b32.cont [8/16] 0.0, 128
        %4667 = vxpose.xlu0.b32.cont [9/16] 0.0, 128
        %4668 = vxpose.xlu0.b32.cont [10/16] 0.0, 128
        %4669 = vxpose.xlu0.b32.cont [11/16] 0.0, 128
        %4670 = vxpose.xlu0.b32.cont [12/16] 0.0, 128
        %4671 = vxpose.xlu0.b32.cont [13/16] 0.0, 128
        %4672 = vxpose.xlu0.b32.cont [14/16] 0.0, 128
        %4673 = vxpose.xlu0.b32.cont [15/16] 0.0, 128
        %4674 = vxpose.xlu0.b32.end [16/16] 0.0, 128
        %v4675 = vpop.trf.xlu0
        %v4676 = vpop.trf.xlu0
        %v4677 = vpop.trf.xlu0
        %v4678 = vpop.trf.xlu0
        %v4679 = vpop.trf.xlu0
        %v4680 = vpop.trf.xlu0
        %v4681 = vpop.trf.xlu0
        %v4682 = vpop.trf.xlu0
        %v4683 = vpop.trf.xlu0
        %v4684 = vpop.trf.xlu0
        %v4685 = vpop.trf.xlu0
        %v4686 = vpop.trf.xlu0
        %v4687 = vpop.trf.xlu0
        %v4688 = vpop.trf.xlu0
        %v4689 = vpop.trf.xlu0
        %v4690 = vpop.trf.xlu0
        %4691 = vxpose.xlu0.b32.start [1/16] %v4529, 128
        %4692 = vxpose.xlu0.b32.cont [2/16] %v4532, 128
        %4693 = vxpose.xlu0.b32.cont [3/16] %v4537, 128
        %4694 = vxpose.xlu0.b32.cont [4/16] %v4540, 128
        %4695 = vxpose.xlu0.b32.cont [5/16] 0.0, 128
        %4696 = vxpose.xlu0.b32.cont [6/16] 0.0, 128
        %4697 = vxpose.xlu0.b32.cont [7/16] 0.0, 128
        %4698 = vxpose.xlu0.b32.cont [8/16] 0.0, 128
        %4699 = vxpose.xlu0.b32.cont [9/16] 0.0, 128
        %4700 = vxpose.xlu0.b32.cont [10/16] 0.0, 128
        %4701 = vxpose.xlu0.b32.cont [11/16] 0.0, 128
        %4702 = vxpose.xlu0.b32.cont [12/16] 0.0, 128
        %4703 = vxpose.xlu0.b32.cont [13/16] 0.0, 128
        %4704 = vxpose.xlu0.b32.cont [14/16] 0.0, 128
        %4705 = vxpose.xlu0.b32.cont [15/16] 0.0, 128
        %4706 = vxpose.xlu0.b32.end [16/16] 0.0, 128
        %v4707 = vpop.trf.xlu0
        %v4708 = vpop.trf.xlu0
        %v4709 = vpop.trf.xlu0
        %v4710 = vpop.trf.xlu0
        %v4711 = vpop.trf.xlu0
        %v4712 = vpop.trf.xlu0
        %v4713 = vpop.trf.xlu0
        %v4714 = vpop.trf.xlu0
        %v4715 = vpop.trf.xlu0
        %v4716 = vpop.trf.xlu0
        %v4717 = vpop.trf.xlu0
        %v4718 = vpop.trf.xlu0
        %v4719 = vpop.trf.xlu0
        %v4720 = vpop.trf.xlu0
        %v4721 = vpop.trf.xlu0
        %v4722 = vpop.trf.xlu0
        %4723 = vxpose.xlu0.b32.start [1/16] %v4587, 128
        %4724 = vxpose.xlu0.b32.cont [2/16] %v4590, 128
        %4725 = vxpose.xlu0.b32.cont [3/16] %v4595, 128
        %4726 = vxpose.xlu0.b32.cont [4/16] %v4598, 128
        %4727 = vxpose.xlu0.b32.cont [5/16] 0.0, 128
        %4728 = vxpose.xlu0.b32.cont [6/16] 0.0, 128
        %4729 = vxpose.xlu0.b32.cont [7/16] 0.0, 128
        %4730 = vxpose.xlu0.b32.cont [8/16] 0.0, 128
        %4731 = vxpose.xlu0.b32.cont [9/16] 0.0, 128
        %4732 = vxpose.xlu0.b32.cont [10/16] 0.0, 128
        %4733 = vxpose.xlu0.b32.cont [11/16] 0.0, 128
        %4734 = vxpose.xlu0.b32.cont [12/16] 0.0, 128
        %4735 = vxpose.xlu0.b32.cont [13/16] 0.0, 128
        %4736 = vxpose.xlu0.b32.cont [14/16] 0.0, 128
        %4737 = vxpose.xlu0.b32.cont [15/16] 0.0, 128
        %4738 = vxpose.xlu0.b32.end [16/16] 0.0, 128
        %v4739 = vpop.trf.xlu0
        %v4740 = vpop.trf.xlu0
        %v4741 = vpop.trf.xlu0
        %v4742 = vpop.trf.xlu0
        %v4743 = vpop.trf.xlu0
        %v4744 = vpop.trf.xlu0
        %v4745 = vpop.trf.xlu0
        %v4746 = vpop.trf.xlu0
        %v4747 = vpop.trf.xlu0
        %v4748 = vpop.trf.xlu0
        %v4749 = vpop.trf.xlu0
        %v4750 = vpop.trf.xlu0
        %v4751 = vpop.trf.xlu0
        %v4752 = vpop.trf.xlu0
        %v4753 = vpop.trf.xlu0
        %v4754 = vpop.trf.xlu0
        %4755 = vxpose.xlu0.b32.start [1/16] %v4645, 128
        %4756 = vxpose.xlu0.b32.cont [2/16] %v4648, 128
        %4757 = vxpose.xlu0.b32.cont [3/16] %v4653, 128
        %4758 = vxpose.xlu0.b32.cont [4/16] %v4656, 128
        %4759 = vxpose.xlu0.b32.cont [5/16] 0.0, 128
        %4760 = vxpose.xlu0.b32.cont [6/16] 0.0, 128
        %4761 = vxpose.xlu0.b32.cont [7/16] 0.0, 128
        %4762 = vxpose.xlu0.b32.cont [8/16] 0.0, 128
        %4763 = vxpose.xlu0.b32.cont [9/16] 0.0, 128
        %4764 = vxpose.xlu0.b32.cont [10/16] 0.0, 128
        %4765 = vxpose.xlu0.b32.cont [11/16] 0.0, 128
        %4766 = vxpose.xlu0.b32.cont [12/16] 0.0, 128
        %4767 = vxpose.xlu0.b32.cont [13/16] 0.0, 128
        %4768 = vxpose.xlu0.b32.cont [14/16] 0.0, 128
        %4769 = vxpose.xlu0.b32.cont [15/16] 0.0, 128
        %4770 = vxpose.xlu0.b32.end [16/16] 0.0, 128
        %v4771 = vpop.trf.xlu0
        %v4772 = vpop.trf.xlu0
        %v4773 = vpop.trf.xlu0
        %v4774 = vpop.trf.xlu0
        %v4775 = vpop.trf.xlu0
        %v4776 = vpop.trf.xlu0
        %v4777 = vpop.trf.xlu0
        %v4778 = vpop.trf.xlu0
        %v4779 = vpop.trf.xlu0
        %v4780 = vpop.trf.xlu0
        %v4781 = vpop.trf.xlu0
        %v4782 = vpop.trf.xlu0
        %v4783 = vpop.trf.xlu0
        %v4784 = vpop.trf.xlu0
        %v4785 = vpop.trf.xlu0
        %v4786 = vpop.trf.xlu0
        %v4787 = vcombine.low %v4675, %v4739
        %v4788 = vcombine.high %v4675, %v4739
        %v4790 = vunpack.c.l.s4 1983009808
        %v4791 = vunpack.c.0.s8 %v4790
        %v4792 = vlaneseq
        %v4793 = vshrl.u32 %v4792, 7
        %v4794 = vsub.s32 %v4791, %v4793
        %v4795 = vrot.slane %v4787, %v4794
        %v4797 = vunpack.c.l.s4 1983009808
        %v4798 = vunpack.c.0.s8 %v4797
        %v4799 = vlaneseq
        %v4800 = vshrl.u32 %v4799, 7
        %v4801 = vsub.s32 %v4798, %v4800
        %v4802 = vrot.slane %v4788, %v4801
        %v4803 = vcombine.low %v4707, %v4771
        %v4804 = vcombine.high %v4707, %v4771
        %v4806 = vunpack.c.l.s4 1983009808
        %v4807 = vunpack.c.0.s8 %v4806
        %v4808 = vlaneseq
        %v4809 = vshrl.u32 %v4808, 7
        %v4810 = vsub.s32 %v4807, %v4809
        %v4811 = vrot.slane %v4803, %v4810
        %v4813 = vunpack.c.l.s4 1983009808
        %v4814 = vunpack.c.0.s8 %v4813
        %v4815 = vlaneseq
        %v4816 = vshrl.u32 %v4815, 7
        %v4817 = vsub.s32 %v4814, %v4816
        %v4818 = vrot.slane %v4804, %v4817
        %v4819 = vcombine.low %v4795, %v4811
        %v4820 = vcombine.high %v4795, %v4811
        %v4822 = vunpack.c.l.s4 1934713408
        %v4823 = vunpack.c.0.s8 %v4822
        %v4824 = vlaneseq
        %v4825 = vshrl.u32 %v4824, 7
        %v4826 = vsub.s32 %v4823, %v4825
        %v4827 = vrot.slane %v4819, %v4826
        %v4829 = vunpack.c.l.s4 1934713408
        %v4830 = vunpack.c.0.s8 %v4829
        %v4831 = vlaneseq
        %v4832 = vshrl.u32 %v4831, 7
        %v4833 = vsub.s32 %v4830, %v4832
        %v4834 = vrot.slane %v4820, %v4833
        %v4835 = vcombine.low %v4802, %v4818
        %v4836 = vcombine.high %v4802, %v4818
        %v4838 = vunpack.c.l.s4 1934713408
        %v4839 = vunpack.c.0.s8 %v4838
        %v4840 = vlaneseq
        %v4841 = vshrl.u32 %v4840, 7
        %v4842 = vsub.s32 %v4839, %v4841
        %v4843 = vrot.slane %v4835, %v4842
        %v4845 = vunpack.c.l.s4 1934713408
        %v4846 = vunpack.c.0.s8 %v4845
        %v4847 = vlaneseq
        %v4848 = vshrl.u32 %v4847, 7
        %v4849 = vsub.s32 %v4846, %v4848
        %v4850 = vrot.slane %v4836, %v4849
        %v4851 = vcombine.high %v4827, 0.0
        %v4852 = vcombine.high %v4834, 0.0
        %v4853 = vcombine.high %v4843, 0.0
        %v4854 = vcombine.high %v4850, 0.0
        %v4855 = vcombine.low %v4827, %v4834
        %v4857 = vunpack.c.l.s4 1983009808
        %v4858 = vunpack.c.0.s8 %v4857
        %v4859 = vlaneseq
        %v4860 = vshrl.u32 %v4859, 7
        %v4861 = vsub.s32 %v4858, %v4860
        %v4862 = vrot.slane %v4855, %v4861
        %v4863 = vcombine.low %v4851, %v4852
        %v4865 = vunpack.c.l.s4 1983009808
        %v4866 = vunpack.c.0.s8 %v4865
        %v4867 = vlaneseq
        %v4868 = vshrl.u32 %v4867, 7
        %v4869 = vsub.s32 %v4866, %v4868
        %v4870 = vrot.slane %v4863, %v4869
        %v4871 = vcombine.low %v4843, %v4850
        %v4873 = vunpack.c.l.s4 1983009808
        %v4874 = vunpack.c.0.s8 %v4873
        %v4875 = vlaneseq
        %v4876 = vshrl.u32 %v4875, 7
        %v4877 = vsub.s32 %v4874, %v4876
        %v4878 = vrot.slane %v4871, %v4877
        %v4879 = vcombine.low %v4853, %v4854
        %v4881 = vunpack.c.l.s4 1983009808
        %v4882 = vunpack.c.0.s8 %v4881
        %v4883 = vlaneseq
        %v4884 = vshrl.u32 %v4883, 7
        %v4885 = vsub.s32 %v4882, %v4884
        %v4886 = vrot.slane %v4879, %v4885
        %v4887 = vcombine.low %v4862, %v4870
        %v4888 = vcombine.high %v4862, %v4870
        %v4890 = vunpack.c.l.s4 1934713408
        %v4891 = vunpack.c.0.s8 %v4890
        %v4892 = vlaneseq
        %v4893 = vshrl.u32 %v4892, 7
        %v4894 = vsub.s32 %v4891, %v4893
        %v4895 = vrot.slane %v4887, %v4894
        %v4897 = vunpack.c.l.s4 1934713408
        %v4898 = vunpack.c.0.s8 %v4897
        %v4899 = vlaneseq
        %v4900 = vshrl.u32 %v4899, 7
        %v4901 = vsub.s32 %v4898, %v4900
        %v4902 = vrot.slane %v4888, %v4901
        %v4903 = vcombine.low %v4878, %v4886
        %v4904 = vcombine.high %v4878, %v4886
        %v4906 = vunpack.c.l.s4 1934713408
        %v4907 = vunpack.c.0.s8 %v4906
        %v4908 = vlaneseq
        %v4909 = vshrl.u32 %v4908, 7
        %v4910 = vsub.s32 %v4907, %v4909
        %v4911 = vrot.slane %v4903, %v4910
        %v4913 = vunpack.c.l.s4 1934713408
        %v4914 = vunpack.c.0.s8 %v4913
        %v4915 = vlaneseq
        %v4916 = vshrl.u32 %v4915, 7
        %v4917 = vsub.s32 %v4914, %v4916
        %v4918 = vrot.slane %v4904, %v4917
        %v4919 = vcombine.low %v4895, %v4911
        %v4920 = vcombine.high %v4895, %v4911
        %v4921 = vcombine.low %v4902, %v4918
        %v4922 = vcombine.high %v4902, %v4918
        %4924 = vrot.lane.b32.xlu0 %v4920, 32
        %v4925 = vpop.permute.xlu0 %4924
        %4928 = vrot.lane.b32.xlu0 %v4921, 64
        %v4929 = vpop.permute.xlu0 %4928
        %4932 = vrot.lane.b32.xlu0 %v4922, 96
        %v4933 = vpop.permute.xlu0 %4932
        %v4935 = vsel %vm3005, %v4919, %v4925
        %vm4936 = vcmask 523264
        %v4937 = vsel %vm4936, %v4935, %v4929
        %vm4938 = vcmask 785408
        %v4939 = vsel %vm4938, %v4937, %v4933
        %v4940 = vpack.c.bf16 %v4939, %v4939
        %v4941 = vld [vmem:[%s1150] sm:$0xf]
        %v4942 = vld [vmem:[%s1150 + $0x4] sm:$0xf]
        %v4943 = vld [vmem:[%s1150 + $0x8] sm:$0xf]
        %v4944 = vld [vmem:[%s1150 + $0xc] sm:$0xf]
        %v4945 = vld [vmem:[%s1150 + $0x10] sm:$0xf]
        %v4946 = vld [vmem:[%s1150 + $0x14] sm:$0xf]
        %v4947 = vld [vmem:[%s1150 + $0x18] sm:$0xf]
        %v4948 = vld [vmem:[%s1150 + $0x1c] sm:$0xf]
        %v4949 = vld [vmem:[%s1150 + $0x20] sm:$0xf]
        %v4950 = vld [vmem:[%s1150 + $0x24] sm:$0xf]
        %v4951 = vld [vmem:[%s1150 + $0x28] sm:$0xf]
        %v4952 = vld [vmem:[%s1150 + $0x2c] sm:$0xf]
        %v4953 = vld [vmem:[%s1150 + $0x30] sm:$0xf]
        %v4954 = vld [vmem:[%s1150 + $0x34] sm:$0xf]
        %v4955 = vld [vmem:[%s1150 + $0x38] sm:$0xf]
        %v4956 = vld [vmem:[%s1150 + $0x3c] sm:$0xf]
        %v4957 = vld [vmem:[%s954] sm:$0x1]
        %v4959 = vlaneseq
        %v4960 = vshrl.u32 %v4959, 7
        %v4961 = vsub.s32 0, %v4960
        %v4962 = vrot.slane %v4957, %v4961
        %v4980 = vunpack.c.l.b16 %v4941
        %v4981 = vunpack.c.l.b16 %v4942
        %v4982 = vunpack.c.l.b16 %v4943
        %v4983 = vunpack.c.l.b16 %v4944
        %v4984 = vunpack.c.l.b16 %v4945
        %v4985 = vunpack.c.l.b16 %v4946
        %v4986 = vunpack.c.l.b16 %v4947
        %v4987 = vunpack.c.l.b16 %v4948
        %v4988 = vunpack.c.l.b16 %v4949
        %v4989 = vunpack.c.l.b16 %v4950
        %v4990 = vunpack.c.l.b16 %v4951
        %v4991 = vunpack.c.l.b16 %v4952
        %v4992 = vunpack.c.l.b16 %v4953
        %v4993 = vunpack.c.l.b16 %v4954
        %v4994 = vunpack.c.l.b16 %v4955
        %v4995 = vunpack.c.l.b16 %v4956
        %v4996 = vpack.c.b16 %v4981, %v4980
        %v4997 = vpack.c.b16 %v4983, %v4982
        %v4998 = vpack.c.b16 %v4985, %v4984
        %v4999 = vpack.c.b16 %v4987, %v4986
        %v5000 = vpack.c.b16 %v4989, %v4988
        %v5001 = vpack.c.b16 %v4991, %v4990
        %v5002 = vpack.c.b16 %v4993, %v4992
        %v5003 = vpack.c.b16 %v4995, %v4994
        %5012 = vmatprep.subr.bf16.mxu0 0
        %5013 = vmatpush1.bf16.msra.mxu0 %v4996
        %5014 = vmatprep.subr.bf16.mxu0 0
        %5015 = vmatpush1.bf16.msra.mxu0 %v4997
        %5016 = vmatprep.subr.bf16.mxu0 0
        %5017 = vmatpush1.bf16.msra.mxu0 %v4998
        %5018 = vmatprep.subr.bf16.mxu0 0
        %5019 = vmatpush1.bf16.msra.mxu0 %v4999
        %5020 = vmatprep.subr.bf16.mxu0 0
        %5021 = vmatpush1.bf16.msra.mxu0 %v5000
        %5022 = vmatprep.subr.bf16.mxu0 0
        %5023 = vmatpush1.bf16.msra.mxu0 %v5001
        %5024 = vmatprep.subr.bf16.mxu0 0
        %5025 = vmatpush1.bf16.msra.mxu0 %v5002
        %5026 = vmatprep.subr.bf16.mxu0 0
        %5027 = vmatpush1.bf16.msra.mxu0 %v5003
        %5028 = vmatprep.subr.bf16.mxu0 0
        %5029 = vmatpush1.bf16.msra.mxu0 0
        %5030 = vmatprep.subr.bf16.mxu0 0
        %5031 = vmatpush1.bf16.msra.mxu0 0
        %5032 = vmatprep.subr.bf16.mxu0 0
        %5033 = vmatpush1.bf16.msra.mxu0 0
        %5034 = vmatprep.subr.bf16.mxu0 0
        %5035 = vmatpush1.bf16.msra.mxu0 0
        %5036 = vmatprep.subr.bf16.mxu0 0
        %5037 = vmatpush1.bf16.msra.mxu0 0
        %5038 = vmatprep.subr.bf16.mxu0 0
        %5039 = vmatpush1.bf16.msra.mxu0 0
        %5040 = vmatprep.subr.bf16.mxu0 0
        %5041 = vmatpush1.bf16.msra.mxu0 0
        %5042 = vmatprep.subr.bf16.mxu0 0
        %5043 = vmatpush1.bf16.msra.mxu0 0
        %5044 = vmatprep.mubr.bf16.mxu0 0
        %5045 = vmatmul.mubr.bf16.gmra.mrb[0].mxu0 %v4940
        %v5046 = vpop.f32.mrb[0].mxu0
        %v5047 = vadd.f32 %v4962, %v5046
        %v5048 = vpop.f32.mrb[0].mxu0
        %v5049 = vpop.f32.mrb[0].mxu0
        %v5050 = vpop.f32.mrb[0].mxu0
        %5051 = vdwg.mxu0
        %v5052 = vadd.f32 %v1216, %v5047
        %v5053 = vld [vmem:[%s988] sm:$0x1]
        %v5054 = vld [vmem:[%s996] sm:$0x1]
        %5055 = vadd.xlane.f32.xlu0 %v5052
        %v5056 = vpop.xlane.xlu0 %5055
        %v5057 = vrcp.pop 128.0
        %v5058 = vmul.f32 %v5056, %v5057
        %v5059 = vsub.f32 %v5052, %v5058
        %v5060 = vmul.f32 %v5059, %v5059
        %5061 = vadd.xlane.f32.xlu0 %v5060
        %v5062 = vpop.xlane.xlu0 %5061
        %v5063 = vmul.f32 %v5062, %v5057
        %v5064 = vadd.f32 %v5063, 1e-05
        %v5065 = vrsqrt.pop %v5064
        %v5066 = vmul.f32 %v5059, %v5065
        %v5068 = vlaneseq
        %v5069 = vshrl.u32 %v5068, 7
        %v5070 = vsub.s32 0, %v5069
        %v5071 = vrot.slane %v5053, %v5070
        %v5073 = vmul.f32 %v5066, %v5071
        %v5075 = vlaneseq
        %v5076 = vshrl.u32 %v5075, 7
        %v5077 = vsub.s32 0, %v5076
        %v5078 = vrot.slane %v5054, %v5077
        %v5080 = vadd.f32 %v5073, %v5078
        %v5081 = vpack.c.bf16 %v5080, %v5080
        %v5082 = vld [vmem:[%s963] sm:$0xff]
        %v5083 = vld [vmem:[%s963 + $0x8] sm:$0xff]
        %v5084 = vld [vmem:[%s963 + $0x10] sm:$0xff]
        %v5085 = vld [vmem:[%s963 + $0x18] sm:$0xff]
        %v5086 = vld [vmem:[%s963 + $0x20] sm:$0xff]
        %v5087 = vld [vmem:[%s963 + $0x28] sm:$0xff]
        %v5088 = vld [vmem:[%s963 + $0x30] sm:$0xff]
        %v5089 = vld [vmem:[%s963 + $0x38] sm:$0xff]
        %v5090 = vld [vmem:[%s963 + $0x40] sm:$0xff]
        %v5091 = vld [vmem:[%s963 + $0x48] sm:$0xff]
        %v5092 = vld [vmem:[%s963 + $0x50] sm:$0xff]
        %v5093 = vld [vmem:[%s963 + $0x58] sm:$0xff]
        %v5094 = vld [vmem:[%s963 + $0x60] sm:$0xff]
        %v5095 = vld [vmem:[%s963 + $0x68] sm:$0xff]
        %v5096 = vld [vmem:[%s963 + $0x70] sm:$0xff]
        %v5097 = vld [vmem:[%s963 + $0x78] sm:$0xff]
        %v5098 = vld [vmem:[%s1154] sm:$0x3]
        %v5100 = vlaneseq
        %v5101 = vshrl.u32 %v5100, 7
        %v5102 = vsub.s32 0, %v5101
        %v5103 = vrot.slane %v5098, %v5102
        %v5104 = vlaneseq
        %v5105 = vshrl.u32 %v5104, 7
        %v5106 = vsub.s32 1, %v5105
        %v5107 = vrot.slane %v5098, %v5106
        %v5126 = vunpack.c.l.b16 %v5082
        %v5127 = vunpack.c.h.b16 %v5082
        %v5128 = vunpack.c.l.b16 %v5083
        %v5129 = vunpack.c.h.b16 %v5083
        %v5130 = vunpack.c.l.b16 %v5084
        %v5131 = vunpack.c.h.b16 %v5084
        %v5132 = vunpack.c.l.b16 %v5085
        %v5133 = vunpack.c.h.b16 %v5085
        %v5134 = vunpack.c.l.b16 %v5086
        %v5135 = vunpack.c.h.b16 %v5086
        %v5136 = vunpack.c.l.b16 %v5087
        %v5137 = vunpack.c.h.b16 %v5087
        %v5138 = vunpack.c.l.b16 %v5088
        %v5139 = vunpack.c.h.b16 %v5088
        %v5140 = vunpack.c.l.b16 %v5089
        %v5141 = vunpack.c.h.b16 %v5089
        %v5142 = vunpack.c.l.b16 %v5090
        %v5143 = vunpack.c.h.b16 %v5090
        %v5144 = vunpack.c.l.b16 %v5091
        %v5145 = vunpack.c.h.b16 %v5091
        %v5146 = vunpack.c.l.b16 %v5092
        %v5147 = vunpack.c.h.b16 %v5092
        %v5148 = vunpack.c.l.b16 %v5093
        %v5149 = vunpack.c.h.b16 %v5093
        %v5150 = vunpack.c.l.b16 %v5094
        %v5151 = vunpack.c.h.b16 %v5094
        %v5152 = vunpack.c.l.b16 %v5095
        %v5153 = vunpack.c.h.b16 %v5095
        %v5154 = vunpack.c.l.b16 %v5096
        %v5155 = vunpack.c.h.b16 %v5096
        %v5156 = vunpack.c.l.b16 %v5097
        %v5157 = vunpack.c.h.b16 %v5097
        %v5158 = vpack.c.b16 %v5128, %v5126
        %v5159 = vpack.c.b16 %v5129, %v5127
        %v5160 = vpack.c.b16 %v5132, %v5130
        %v5161 = vpack.c.b16 %v5133, %v5131
        %v5162 = vpack.c.b16 %v5136, %v5134
        %v5163 = vpack.c.b16 %v5137, %v5135
        %v5164 = vpack.c.b16 %v5140, %v5138
        %v5165 = vpack.c.b16 %v5141, %v5139
        %v5166 = vpack.c.b16 %v5144, %v5142
        %v5167 = vpack.c.b16 %v5145, %v5143
        %v5168 = vpack.c.b16 %v5148, %v5146
        %v5169 = vpack.c.b16 %v5149, %v5147
        %v5170 = vpack.c.b16 %v5152, %v5150
        %v5171 = vpack.c.b16 %v5153, %v5151
        %v5172 = vpack.c.b16 %v5156, %v5154
        %v5173 = vpack.c.b16 %v5157, %v5155
        %5190 = vmatprep.subr.bf16.mxu0 %v5159
        %5191 = vmatpush1.bf16.msra.mxu0 %v5158
        %5192 = vmatprep.subr.bf16.mxu0 %v5161
        %5193 = vmatpush1.bf16.msra.mxu0 %v5160
        %5194 = vmatprep.subr.bf16.mxu0 %v5163
        %5195 = vmatpush1.bf16.msra.mxu0 %v5162
        %5196 = vmatprep.subr.bf16.mxu0 %v5165
        %5197 = vmatpush1.bf16.msra.mxu0 %v5164
        %5198 = vmatprep.subr.bf16.mxu0 %v5167
        %5199 = vmatpush1.bf16.msra.mxu0 %v5166
        %5200 = vmatprep.subr.bf16.mxu0 %v5169
        %5201 = vmatpush1.bf16.msra.mxu0 %v5168
        %5202 = vmatprep.subr.bf16.mxu0 %v5171
        %5203 = vmatpush1.bf16.msra.mxu0 %v5170
        %5204 = vmatprep.subr.bf16.mxu0 %v5173
        %5205 = vmatpush1.bf16.msra.mxu0 %v5172
        %5206 = vmatprep.subr.bf16.mxu0 0
        %5207 = vmatpush1.bf16.msra.mxu0 0
        %5208 = vmatprep.subr.bf16.mxu0 0
        %5209 = vmatpush1.bf16.msra.mxu0 0
        %5210 = vmatprep.subr.bf16.mxu0 0
        %5211 = vmatpush1.bf16.msra.mxu0 0
        %5212 = vmatprep.subr.bf16.mxu0 0
        %5213 = vmatpush1.bf16.msra.mxu0 0
        %5214 = vmatprep.subr.bf16.mxu0 0
        %5215 = vmatpush1.bf16.msra.mxu0 0
        %5216 = vmatprep.subr.bf16.mxu0 0
        %5217 = vmatpush1.bf16.msra.mxu0 0
        %5218 = vmatprep.subr.bf16.mxu0 0
        %5219 = vmatpush1.bf16.msra.mxu0 0
        %5220 = vmatprep.subr.bf16.mxu0 0
        %5221 = vmatpush1.bf16.msra.mxu0 0
        %5222 = vmatprep.mubr.bf16.mxu0 0
        %5223 = vmatmul.mubr.bf16.gmra.mrb[0].mxu0 %v5081
        %v5224 = vpop.f32.mrb[0].mxu0
        %v5225 = vadd.f32 %v5103, %v5224
        %v5226 = vpop.f32.mrb[0].mxu0
        %v5227 = vadd.f32 %v5107, %v5226
        %v5228 = vpop.f32.mrb[0].mxu0
        %v5229 = vpop.f32.mrb[0].mxu0
        %5230 = vdwg.mxu0
        %v5231 = vmax.f32 %v5225, 0.0
        %v5232 = vmax.f32 %v5227, 0.0
        %v5233 = vpack.c.bf16 %v5231, %v5231
        %v5234 = vpack.c.bf16 %v5232, %v5232
        %v5235 = vld [vmem:[%s972] sm:$0xf]
        %v5236 = vld [vmem:[%s972 + $0x4] sm:$0xf]
        %v5237 = vld [vmem:[%s972 + $0x8] sm:$0xf]
        %v5238 = vld [vmem:[%s972 + $0xc] sm:$0xf]
        %v5239 = vld [vmem:[%s972 + $0x10] sm:$0xf]
        %v5240 = vld [vmem:[%s972 + $0x14] sm:$0xf]
        %v5241 = vld [vmem:[%s972 + $0x18] sm:$0xf]
        %v5242 = vld [vmem:[%s972 + $0x1c] sm:$0xf]
        %v5243 = vld [vmem:[%s972 + $0x20] sm:$0xf]
        %v5244 = vld [vmem:[%s972 + $0x24] sm:$0xf]
        %v5245 = vld [vmem:[%s972 + $0x28] sm:$0xf]
        %v5246 = vld [vmem:[%s972 + $0x2c] sm:$0xf]
        %v5247 = vld [vmem:[%s972 + $0x30] sm:$0xf]
        %v5248 = vld [vmem:[%s972 + $0x34] sm:$0xf]
        %v5249 = vld [vmem:[%s972 + $0x38] sm:$0xf]
        %v5250 = vld [vmem:[%s972 + $0x3c] sm:$0xf]
        %v5251 = vld [vmem:[%s972 + $0x40] sm:$0xf]
        %v5252 = vld [vmem:[%s972 + $0x44] sm:$0xf]
        %v5253 = vld [vmem:[%s972 + $0x48] sm:$0xf]
        %v5254 = vld [vmem:[%s972 + $0x4c] sm:$0xf]
        %v5255 = vld [vmem:[%s972 + $0x50] sm:$0xf]
        %v5256 = vld [vmem:[%s972 + $0x54] sm:$0xf]
        %v5257 = vld [vmem:[%s972 + $0x58] sm:$0xf]
        %v5258 = vld [vmem:[%s972 + $0x5c] sm:$0xf]
        %v5259 = vld [vmem:[%s972 + $0x60] sm:$0xf]
        %v5260 = vld [vmem:[%s972 + $0x64] sm:$0xf]
        %v5261 = vld [vmem:[%s972 + $0x68] sm:$0xf]
        %v5262 = vld [vmem:[%s972 + $0x6c] sm:$0xf]
        %v5263 = vld [vmem:[%s972 + $0x70] sm:$0xf]
        %v5264 = vld [vmem:[%s972 + $0x74] sm:$0xf]
        %v5265 = vld [vmem:[%s972 + $0x78] sm:$0xf]
        %v5266 = vld [vmem:[%s972 + $0x7c] sm:$0xf]
        %v5267 = vld [vmem:[%s980] sm:$0x1]
        %v5269 = vlaneseq
        %v5270 = vshrl.u32 %v5269, 7
        %v5271 = vsub.s32 0, %v5270
        %v5272 = vrot.slane %v5267, %v5271
        %v5306 = vunpack.c.l.b16 %v5235
        %v5307 = vunpack.c.l.b16 %v5236
        %v5308 = vunpack.c.l.b16 %v5237
        %v5309 = vunpack.c.l.b16 %v5238
        %v5310 = vunpack.c.l.b16 %v5239
        %v5311 = vunpack.c.l.b16 %v5240
        %v5312 = vunpack.c.l.b16 %v5241
        %v5313 = vunpack.c.l.b16 %v5242
        %v5314 = vunpack.c.l.b16 %v5243
        %v5315 = vunpack.c.l.b16 %v5244
        %v5316 = vunpack.c.l.b16 %v5245
        %v5317 = vunpack.c.l.b16 %v5246
        %v5318 = vunpack.c.l.b16 %v5247
        %v5319 = vunpack.c.l.b16 %v5248
        %v5320 = vunpack.c.l.b16 %v5249
        %v5321 = vunpack.c.l.b16 %v5250
        %v5322 = vunpack.c.l.b16 %v5251
        %v5323 = vunpack.c.l.b16 %v5252
        %v5324 = vunpack.c.l.b16 %v5253
        %v5325 = vunpack.c.l.b16 %v5254
        %v5326 = vunpack.c.l.b16 %v5255
        %v5327 = vunpack.c.l.b16 %v5256
        %v5328 = vunpack.c.l.b16 %v5257
        %v5329 = vunpack.c.l.b16 %v5258
        %v5330 = vunpack.c.l.b16 %v5259
        %v5331 = vunpack.c.l.b16 %v5260
        %v5332 = vunpack.c.l.b16 %v5261
        %v5333 = vunpack.c.l.b16 %v5262
        %v5334 = vunpack.c.l.b16 %v5263
        %v5335 = vunpack.c.l.b16 %v5264
        %v5336 = vunpack.c.l.b16 %v5265
        %v5337 = vunpack.c.l.b16 %v5266
        %v5338 = vpack.c.b16 %v5307, %v5306
        %v5339 = vpack.c.b16 %v5309, %v5308
        %v5340 = vpack.c.b16 %v5311, %v5310
        %v5341 = vpack.c.b16 %v5313, %v5312
        %v5342 = vpack.c.b16 %v5315, %v5314
        %v5343 = vpack.c.b16 %v5317, %v5316
        %v5344 = vpack.c.b16 %v5319, %v5318
        %v5345 = vpack.c.b16 %v5321, %v5320
        %v5346 = vpack.c.b16 %v5323, %v5322
        %v5347 = vpack.c.b16 %v5325, %v5324
        %v5348 = vpack.c.b16 %v5327, %v5326
        %v5349 = vpack.c.b16 %v5329, %v5328
        %v5350 = vpack.c.b16 %v5331, %v5330
        %v5351 = vpack.c.b16 %v5333, %v5332
        %v5352 = vpack.c.b16 %v5335, %v5334
        %v5353 = vpack.c.b16 %v5337, %v5336
        %5370 = vmatprep.subr.bf16.mxu0 0
        %5371 = vmatpush1.bf16.msra.mxu0 %v5338
        %5372 = vmatprep.subr.bf16.mxu0 0
        %5373 = vmatpush1.bf16.msra.mxu0 %v5339
        %5374 = vmatprep.subr.bf16.mxu0 0
        %5375 = vmatpush1.bf16.msra.mxu0 %v5340
        %5376 = vmatprep.subr.bf16.mxu0 0
        %5377 = vmatpush1.bf16.msra.mxu0 %v5341
        %5378 = vmatprep.subr.bf16.mxu0 0
        %5379 = vmatpush1.bf16.msra.mxu0 %v5342
        %5380 = vmatprep.subr.bf16.mxu0 0
        %5381 = vmatpush1.bf16.msra.mxu0 %v5343
        %5382 = vmatprep.subr.bf16.mxu0 0
        %5383 = vmatpush1.bf16.msra.mxu0 %v5344
        %5384 = vmatprep.subr.bf16.mxu0 0
        %5385 = vmatpush1.bf16.msra.mxu0 %v5345
        %5386 = vmatprep.subr.bf16.mxu0 0
        %5387 = vmatpush1.bf16.msra.mxu0 %v5346
        %5388 = vmatprep.subr.bf16.mxu0 0
        %5389 = vmatpush1.bf16.msra.mxu0 %v5347
        %5390 = vmatprep.subr.bf16.mxu0 0
        %5391 = vmatpush1.bf16.msra.mxu0 %v5348
        %5392 = vmatprep.subr.bf16.mxu0 0
        %5393 = vmatpush1.bf16.msra.mxu0 %v5349
        %5394 = vmatprep.subr.bf16.mxu0 0
        %5395 = vmatpush1.bf16.msra.mxu0 %v5350
        %5396 = vmatprep.subr.bf16.mxu0 0
        %5397 = vmatpush1.bf16.msra.mxu0 %v5351
        %5398 = vmatprep.subr.bf16.mxu0 0
        %5399 = vmatpush1.bf16.msra.mxu0 %v5352
        %5400 = vmatprep.subr.bf16.mxu0 0
        %5401 = vmatpush1.bf16.msra.mxu0 %v5353
        %5402 = vmatprep.mubr.bf16.mxu0 %v5234
        %5403 = vmatmul.mubr.bf16.gmra.mrb[0].mxu0 %v5233
        %v5404 = vpop.f32.mrb[0].mxu0
        %v5405 = vadd.f32 %v5272, %v5404
        %v5406 = vpop.f32.mrb[0].mxu0
        %v5407 = vpop.f32.mrb[0].mxu0
        %v5408 = vpop.f32.mrb[0].mxu0
        %5409 = vdwg.mxu0
        %v5410 = vadd.f32 %v5080, %v5405
        %v5411 = vld [vmem:[%s1004] sm:$0x1]
        %v5412 = vld [vmem:[%s1012] sm:$0x1]
        %5413 = vadd.xlane.f32.xlu0 %v5410
        %v5414 = vpop.xlane.xlu0 %5413
        %v5415 = vmul.f32 %v5414, %v5057
        %v5416 = vsub.f32 %v5410, %v5415
        %v5417 = vmul.f32 %v5416, %v5416
        %5418 = vadd.xlane.f32.xlu0 %v5417
        %v5419 = vpop.xlane.xlu0 %5418
        %v5420 = vmul.f32 %v5419, %v5057
        %v5421 = vadd.f32 %v5420, 1e-05
        %v5422 = vrsqrt.pop %v5421
        %v5423 = vmul.f32 %v5416, %v5422
        %v5425 = vlaneseq
        %v5426 = vshrl.u32 %v5425, 7
        %v5427 = vsub.s32 0, %v5426
        %v5428 = vrot.slane %v5411, %v5427
        %v5430 = vmul.f32 %v5423, %v5428
        %v5432 = vlaneseq
        %v5433 = vshrl.u32 %v5432, 7
        %v5434 = vsub.s32 0, %v5433
        %v5435 = vrot.slane %v5412, %v5434
        %v5437 = vadd.f32 %v5430, %v5435
        %5438 = vst [vmem:[%s1133] sm:$0xff] %v5437
        %p5439 = scmp.eq.s32.totalorder %s59, 3
        // Predicated region
        $region161: #{finetune_forward.1} parent=119 // pred_check
          %p5440 = pneg %p5439
        $region162: #{finetune_forward.1} parent=119 // pred_check_branch
          %5442 = sbr.rel (%p5440) target = $region164
        $region163: #{finetune_forward.1} parent=119 // pred_region
          %v5443 = vld [vmem:[%s1141] sm:$0xff]
          %v5444 = vpack.c.bf16 %v5437, %v5437
          %v5445 = vpack.c.bf16 %v5443, %v5443
          %v5446 = vld [vmem:[%s16] sm:$0xf]
          %v5447 = vld [vmem:[%s16 + $0x4] sm:$0xf]
          %v5448 = vld [vmem:[%s16 + $0x8] sm:$0xf]
          %v5449 = vld [vmem:[%s16 + $0xc] sm:$0xf]
          %v5450 = vld [vmem:[%s16 + $0x10] sm:$0xf]
          %v5451 = vld [vmem:[%s16 + $0x14] sm:$0xf]
          %v5452 = vld [vmem:[%s16 + $0x18] sm:$0xf]
          %v5453 = vld [vmem:[%s16 + $0x1c] sm:$0xf]
          %v5454 = vld [vmem:[%s16 + $0x20] sm:$0xf]
          %v5455 = vld [vmem:[%s16 + $0x24] sm:$0xf]
          %v5456 = vld [vmem:[%s16 + $0x28] sm:$0xf]
          %v5457 = vld [vmem:[%s16 + $0x2c] sm:$0xf]
          %v5458 = vld [vmem:[%s16 + $0x30] sm:$0xf]
          %v5459 = vld [vmem:[%s16 + $0x34] sm:$0xf]
          %v5460 = vld [vmem:[%s16 + $0x38] sm:$0xf]
          %v5461 = vld [vmem:[%s16 + $0x3c] sm:$0xf]
          %v5462 = vld [vmem:[%s16 + $0x40] sm:$0xf]
          %v5463 = vld [vmem:[%s16 + $0x44] sm:$0xf]
          %v5464 = vld [vmem:[%s16 + $0x48] sm:$0xf]
          %v5465 = vld [vmem:[%s16 + $0x4c] sm:$0xf]
          %v5466 = vld [vmem:[%s16 + $0x50] sm:$0xf]
          %v5467 = vld [vmem:[%s16 + $0x54] sm:$0xf]
          %v5468 = vld [vmem:[%s16 + $0x58] sm:$0xf]
          %v5469 = vld [vmem:[%s16 + $0x5c] sm:$0xf]
          %v5470 = vld [vmem:[%s16 + $0x60] sm:$0xf]
          %v5471 = vld [vmem:[%s16 + $0x64] sm:$0xf]
          %v5472 = vld [vmem:[%s16 + $0x68] sm:$0xf]
          %v5473 = vld [vmem:[%s16 + $0x6c] sm:$0xf]
          %v5474 = vld [vmem:[%s16 + $0x70] sm:$0xf]
          %v5475 = vld [vmem:[%s16 + $0x74] sm:$0xf]
          %v5476 = vld [vmem:[%s16 + $0x78] sm:$0xf]
          %v5477 = vld [vmem:[%s16 + $0x7c] sm:$0xf]
          %v5510 = vunpack.c.l.b16 %v5446
          %v5511 = vunpack.c.l.b16 %v5447
          %v5512 = vunpack.c.l.b16 %v5448
          %v5513 = vunpack.c.l.b16 %v5449
          %v5514 = vunpack.c.l.b16 %v5450
          %v5515 = vunpack.c.l.b16 %v5451
          %v5516 = vunpack.c.l.b16 %v5452
          %v5517 = vunpack.c.l.b16 %v5453
          %v5518 = vunpack.c.l.b16 %v5454
          %v5519 = vunpack.c.l.b16 %v5455
          %v5520 = vunpack.c.l.b16 %v5456
          %v5521 = vunpack.c.l.b16 %v5457
          %v5522 = vunpack.c.l.b16 %v5458
          %v5523 = vunpack.c.l.b16 %v5459
          %v5524 = vunpack.c.l.b16 %v5460
          %v5525 = vunpack.c.l.b16 %v5461
          %v5526 = vunpack.c.l.b16 %v5462
          %v5527 = vunpack.c.l.b16 %v5463
          %v5528 = vunpack.c.l.b16 %v5464
          %v5529 = vunpack.c.l.b16 %v5465
          %v5530 = vunpack.c.l.b16 %v5466
          %v5531 = vunpack.c.l.b16 %v5467
          %v5532 = vunpack.c.l.b16 %v5468
          %v5533 = vunpack.c.l.b16 %v5469
          %v5534 = vunpack.c.l.b16 %v5470
          %v5535 = vunpack.c.l.b16 %v5471
          %v5536 = vunpack.c.l.b16 %v5472
          %v5537 = vunpack.c.l.b16 %v5473
          %v5538 = vunpack.c.l.b16 %v5474
          %v5539 = vunpack.c.l.b16 %v5475
          %v5540 = vunpack.c.l.b16 %v5476
          %v5541 = vunpack.c.l.b16 %v5477
          %v5542 = vpack.c.b16 %v5511, %v5510
          %v5543 = vpack.c.b16 %v5513, %v5512
          %v5544 = vpack.c.b16 %v5515, %v5514
          %v5545 = vpack.c.b16 %v5517, %v5516
          %v5546 = vpack.c.b16 %v5519, %v5518
          %v5547 = vpack.c.b16 %v5521, %v5520
          %v5548 = vpack.c.b16 %v5523, %v5522
          %v5549 = vpack.c.b16 %v5525, %v5524
          %v5550 = vpack.c.b16 %v5527, %v5526
          %v5551 = vpack.c.b16 %v5529, %v5528
          %v5552 = vpack.c.b16 %v5531, %v5530
          %v5553 = vpack.c.b16 %v5533, %v5532
          %v5554 = vpack.c.b16 %v5535, %v5534
          %v5555 = vpack.c.b16 %v5537, %v5536
          %v5556 = vpack.c.b16 %v5539, %v5538
          %v5557 = vpack.c.b16 %v5541, %v5540
          %5574 = vmatprep.subr.bf16.mxu0 0
          %5575 = vmatpush1.bf16.msra.mxu0 %v5542
          %5576 = vmatprep.subr.bf16.mxu0 0
          %5577 = vmatpush1.bf16.msra.mxu0 %v5543
          %5578 = vmatprep.subr.bf16.mxu0 0
          %5579 = vmatpush1.bf16.msra.mxu0 %v5544
          %5580 = vmatprep.subr.bf16.mxu0 0
          %5581 = vmatpush1.bf16.msra.mxu0 %v5545
          %5582 = vmatprep.subr.bf16.mxu0 0
          %5583 = vmatpush1.bf16.msra.mxu0 %v5546
          %5584 = vmatprep.subr.bf16.mxu0 0
          %5585 = vmatpush1.bf16.msra.mxu0 %v5547
          %5586 = vmatprep.subr.bf16.mxu0 0
          %5587 = vmatpush1.bf16.msra.mxu0 %v5548
          %5588 = vmatprep.subr.bf16.mxu0 0
          %5589 = vmatpush1.bf16.msra.mxu0 %v5549
          %5590 = vmatprep.subr.bf16.mxu0 0
          %5591 = vmatpush1.bf16.msra.mxu0 %v5550
          %5592 = vmatprep.subr.bf16.mxu0 0
          %5593 = vmatpush1.bf16.msra.mxu0 %v5551
          %5594 = vmatprep.subr.bf16.mxu0 0
          %5595 = vmatpush1.bf16.msra.mxu0 %v5552
          %5596 = vmatprep.subr.bf16.mxu0 0
          %5597 = vmatpush1.bf16.msra.mxu0 %v5553
          %5598 = vmatprep.subr.bf16.mxu0 0
          %5599 = vmatpush1.bf16.msra.mxu0 %v5554
          %5600 = vmatprep.subr.bf16.mxu0 0
          %5601 = vmatpush1.bf16.msra.mxu0 %v5555
          %5602 = vmatprep.subr.bf16.mxu0 0
          %5603 = vmatpush1.bf16.msra.mxu0 %v5556
          %5604 = vmatprep.subr.bf16.mxu0 0
          %5605 = vmatpush1.bf16.msra.mxu0 %v5557
          %5606 = vmatprep.mubr.bf16.mxu0 %v5445
          %5607 = vmatmul.mubr.bf16.gmra.mrb[0].mxu0 %v5444
          %v5608 = vpop.f32.mrb[0].mxu0
          %v5609 = vadd.f32 0.0, %v5608
          %v5610 = vpop.f32.mrb[0].mxu0
          %v5611 = vpop.f32.mrb[0].mxu0
          %v5612 = vpop.f32.mrb[0].mxu0
          %5613 = vdwg.mxu0
          %v5614 = vmax.f32 %v5609, 0.0
          %v5615 = vpack.c.bf16 %v5614, %v5614
          %v5616 = vld [vmem:[%s17] sm:$0xf]
          %v5617 = vld [vmem:[%s18] sm:$0x1]
          %v5619 = vlaneseq
          %v5620 = vshrl.u32 %v5619, 7
          %v5621 = vsub.s32 0, %v5620
          %v5622 = vrot.slane %v5617, %v5621
          %v5625 = vsel %vm3178, %v5615, 0
          %vm5627 = vcmask 1043456
          %v5629 = vsel %vm5627, %v5616, 0
          %5631 = vmatprep.subr.bf16.mxu0 0
          %5632 = vmatpush1.bf16.msra.mxu0 %v5629
          %5633 = vmatprep.subr.bf16.mxu0 0
          %5634 = vmatpush1.bf16.msra.mxu0 0
          %5635 = vmatprep.subr.bf16.mxu0 0
          %5636 = vmatpush1.bf16.msra.mxu0 0
          %5637 = vmatprep.subr.bf16.mxu0 0
          %5638 = vmatpush1.bf16.msra.mxu0 0
          %5639 = vmatprep.subr.bf16.mxu0 0
          %5640 = vmatpush1.bf16.msra.mxu0 0
          %5641 = vmatprep.subr.bf16.mxu0 0
          %5642 = vmatpush1.bf16.msra.mxu0 0
          %5643 = vmatprep.subr.bf16.mxu0 0
          %5644 = vmatpush1.bf16.msra.mxu0 0
          %5645 = vmatprep.subr.bf16.mxu0 0
          %5646 = vmatpush1.bf16.msra.mxu0 0
          %5647 = vmatprep.subr.bf16.mxu0 0
          %5648 = vmatpush1.bf16.msra.mxu0 0
          %5649 = vmatprep.subr.bf16.mxu0 0
          %5650 = vmatpush1.bf16.msra.mxu0 0
          %5651 = vmatprep.subr.bf16.mxu0 0
          %5652 = vmatpush1.bf16.msra.mxu0 0
          %5653 = vmatprep.subr.bf16.mxu0 0
          %5654 = vmatpush1.bf16.msra.mxu0 0
          %5655 = vmatprep.subr.bf16.mxu0 0
          %5656 = vmatpush1.bf16.msra.mxu0 0
          %5657 = vmatprep.subr.bf16.mxu0 0
          %5658 = vmatpush1.bf16.msra.mxu0 0
          %5659 = vmatprep.subr.bf16.mxu0 0
          %5660 = vmatpush1.bf16.msra.mxu0 0
          %5661 = vmatprep.subr.bf16.mxu0 0
          %5662 = vmatpush1.bf16.msra.mxu0 0
          %5663 = vmatprep.mubr.bf16.mxu0 0
          %5664 = vmatmul.mubr.bf16.gmra.mrb[0].mxu0 %v5625
          %v5665 = vpop.f32.mrb[0].mxu0
          %v5666 = vadd.f32 %v5622, %v5665
          %v5667 = vpop.f32.mrb[0].mxu0
          %v5668 = vpop.f32.mrb[0].mxu0
          %v5669 = vpop.f32.mrb[0].mxu0
          %5670 = vdwg.mxu0
          %v5671 = vmax.f32 %v5666, 0.0
          %v5672 = vpack.c.bf16 %v5671, %v5671
          %v5673 = vld [vmem:[%s19] sm:$0xf]
          %v5674 = vld [vmem:[%s19 + $0x4] sm:$0xf]
          %v5675 = vld [vmem:[%s19 + $0x8] sm:$0xf]
          %v5676 = vld [vmem:[%s19 + $0xc] sm:$0xf]
          %v5677 = vld [vmem:[%s19 + $0x10] sm:$0xf]
          %v5678 = vld [vmem:[%s19 + $0x14] sm:$0xf]
          %v5679 = vld [vmem:[%s19 + $0x18] sm:$0xf]
          %v5680 = vld [vmem:[%s19 + $0x1c] sm:$0xf]
          %v5681 = vld [vmem:[%s19 + $0x20] sm:$0xf]
          %v5682 = vld [vmem:[%s19 + $0x24] sm:$0xf]
          %v5683 = vld [vmem:[%s19 + $0x28] sm:$0xf]
          %v5684 = vld [vmem:[%s19 + $0x2c] sm:$0xf]
          %v5685 = vld [vmem:[%s19 + $0x30] sm:$0xf]
          %v5686 = vld [vmem:[%s19 + $0x34] sm:$0xf]
          %v5687 = vld [vmem:[%s19 + $0x38] sm:$0xf]
          %v5688 = vld [vmem:[%s19 + $0x3c] sm:$0xf]
          %v5705 = vunpack.c.l.b16 %v5673
          %v5706 = vunpack.c.l.b16 %v5674
          %v5707 = vunpack.c.l.b16 %v5675
          %v5708 = vunpack.c.l.b16 %v5676
          %v5709 = vunpack.c.l.b16 %v5677
          %v5710 = vunpack.c.l.b16 %v5678
          %v5711 = vunpack.c.l.b16 %v5679
          %v5712 = vunpack.c.l.b16 %v5680
          %v5713 = vunpack.c.l.b16 %v5681
          %v5714 = vunpack.c.l.b16 %v5682
          %v5715 = vunpack.c.l.b16 %v5683
          %v5716 = vunpack.c.l.b16 %v5684
          %v5717 = vunpack.c.l.b16 %v5685
          %v5718 = vunpack.c.l.b16 %v5686
          %v5719 = vunpack.c.l.b16 %v5687
          %v5720 = vunpack.c.l.b16 %v5688
          %v5721 = vpack.c.b16 %v5706, %v5705
          %v5722 = vpack.c.b16 %v5708, %v5707
          %v5723 = vpack.c.b16 %v5710, %v5709
          %v5724 = vpack.c.b16 %v5712, %v5711
          %v5725 = vpack.c.b16 %v5714, %v5713
          %v5726 = vpack.c.b16 %v5716, %v5715
          %v5727 = vpack.c.b16 %v5718, %v5717
          %v5728 = vpack.c.b16 %v5720, %v5719
          %5737 = vmatprep.subr.bf16.mxu0 0
          %5738 = vmatpush1.bf16.msra.mxu0 %v5721
          %5739 = vmatprep.subr.bf16.mxu0 0
          %5740 = vmatpush1.bf16.msra.mxu0 %v5722
          %5741 = vmatprep.subr.bf16.mxu0 0
          %5742 = vmatpush1.bf16.msra.mxu0 %v5723
          %5743 = vmatprep.subr.bf16.mxu0 0
          %5744 = vmatpush1.bf16.msra.mxu0 %v5724
          %5745 = vmatprep.subr.bf16.mxu0 0
          %5746 = vmatpush1.bf16.msra.mxu0 %v5725
          %5747 = vmatprep.subr.bf16.mxu0 0
          %5748 = vmatpush1.bf16.msra.mxu0 %v5726
          %5749 = vmatprep.subr.bf16.mxu0 0
          %5750 = vmatpush1.bf16.msra.mxu0 %v5727
          %5751 = vmatprep.subr.bf16.mxu0 0
          %5752 = vmatpush1.bf16.msra.mxu0 %v5728
          %5753 = vmatprep.subr.bf16.mxu0 0
          %5754 = vmatpush1.bf16.msra.mxu0 0
          %5755 = vmatprep.subr.bf16.mxu0 0
          %5756 = vmatpush1.bf16.msra.mxu0 0
          %5757 = vmatprep.subr.bf16.mxu0 0
          %5758 = vmatpush1.bf16.msra.mxu0 0
          %5759 = vmatprep.subr.bf16.mxu0 0
          %5760 = vmatpush1.bf16.msra.mxu0 0
          %5761 = vmatprep.subr.bf16.mxu0 0
          %5762 = vmatpush1.bf16.msra.mxu0 0
          %5763 = vmatprep.subr.bf16.mxu0 0
          %5764 = vmatpush1.bf16.msra.mxu0 0
          %5765 = vmatprep.subr.bf16.mxu0 0
          %5766 = vmatpush1.bf16.msra.mxu0 0
          %5767 = vmatprep.subr.bf16.mxu0 0
          %5768 = vmatpush1.bf16.msra.mxu0 0
          %5769 = vmatprep.mubr.bf16.mxu0 0
          %5770 = vmatmul.mubr.bf16.gmra.mrb[0].mxu0 %v5672
          %v5771 = vpop.f32.mrb[0].mxu0
          %v5772 = vadd.f32 0.0, %v5771
          %v5773 = vpop.f32.mrb[0].mxu0
          %v5774 = vpop.f32.mrb[0].mxu0
          %v5775 = vpop.f32.mrb[0].mxu0
          %5776 = vdwg.mxu0
          %v5777 = vmax.f32 %v5772, 0.0
          %v5778 = vpack.c.bf16 %v5777, %v5777
          %v5779 = vld [vmem:[%s20] sm:$0xf]
          %v5780 = vld [vmem:[%s21] sm:$0x1]
          %v5782 = vlaneseq
          %v5783 = vshrl.u32 %v5782, 7
          %v5784 = vsub.s32 0, %v5783
          %v5785 = vrot.slane %v5780, %v5784
          %v5788 = vsel %vm3178, %v5778, 0
          %v5791 = vsel %vm5627, %v5779, 0
          %5793 = vmatprep.subr.bf16.mxu0 0
          %5794 = vmatpush1.bf16.msra.mxu0 %v5791
          %5795 = vmatprep.subr.bf16.mxu0 0
          %5796 = vmatpush1.bf16.msra.mxu0 0
          %5797 = vmatprep.subr.bf16.mxu0 0
          %5798 = vmatpush1.bf16.msra.mxu0 0
          %5799 = vmatprep.subr.bf16.mxu0 0
          %5800 = vmatpush1.bf16.msra.mxu0 0
          %5801 = vmatprep.subr.bf16.mxu0 0
          %5802 = vmatpush1.bf16.msra.mxu0 0
          %5803 = vmatprep.subr.bf16.mxu0 0
          %5804 = vmatpush1.bf16.msra.mxu0 0
          %5805 = vmatprep.subr.bf16.mxu0 0
          %5806 = vmatpush1.bf16.msra.mxu0 0
          %5807 = vmatprep.subr.bf16.mxu0 0
          %5808 = vmatpush1.bf16.msra.mxu0 0
          %5809 = vmatprep.subr.bf16.mxu0 0
          %5810 = vmatpush1.bf16.msra.mxu0 0
          %5811 = vmatprep.subr.bf16.mxu0 0
          %5812 = vmatpush1.bf16.msra.mxu0 0
          %5813 = vmatprep.subr.bf16.mxu0 0
          %5814 = vmatpush1.bf16.msra.mxu0 0
          %5815 = vmatprep.subr.bf16.mxu0 0
          %5816 = vmatpush1.bf16.msra.mxu0 0
          %5817 = vmatprep.subr.bf16.mxu0 0
          %5818 = vmatpush1.bf16.msra.mxu0 0
          %5819 = vmatprep.subr.bf16.mxu0 0
          %5820 = vmatpush1.bf16.msra.mxu0 0
          %5821 = vmatprep.subr.bf16.mxu0 0
          %5822 = vmatpush1.bf16.msra.mxu0 0
          %5823 = vmatprep.subr.bf16.mxu0 0
          %5824 = vmatpush1.bf16.msra.mxu0 0
          %5825 = vmatprep.mubr.bf16.mxu0 0
          %5826 = vmatmul.mubr.bf16.gmra.mrb[0].mxu0 %v5788
          %v5827 = vpop.f32.mrb[0].mxu0
          %v5828 = vadd.f32 %v5785, %v5827
          %v5829 = vpop.f32.mrb[0].mxu0
          %v5830 = vpop.f32.mrb[0].mxu0
          %v5831 = vpop.f32.mrb[0].mxu0
          %5832 = vdwg.mxu0
          %v5833 = vmax.f32 %v5828, 0.0
          %v5834 = vpack.c.bf16 %v5833, %v5833
          %v5835 = vld [vmem:[%s22] sm:$0xf]
          %v5836 = vld [vmem:[%s22 + $0x4] sm:$0xf]
          %v5837 = vld [vmem:[%s22 + $0x8] sm:$0xf]
          %v5838 = vld [vmem:[%s22 + $0xc] sm:$0xf]
          %v5839 = vld [vmem:[%s22 + $0x10] sm:$0xf]
          %v5840 = vld [vmem:[%s22 + $0x14] sm:$0xf]
          %v5841 = vld [vmem:[%s22 + $0x18] sm:$0xf]
          %v5842 = vld [vmem:[%s22 + $0x1c] sm:$0xf]
          %v5843 = vld [vmem:[%s22 + $0x20] sm:$0xf]
          %v5844 = vld [vmem:[%s22 + $0x24] sm:$0xf]
          %v5845 = vld [vmem:[%s22 + $0x28] sm:$0xf]
          %v5846 = vld [vmem:[%s22 + $0x2c] sm:$0xf]
          %v5847 = vld [vmem:[%s22 + $0x30] sm:$0xf]
          %v5848 = vld [vmem:[%s22 + $0x34] sm:$0xf]
          %v5849 = vld [vmem:[%s22 + $0x38] sm:$0xf]
          %v5850 = vld [vmem:[%s22 + $0x3c] sm:$0xf]
          %v5867 = vunpack.c.l.b16 %v5835
          %v5868 = vunpack.c.l.b16 %v5836
          %v5869 = vunpack.c.l.b16 %v5837
          %v5870 = vunpack.c.l.b16 %v5838
          %v5871 = vunpack.c.l.b16 %v5839
          %v5872 = vunpack.c.l.b16 %v5840
          %v5873 = vunpack.c.l.b16 %v5841
          %v5874 = vunpack.c.l.b16 %v5842
          %v5875 = vunpack.c.l.b16 %v5843
          %v5876 = vunpack.c.l.b16 %v5844
          %v5877 = vunpack.c.l.b16 %v5845
          %v5878 = vunpack.c.l.b16 %v5846
          %v5879 = vunpack.c.l.b16 %v5847
          %v5880 = vunpack.c.l.b16 %v5848
          %v5881 = vunpack.c.l.b16 %v5849
          %v5882 = vunpack.c.l.b16 %v5850
          %v5883 = vpack.c.b16 %v5868, %v5867
          %v5884 = vpack.c.b16 %v5870, %v5869
          %v5885 = vpack.c.b16 %v5872, %v5871
          %v5886 = vpack.c.b16 %v5874, %v5873
          %v5887 = vpack.c.b16 %v5876, %v5875
          %v5888 = vpack.c.b16 %v5878, %v5877
          %v5889 = vpack.c.b16 %v5880, %v5879
          %v5890 = vpack.c.b16 %v5882, %v5881
          %5899 = vmatprep.subr.bf16.mxu0 0
          %5900 = vmatpush1.bf16.msra.mxu0 %v5883
          %5901 = vmatprep.subr.bf16.mxu0 0
          %5902 = vmatpush1.bf16.msra.mxu0 %v5884
          %5903 = vmatprep.subr.bf16.mxu0 0
          %5904 = vmatpush1.bf16.msra.mxu0 %v5885
          %5905 = vmatprep.subr.bf16.mxu0 0
          %5906 = vmatpush1.bf16.msra.mxu0 %v5886
          %5907 = vmatprep.subr.bf16.mxu0 0
          %5908 = vmatpush1.bf16.msra.mxu0 %v5887
          %5909 = vmatprep.subr.bf16.mxu0 0
          %5910 = vmatpush1.bf16.msra.mxu0 %v5888
          %5911 = vmatprep.subr.bf16.mxu0 0
          %5912 = vmatpush1.bf16.msra.mxu0 %v5889
          %5913 = vmatprep.subr.bf16.mxu0 0
          %5914 = vmatpush1.bf16.msra.mxu0 %v5890
          %5915 = vmatprep.subr.bf16.mxu0 0
          %5916 = vmatpush1.bf16.msra.mxu0 0
          %5917 = vmatprep.subr.bf16.mxu0 0
          %5918 = vmatpush1.bf16.msra.mxu0 0
          %5919 = vmatprep.subr.bf16.mxu0 0
          %5920 = vmatpush1.bf16.msra.mxu0 0
          %5921 = vmatprep.subr.bf16.mxu0 0
          %5922 = vmatpush1.bf16.msra.mxu0 0
          %5923 = vmatprep.subr.bf16.mxu0 0
          %5924 = vmatpush1.bf16.msra.mxu0 0
          %5925 = vmatprep.subr.bf16.mxu0 0
          %5926 = vmatpush1.bf16.msra.mxu0 0
          %5927 = vmatprep.subr.bf16.mxu0 0
          %5928 = vmatpush1.bf16.msra.mxu0 0
          %5929 = vmatprep.subr.bf16.mxu0 0
          %5930 = vmatpush1.bf16.msra.mxu0 0
          %5931 = vmatprep.mubr.bf16.mxu0 0
          %5932 = vmatmul.mubr.bf16.gmra.mrb[0].mxu0 %v5834
          %v5933 = vpop.f32.mrb[0].mxu0
          %v5934 = vadd.f32 0.0, %v5933
          %v5935 = vpop.f32.mrb[0].mxu0
          %v5936 = vpop.f32.mrb[0].mxu0
          %v5937 = vpop.f32.mrb[0].mxu0
          %5938 = vdwg.mxu0
          %v5939 = vmax.f32 %v5934, 0.0
          %v5940 = vpack.c.bf16 %v5939, %v5939
          %v5941 = vld [vmem:[%s23] sm:$0xf]
          %v5942 = vld [vmem:[%s24] sm:$0x1]
          %v5944 = vlaneseq
          %v5945 = vshrl.u32 %v5944, 7
          %v5946 = vsub.s32 0, %v5945
          %v5947 = vrot.slane %v5942, %v5946
          %v5950 = vsel %vm3178, %v5940, 0
          %v5953 = vsel %vm5627, %v5941, 0
          %5955 = vmatprep.subr.bf16.mxu0 0
          %5956 = vmatpush1.bf16.msra.mxu0 %v5953
          %5957 = vmatprep.subr.bf16.mxu0 0
          %5958 = vmatpush1.bf16.msra.mxu0 0
          %5959 = vmatprep.subr.bf16.mxu0 0
          %5960 = vmatpush1.bf16.msra.mxu0 0
          %5961 = vmatprep.subr.bf16.mxu0 0
          %5962 = vmatpush1.bf16.msra.mxu0 0
          %5963 = vmatprep.subr.bf16.mxu0 0
          %5964 = vmatpush1.bf16.msra.mxu0 0
          %5965 = vmatprep.subr.bf16.mxu0 0
          %5966 = vmatpush1.bf16.msra.mxu0 0
          %5967 = vmatprep.subr.bf16.mxu0 0
          %5968 = vmatpush1.bf16.msra.mxu0 0
          %5969 = vmatprep.subr.bf16.mxu0 0
          %5970 = vmatpush1.bf16.msra.mxu0 0
          %5971 = vmatprep.subr.bf16.mxu0 0
          %5972 = vmatpush1.bf16.msra.mxu0 0
          %5973 = vmatprep.subr.bf16.mxu0 0
          %5974 = vmatpush1.bf16.msra.mxu0 0
          %5975 = vmatprep.subr.bf16.mxu0 0
          %5976 = vmatpush1.bf16.msra.mxu0 0
          %5977 = vmatprep.subr.bf16.mxu0 0
          %5978 = vmatpush1.bf16.msra.mxu0 0
          %5979 = vmatprep.subr.bf16.mxu0 0
          %5980 = vmatpush1.bf16.msra.mxu0 0
          %5981 = vmatprep.subr.bf16.mxu0 0
          %5982 = vmatpush1.bf16.msra.mxu0 0
          %5983 = vmatprep.subr.bf16.mxu0 0
          %5984 = vmatpush1.bf16.msra.mxu0 0
          %5985 = vmatprep.subr.bf16.mxu0 0
          %5986 = vmatpush1.bf16.msra.mxu0 0
          %5987 = vmatprep.mubr.bf16.mxu0 0
          %5988 = vmatmul.mubr.bf16.gmra.mrb[0].mxu0 %v5950
          %v5989 = vpop.f32.mrb[0].mxu0
          %v5990 = vadd.f32 %v5947, %v5989
          %v5991 = vpop.f32.mrb[0].mxu0
          %v5992 = vpop.f32.mrb[0].mxu0
          %v5993 = vpop.f32.mrb[0].mxu0
          %5994 = vdwg.mxu0
          %v5995 = vmax.f32 %v5990, 0.0
          %v5996 = vadd.f32 %v5443, %v5995
          %5997 = vst [vmem:[%s1133] sm:$0xff] %v5996
        $region164: #{finetune_forward.1} parent=119 // pred_fallthru
          _
        %s5998 = sand.u32 %s669, 1
        %s5999 = scalar_lea.sflag [#allocation4], %s5998
        %s6000 = sand.u32 %s669, 1
        %s6001 = smul.addr %s6000, 8
        %s6002 = scalar_lea.vmem [#allocation17], %s6001
        // Predicated region
        $region165: #{finetune_forward.1} parent=119 // pred_check
          %p6003 = pneg %p679
        $region166: #{finetune_forward.1} parent=119 // pred_check_branch
          %6005 = sbr.rel (%p6003) target = $region168
        $region167: #{finetune_forward.1} parent=119 // pred_region
          %s6007 = ssub.s32 128, 128
          %6008 = vsyncadd %s5999, %s6007
          %s6009 = smul.addr %s58, 128
          %s6010 = scalar_lea.hbm %s25, %s6009
          %s6012 = sshll.u32 %s6002, 4
          %s6013 = int_to_ptr.vmem [resolvable:$true] %s6012
          %6015 = dma.vmem_to_hbm [thread:$0]  %s6013, 128, %s6010, %s5999
        $region168: #{finetune_forward.1} parent=119 // pred_fallthru
          _
      $region120: #{finetune_forward.1} parent=5 // pred_fallthru
        _
      %p6016 = scmp.le.s32.totalorder 2, %s49
      // Predicated region
      $region169: #{finetune_forward.1} parent=5 // pred_check
        %p6017 = pneg %p6016
      $region170: #{finetune_forward.1} parent=5 // pred_check_branch
        %6019 = sbr.rel (%p6017) target = $region172
      $region171: #{finetune_forward.1} parent=5 // pred_region
        %s6020 = ssub.s32 %s49, 2
        // Predicated region
        $region173: #{finetune_forward.1} parent=171 // pred_check
          %p6021 = pneg %p685
        $region174: #{finetune_forward.1} parent=171 // pred_check_branch
          %6023 = sbr.rel (%p6021) target = $region176
        $region175: #{finetune_forward.1} parent=171 // pred_region
          %s6024 = sand.u32 %s670, 1
          %s6025 = scalar_lea.sflag [#allocation4], %s6024
          %s6026 = sand.u32 %s670, 1
          %s6027 = smul.addr %s6026, 8
          %s6028 = scalar_lea.vmem [#allocation17], %s6027
          %6029 = dma.done %s6025, 128
        $region176: #{finetune_forward.1} parent=171 // pred_fallthru
          _
      $region172: #{finetune_forward.1} parent=5 // pred_fallthru
        _
    $region6: #{finetune_forward.1} parent=1 // loop_footer
      %s53 = sadd.s32 1, %s49
    $region7: #{finetune_forward.1} parent=1 // loop_footer_branch
      %48 = sbr.rel target = $region3
    $region8: #{finetune_forward.1} parent=1 // loop_exit
      _
    %6030 = vsyncpa [#allocation3], 1
    %s6031 = scalar_lea.sflag [#allocation3], 1
    %6032 = vsyncpa %s6031, 1
    %6033 = vsyncpa [#allocation6], 1
    %s6034 = scalar_lea.sflag [#allocation6], 1
    %6035 = vsyncpa %s6034, 1
    %6036 = vsyncpa [#allocation9], 1
    %s6037 = scalar_lea.sflag [#allocation9], 1
    %6038 = vsyncpa %s6037, 1
    %6039 = vsyncpa [#allocation12], 1
    %s6040 = scalar_lea.sflag [#allocation12], 1
    %6041 = vsyncpa %s6040, 1
    %6042 = vsyncpa [#allocation15], 1
    %s6043 = scalar_lea.sflag [#allocation15], 1
    %6044 = vsyncpa %s6043, 1
    %6045 = vsyncpa [#allocation4], 1
    %s6046 = scalar_lea.sflag [#allocation4], 1
    %6047 = vsyncpa %s6046, 1

</llo_original>
